<compile_context>
chip_gen: v7x
topology: tpu7x:2x2x1
jax: 0.10.0
libtpu: 0.0.40
codegen_flags: <defaults>
</compile_context>

<pallas_src>
import jax
import jax.numpy as jnp
from jax.experimental import pallas as pl
from jax.experimental.pallas import tpu as pltpu

# ----- model hyper-parameters (consistent with the PyTorch module) -------------
EYE_FS = 80          # eyeFeatureSize  -> featureNum=2, featureLength=40
HEAD_FS = 80         # headFeatureSize
GW_FS = 80           # gwFeatureSize
NUM_CLASSES = 4
HIDDEN = 64          # GRU hidden size (per branch)
KSIZE = 3
C1 = C2 = C3 = 16    # conv out channels (per branch)
NB = 3               # number of branches (eye, head, gw)
BN_EPS = 1e-5
OUT_PAD = 128        # lane-dense padded logits width
GATE_STRIDE = 256    # lane offset between fused (r, z, n) gate blocks (128-aligned)
GRU_W = 3 * GATE_STRIDE          # 768
BLK_B_MAX = 64       # batch block size (safe for v7x 64 MiB/TC VMEM)


# ------------------------------ in-kernel helpers ---------------------------------
def _conv_bn_relu_pool(x, w, b):
    """Conv1d(valid) + folded-BN bias + ReLU + MaxPool1d(2), seq-leading layout.

    x: (L, B, Cin)   w: (KSIZE, Cin, Cout)   b: (1, Cout)

    Conv = KSIZE accumulated matmuls over leading-axis shifted slices (no lane
    concat, no sublane shifts).  MaxPool = leading-dim pair split + maximum.
    """
    L, Bb, _ = x.shape
    Lc = L - KSIZE + 1
    acc = None
    for k in range(KSIZE):
        xk = x[k:k + Lc]                                    # leading-axis slice
        term = jax.lax.dot_general(xk, w[k], (((2,), (0,)), ((), ())),
                                   preferred_element_type=jnp.float32)
        acc = term if acc is None else acc + term
    y = jnp.maximum(acc + b, 0.0)                           # (Lc, B, Cout)
    Lp = Lc // 2                                            # floor-mode pooling
    y4 = y[:2 * Lp].reshape(Lp, 2, Bb, y.shape[-1])         # leading-dim split only
    return jnp.maximum(y4[:, 0], y4[:, 1])                  # (Lp, B, Cout)


# ------------------------------ fused kernel --------------------------------------
def fused_kernel(x_ref, cw1_ref, cw23_ref, wih_ref, whh_ref,
                 fw1_ref, fw2_ref, fw3_ref, bias_ref, out_ref):
    """All three CNN+GRU branches (block-diag packed) + PrdFC head, one kernel."""
    x = x_ref[...]                        # (40, BLK_B, 6)  seq-leading, packed chans
    bias = bias_ref[...]                  # (8, 768) packed bias slab
    cw23 = cw23_ref[...]                  # (2, KSIZE, 48, 48)

    # --- packed CNN stack: 40 -> 38 -> 19 -> 17 -> 8 -> 6 -> 3 -------------------
    h1 = _conv_bn_relu_pool(x, cw1_ref[...], bias[0:1, :NB * C1])    # (19, B, 48)
    h2 = _conv_bn_relu_pool(h1, cw23[0], bias[1:2, :NB * C2])        # ( 8, B, 48)
    seq = _conv_bn_relu_pool(h2, cw23[1], bias[2:3, :NB * C3])       # ( 3, B, 48)

    T, Bb, _ = seq.shape
    HP = NB * HIDDEN                      # packed hidden = 192
    GS = GATE_STRIDE

    bih = bias[3:4, :]                    # (1, 768) fused gate biases
    bhh = bias[4:5, :]
    # Hoisted input projections for all T steps, all 3 gates in one matmul.
    # TODO: optional bf16 operand casting for v6e/v7x MXU (keep f32 on v5e).
    gi = jax.lax.dot_general(seq, wih_ref[...], (((2,), (0,)), ((), ())),
                             preferred_element_type=jnp.float32) + bih  # (T, B, 768)
    whh = whh_ref[...]                    # (192, 768) fused hidden gate weights

    h = jnp.zeros((Bb, HP), jnp.float32)  # h0 = zeros (forward1)
    for t in range(T):                    # T = 3, static unroll
        gh = jnp.dot(h, whh, preferred_element_type=jnp.float32) + bhh   # (B, 768)
        git = gi[t]                                                      # (B, 768)
        r = jax.nn.sigmoid(git[:, 0:HP] + gh[:, 0:HP])
        z = jax.nn.sigmoid(git[:, GS:GS + HP] + gh[:, GS:GS + HP])
        n = jnp.tanh(git[:, 2 * GS:2 * GS + HP] + r * gh[:, 2 * GS:2 * GS + HP])
        h = (1.0 - z) * n + z * h         # (B, 192) = [eye|head|gw]

    # --- PrdFC head (BN folded, Dropout is identity in eval mode) ----------------
    f1 = jnp.maximum(
        jnp.dot(h, fw1_ref[...], preferred_element_type=jnp.float32)
        + bias[5:6, :64], 0.0)
    f2 = jnp.maximum(
        jnp.dot(f1, fw2_ref[...], preferred_element_type=jnp.float32)
        + bias[6:7, :64], 0.0)
    # lane-dense (B, 128) store; real logits live in lanes [0, NUM_CLASSES)
    out_ref[...] = (jnp.dot(f2, fw3_ref[...], preferred_element_type=jnp.float32)
                    + bias[7:8, :OUT_PAD])


# ------------------------------ wrapper --------------------------------------------
def ehtask_forward(x, params):
    B = x.shape[0]
    eye = x[:, :EYE_FS].reshape(B, EYE_FS // 2, 2)
    head = x[:, EYE_FS:EYE_FS + HEAD_FS].reshape(B, HEAD_FS // 2, 2)
    gw = x[:, EYE_FS + HEAD_FS:EYE_FS + HEAD_FS + GW_FS].reshape(B, GW_FS // 2, 2)
    xp = jnp.concatenate([eye, head, gw], axis=-1)        # (B, 40, 6) packed channels
    xp = jnp.transpose(xp, (1, 0, 2))                     # (40, B, 6) seq-leading

    if B > BLK_B_MAX:
        blk_b = BLK_B_MAX
        b_pad = ((B + blk_b - 1) // blk_b) * blk_b
        if b_pad != B:
            xp = jnp.pad(xp, ((0, 0), (0, b_pad - B), (0, 0)))
    else:
        blk_b = B                                          # single block == full dim
        b_pad = B

    x_spec = pl.BlockSpec((EYE_FS // 2, blk_b, 2 * NB), lambda i: (0, i, 0))
    # Constant index maps: weights stay resident, fetched once across the grid.
    w_specs = [pl.BlockSpec(w.shape, lambda i, nd=w.ndim: (0,) * nd) for w in params]

    out_pad = pl.pallas_call(
        fused_kernel,
        out_shape=jax.ShapeDtypeStruct((b_pad, OUT_PAD), jnp.float32),
        grid=(b_pad // blk_b,),
        in_specs=[x_spec] + w_specs,
        out_specs=pl.BlockSpec((blk_b, OUT_PAD), lambda i: (i, 0)),
        compiler_params=pltpu.CompilerParams(
            dimension_semantics=("parallel",),
            vmem_limit_bytes=32 * 1024 * 1024),
    )(xp, *params)
    return out_pad[:B, :NUM_CLASSES]


# ------------------------------ parameter construction -----------------------------
def fold_conv_bn(key, cin, cout, ksize=KSIZE):
    """Deterministic Conv1d + BatchNorm1d params, folded for eval-mode inference."""
    kw, kb, kg, kbe, km, kv = jax.random.split(key, 6)
    w = 0.1 * jax.random.normal(kw, (cout, cin, ksize), jnp.float32)
    b = 0.1 * jax.random.normal(kb, (cout,), jnp.float32)
    gamma = 1.0 + 0.1 * jax.random.normal(kg, (cout,), jnp.float32)
    beta = 0.1 * jax.random.normal(kbe, (cout,), jnp.float32)
    mean = 0.1 * jax.random.normal(km, (cout,), jnp.float32)
    var = 1.0 + 0.1 * jnp.abs(jax.random.normal(kv, (cout,), jnp.float32))
    scale = gamma / jnp.sqrt(var + BN_EPS)
    eff_w = w * scale[:, None, None]                       # (cout, cin, K)
    w_kco = jnp.transpose(eff_w, (2, 1, 0))                # (K, cin, cout)
    eff_b = ((b - mean) * scale + beta).reshape(1, cout)
    return w_kco, eff_b


def init_gru(key, in_size, hidden):
    """PyTorch-style GRU params (gate order r,z,n), pre-transposed for x @ W layout."""
    k1, k2, k3, k4 = jax.random.split(key, 4)
    s = (1.0 / hidden) ** 0.5
    wih = jax.random.uniform(k1, (3 * hidden, in_size), jnp.float32, -s, s)
    whh = jax.random.uniform(k2, (3 * hidden, hidden), jnp.float32, -s, s)
    bih = jax.random.uniform(k3, (3 * hidden,), jnp.float32, -s, s)
    bhh = jax.random.uniform(k4, (3 * hidden,), jnp.float32, -s, s)
    return wih.T, whh.T, bih.reshape(1, -1), bhh.reshape(1, -1)


def fold_linear_bn(key, in_f, out_f, with_bn):
    kw, kb, kg, kbe, km, kv = jax.random.split(key, 6)
    w = 0.1 * jax.random.normal(kw, (out_f, in_f), jnp.float32)
    b = 0.1 * jax.random.normal(kb, (out_f,), jnp.float32)
    if with_bn:
        gamma = 1.0 + 0.1 * jax.random.normal(kg, (out_f,), jnp.float32)
        beta = 0.1 * jax.random.normal(kbe, (out_f,), jnp.float32)
        mean = 0.1 * jax.random.normal(km, (out_f,), jnp.float32)
        var = 1.0 + 0.1 * jnp.abs(jax.random.normal(kv, (out_f,), jnp.float32))
        scale = gamma / jnp.sqrt(var + BN_EPS)
        eff_w = w.T * scale[None, :]
        eff_b = ((b - mean) * scale + beta).reshape(1, out_f)
    else:
        eff_w = w.T
        eff_b = b.reshape(1, out_f)
    return eff_w, eff_b


def make_branch_params(key):
    ks = jax.random.split(key, 4)
    cw1, cb1 = fold_conv_bn(ks[0], 2, C1)
    cw2, cb2 = fold_conv_bn(ks[1], C1, C2)
    cw3, cb3 = fold_conv_bn(ks[2], C2, C3)
    wih, whh, bih, bhh = init_gru(ks[3], C3, HIDDEN)
    return dict(cw1=cw1, cb1=cb1, cw2=cw2, cb2=cb2, cw3=cw3, cb3=cb3,
                wih=wih, whh=whh, bih=bih, bhh=bhh)


def make_head_params(keys):
    fw1, fb1 = fold_linear_bn(keys[0], NB * HIDDEN, 64, True)
    fw2, fb2 = fold_linear_bn(keys[1], 64, 64, True)
    fw3, fb3 = fold_linear_bn(keys[2], 64, NUM_CLASSES, False)
    return dict(w1=fw1, b1=fb1, w2=fw2, b2=fb2, w3=fw3, b3=fb3)


def _pack_conv(ws, bs, cin, cout):
    """Block-diagonal packing of per-branch (K, cin, cout) conv weights."""
    w = jnp.zeros((KSIZE, NB * cin, NB * cout), jnp.float32)
    for br, wb in enumerate(ws):
        w = w.at[:, br * cin:(br + 1) * cin, br * cout:(br + 1) * cout].set(wb)
    return w, jnp.concatenate(bs, axis=1)


def _pack_gru_fused(branches):
    """Block-diagonal, fused-gate GRU slabs with 256-lane-aligned gate offsets."""
    H, C = HIDDEN, C3
    wih = jnp.zeros((NB * C, GRU_W), jnp.float32)
    whh = jnp.zeros((NB * H, GRU_W), jnp.float32)
    bih = jnp.zeros((1, GRU_W), jnp.float32)
    bhh = jnp.zeros((1, GRU_W), jnp.float32)
    for g in range(3):                                     # gate order (r, z, n)
        off = g * GATE_STRIDE
        for br, bp in enumerate(branches):
            wih = wih.at[br * C:(br + 1) * C, off + br * H:off + (br + 1) * H].set(
                bp["wih"][:, g * H:(g + 1) * H])
            whh = whh.at[br * H:(br + 1) * H, off + br * H:off + (br + 1) * H].set(
                bp["whh"][:, g * H:(g + 1) * H])
            bih = bih.at[:, off + br * H:off + (br + 1) * H].set(
                bp["bih"][:, g * H:(g + 1) * H])
            bhh = bhh.at[:, off + br * H:off + (br + 1) * H].set(
                bp["bhh"][:, g * H:(g + 1) * H])
    return wih, whh, bih, bhh


def pack_params(branches, head):
    """Consolidate everything into 8 weight operands + 1 bias slab (9 inputs)."""
    cw1, cb1 = _pack_conv([bp["cw1"] for bp in branches],
                          [bp["cb1"] for bp in branches], 2, C1)
    cw2, cb2 = _pack_conv([bp["cw2"] for bp in branches],
                          [bp["cb2"] for bp in branches], C1, C2)
    cw3, cb3 = _pack_conv([bp["cw3"] for bp in branches],
                          [bp["cb3"] for bp in branches], C2, C3)
    cw23 = jnp.stack([cw2, cw3], axis=0)                   # (2, K, 48, 48)
    wih, whh, bih, bhh = _pack_gru_fused(branches)
    fw3p = jnp.zeros((64, OUT_PAD), jnp.float32).at[:, :NUM_CLASSES].set(head["w3"])
    fb3p = jnp.zeros((1, OUT_PAD), jnp.float32).at[:, :NUM_CLASSES].set(head["b3"])

    bias_rows = [cb1, cb2, cb3, bih, bhh, head["b1"], head["b2"], fb3p]
    bias = jnp.zeros((8, GRU_W), jnp.float32)
    for r, v in enumerate(bias_rows):
        v = v.reshape(-1)
        bias = bias.at[r, :v.shape[0]].set(v)

    return (cw1, cw23, wih, whh, head["w1"], head["w2"], fw3p, bias)


# ------------------------------ pure-JAX reference (unpacked) -----------------------
def _ref_forward(x, branches, fc_raw):
    """Straightforward per-branch reference with the same folded parameters."""
    B = x.shape[0]
    HI = jax.lax.Precision.HIGHEST
    H = HIDDEN

    def conv_block(xb, w_kco, b):
        Lc = xb.shape[1] - KSIZE + 1
        acc = None
        for k in range(KSIZE):
            t = jax.lax.dot_general(xb[:, k:k + Lc, :], w_kco[k],
                                    (((2,), (0,)), ((), ())),
                                    precision=HI, preferred_element_type=jnp.float32)
            acc = t if acc is None else acc + t
        y = jnp.maximum(acc + b, 0.0)
        Lp = Lc // 2
        return jnp.maximum(y[:, 0:2 * Lp:2, :], y[:, 1:2 * Lp:2, :])

    parts = [x[:, :EYE_FS].reshape(B, -1, 2),
             x[:, EYE_FS:EYE_FS + HEAD_FS].reshape(B, -1, 2),
             x[:, EYE_FS + HEAD_FS:EYE_FS + HEAD_FS + GW_FS].reshape(B, -1, 2)]
    feats = []
    for xb, bp in zip(parts, branches):
        hcb = conv_block(xb, bp["cw1"], bp["cb1"])
        hcb = conv_block(hcb, bp["cw2"], bp["cb2"])
        seq = conv_block(hcb, bp["cw3"], bp["cb3"])
        hs = jnp.zeros((B, H), jnp.float32)
        for t in range(seq.shape[1]):
            gi = jnp.dot(seq[:, t, :], bp["wih"], precision=HI) + bp["bih"]
            gh = jnp.dot(hs, bp["whh"], precision=HI) + bp["bhh"]
            r = jax.nn.sigmoid(gi[:, 0:H] + gh[:, 0:H])
            z = jax.nn.sigmoid(gi[:, H:2 * H] + gh[:, H:2 * H])
            n = jnp.tanh(gi[:, 2 * H:3 * H] + r * gh[:, 2 * H:3 * H])
            hs = (1.0 - z) * n + z * hs
        feats.append(hs)
    f = jnp.concatenate(feats, axis=1)
    f1 = jnp.maximum(jnp.dot(f, fc_raw["w1"], precision=HI) + fc_raw["b1"], 0.0)
    f2 = jnp.maximum(jnp.dot(f1, fc_raw["w2"], precision=HI) + fc_raw["b2"], 0.0)
    return jnp.dot(f2, fc_raw["w3"], precision=HI) + fc_raw["b3"]


# ------------------------------ main ------------------------------------------------
if __name__ == "__main__":
    root = jax.random.PRNGKey(0)
    keys = jax.random.split(root, 8)

    B = 2
    x = jax.random.normal(keys[0], (B, EYE_FS + HEAD_FS + GW_FS), jnp.float32)

    branches = [make_branch_params(keys[1]),
                make_branch_params(keys[2]),
                make_branch_params(keys[3])]
    head = make_head_params(keys[4:7])
    params = pack_params(branches, head)

    fwd = jax.jit(ehtask_forward)

    # Small serving-shape check (single block, grid=(1,)).
    out = jax.block_until_ready(fwd(x, params))
    assert out.shape == (B, NUM_CLASSES)
    assert bool(jnp.all(jnp.isfinite(out)))
    ref = _ref_forward(x, branches, head)
    assert bool(jnp.allclose(out, ref, rtol=2e-2, atol=2e-2)), (
        "pallas output deviates from pure-JAX reference (B=2)")

    # Larger batch exercising the parallel batch grid + padding path.
    B_big = 80
    x_big = jax.random.normal(keys[7], (B_big, EYE_FS + HEAD_FS + GW_FS), jnp.float32)
    out_big = jax.block_until_ready(fwd(x_big, params))
    assert out_big.shape == (B_big, NUM_CLASSES)
    assert bool(jnp.all(jnp.isfinite(out_big)))
    ref_big = _ref_forward(x_big, branches, head)
    assert bool(jnp.allclose(out_big, ref_big, rtol=2e-2, atol=2e-2)), (
        "pallas output deviates from pure-JAX reference (B=80, gridded)")

    print("KERNEL_OK")
</pallas_src>

<mosaic_0001>
module attributes {stable_mosaic.version = 11 : i64} {
  func.func @fused_kernel(%arg0: i32, %arg1: memref<40x2x6xf32, #tpu.memory_space<vmem>>, %arg2: memref<3x6x48xf32, #tpu.memory_space<vmem>>, %arg3: memref<2x3x48x48xf32, #tpu.memory_space<vmem>>, %arg4: memref<48x768xf32, #tpu.memory_space<vmem>>, %arg5: memref<192x768xf32, #tpu.memory_space<vmem>>, %arg6: memref<192x64xf32, #tpu.memory_space<vmem>>, %arg7: memref<64x64xf32, #tpu.memory_space<vmem>>, %arg8: memref<64x128xf32, #tpu.memory_space<vmem>>, %arg9: memref<8x768xf32, #tpu.memory_space<vmem>>, %arg10: memref<2x128xf32, #tpu.memory_space<vmem>>) attributes {dimension_semantics = [#tpu.dimension_semantics<parallel>], iteration_bounds = array<i64: 1>, scalar_prefetch = 0 : i64, scratch_operands = 0 : i64, tpu.core_type = #tpu.core_type<tc>, window_params = [{transform_indices = @transform_0, window_bounds = array<i64: 40, 2, 6>}, {pipeline_mode = #tpu.pipeline_mode<synchronous>, transform_indices = @transform_1, window_bounds = array<i64: 3, 6, 48>}, {pipeline_mode = #tpu.pipeline_mode<synchronous>, transform_indices = @transform_2, window_bounds = array<i64: 2, 3, 48, 48>}, {pipeline_mode = #tpu.pipeline_mode<synchronous>, transform_indices = @transform_3, window_bounds = array<i64: 48, 768>}, {pipeline_mode = #tpu.pipeline_mode<synchronous>, transform_indices = @transform_4, window_bounds = array<i64: 192, 768>}, {pipeline_mode = #tpu.pipeline_mode<synchronous>, transform_indices = @transform_5, window_bounds = array<i64: 192, 64>}, {pipeline_mode = #tpu.pipeline_mode<synchronous>, transform_indices = @transform_6, window_bounds = array<i64: 64, 64>}, {pipeline_mode = #tpu.pipeline_mode<synchronous>, transform_indices = @transform_7, window_bounds = array<i64: 64, 128>}, {pipeline_mode = #tpu.pipeline_mode<synchronous>, transform_indices = @transform_8, window_bounds = array<i64: 8, 768>}, {transform_indices = @transform_9, window_bounds = array<i64: 2, 128>}]} {
    %c0 = arith.constant 0 : index
    %c0_0 = arith.constant 0 : index
    %c0_1 = arith.constant 0 : index
    %0 = vector.load %arg1[%c0, %c0_0, %c0_1] : memref<40x2x6xf32, #tpu.memory_space<vmem>>, vector<40x2x6xf32>
    %c0_2 = arith.constant 0 : index
    %c0_3 = arith.constant 0 : index
    %1 = vector.load %arg9[%c0_2, %c0_3] : memref<8x768xf32, #tpu.memory_space<vmem>>, vector<8x768xf32>
    %c0_4 = arith.constant 0 : index
    %c0_5 = arith.constant 0 : index
    %c0_6 = arith.constant 0 : index
    %c0_7 = arith.constant 0 : index
    %2 = vector.load %arg3[%c0_4, %c0_5, %c0_6, %c0_7] : memref<2x3x48x48xf32, #tpu.memory_space<vmem>>, vector<2x3x48x48xf32>
    %c0_8 = arith.constant 0 : index
    %c0_9 = arith.constant 0 : index
    %c0_10 = arith.constant 0 : index
    %3 = vector.load %arg2[%c0_8, %c0_9, %c0_10] : memref<3x6x48xf32, #tpu.memory_space<vmem>>, vector<3x6x48xf32>
    %4 = vector.extract_strided_slice %1 {offsets = [0, 0], sizes = [1, 48], strides = [1, 1]} : vector<8x768xf32> to vector<1x48xf32>
    %5 = vector.extract_strided_slice %0 {offsets = [0, 0, 0], sizes = [38, 2, 6], strides = [1, 1, 1]} : vector<40x2x6xf32> to vector<38x2x6xf32>
    %6 = vector.extract_strided_slice %3 {offsets = [0, 0, 0], sizes = [1, 6, 48], strides = [1, 1, 1]} : vector<3x6x48xf32> to vector<1x6x48xf32>
    %7 = vector.shape_cast %6 : vector<1x6x48xf32> to vector<6x48xf32>
    %cst = arith.constant dense<0.000000e+00> : vector<38x2x48xf32>
    %8 = tpu.matmul %5, %7, %cst {dimension_numbers = #tpu.dot_dimension_numbers<[2], [0], [0, 1], [1], [0, 0, 0, 1, 1, 1], [], []>} : vector<38x2x6xf32>, vector<6x48xf32>, vector<38x2x48xf32> -> vector<38x2x48xf32>
    %9 = vector.extract_strided_slice %0 {offsets = [1, 0, 0], sizes = [38, 2, 6], strides = [1, 1, 1]} : vector<40x2x6xf32> to vector<38x2x6xf32>
    %10 = vector.extract_strided_slice %3 {offsets = [1, 0, 0], sizes = [1, 6, 48], strides = [1, 1, 1]} : vector<3x6x48xf32> to vector<1x6x48xf32>
    %11 = vector.shape_cast %10 : vector<1x6x48xf32> to vector<6x48xf32>
    %cst_11 = arith.constant dense<0.000000e+00> : vector<38x2x48xf32>
    %12 = tpu.matmul %9, %11, %cst_11 {dimension_numbers = #tpu.dot_dimension_numbers<[2], [0], [0, 1], [1], [0, 0, 0, 1, 1, 1], [], []>} : vector<38x2x6xf32>, vector<6x48xf32>, vector<38x2x48xf32> -> vector<38x2x48xf32>
    %13 = arith.addf %8, %12 : vector<38x2x48xf32>
    %14 = vector.extract_strided_slice %0 {offsets = [2, 0, 0], sizes = [38, 2, 6], strides = [1, 1, 1]} : vector<40x2x6xf32> to vector<38x2x6xf32>
    %15 = vector.extract_strided_slice %3 {offsets = [2, 0, 0], sizes = [1, 6, 48], strides = [1, 1, 1]} : vector<3x6x48xf32> to vector<1x6x48xf32>
    %16 = vector.shape_cast %15 : vector<1x6x48xf32> to vector<6x48xf32>
    %cst_12 = arith.constant dense<0.000000e+00> : vector<38x2x48xf32>
    %17 = tpu.matmul %14, %16, %cst_12 {dimension_numbers = #tpu.dot_dimension_numbers<[2], [0], [0, 1], [1], [0, 0, 0, 1, 1, 1], [], []>} : vector<38x2x6xf32>, vector<6x48xf32>, vector<38x2x48xf32> -> vector<38x2x48xf32>
    %18 = arith.addf %13, %17 : vector<38x2x48xf32>
    %19 = vector.shape_cast %4 : vector<1x48xf32> to vector<1x1x48xf32>
    %20 = vector.broadcast %19 : vector<1x1x48xf32> to vector<38x2x48xf32>
    %21 = arith.addf %18, %20 : vector<38x2x48xf32>
    %cst_13 = arith.constant 0.000000e+00 : f32
    %22 = vector.broadcast %cst_13 : f32 to vector<38x2x48xf32>
    %23 = arith.maximumf %21, %22 : vector<38x2x48xf32>
    %24 = vector.shape_cast %23 : vector<38x2x48xf32> to vector<19x2x2x48xf32>
    %25 = vector.extract_strided_slice %24 {offsets = [0, 0, 0, 0], sizes = [19, 1, 2, 48], strides = [1, 1, 1, 1]} : vector<19x2x2x48xf32> to vector<19x1x2x48xf32>
    %26 = vector.shape_cast %25 : vector<19x1x2x48xf32> to vector<19x2x48xf32>
    %27 = vector.extract_strided_slice %24 {offsets = [0, 1, 0, 0], sizes = [19, 1, 2, 48], strides = [1, 1, 1, 1]} : vector<19x2x2x48xf32> to vector<19x1x2x48xf32>
    %28 = vector.shape_cast %27 : vector<19x1x2x48xf32> to vector<19x2x48xf32>
    %29 = arith.maximumf %26, %28 : vector<19x2x48xf32>
    %30 = vector.extract_strided_slice %2 {offsets = [0, 0, 0, 0], sizes = [1, 3, 48, 48], strides = [1, 1, 1, 1]} : vector<2x3x48x48xf32> to vector<1x3x48x48xf32>
    %31 = vector.shape_cast %30 : vector<1x3x48x48xf32> to vector<3x48x48xf32>
    %32 = vector.extract_strided_slice %1 {offsets = [1, 0], sizes = [1, 48], strides = [1, 1]} : vector<8x768xf32> to vector<1x48xf32>
    %33 = vector.extract_strided_slice %29 {offsets = [0, 0, 0], sizes = [17, 2, 48], strides = [1, 1, 1]} : vector<19x2x48xf32> to vector<17x2x48xf32>
    %34 = vector.extract_strided_slice %31 {offsets = [0, 0, 0], sizes = [1, 48, 48], strides = [1, 1, 1]} : vector<3x48x48xf32> to vector<1x48x48xf32>
    %35 = vector.shape_cast %34 : vector<1x48x48xf32> to vector<48x48xf32>
    %cst_14 = arith.constant dense<0.000000e+00> : vector<17x2x48xf32>
    %36 = tpu.matmul %33, %35, %cst_14 {dimension_numbers = #tpu.dot_dimension_numbers<[2], [0], [0, 1], [1], [0, 0, 0, 1, 1, 1], [], []>} : vector<17x2x48xf32>, vector<48x48xf32>, vector<17x2x48xf32> -> vector<17x2x48xf32>
    %37 = vector.extract_strided_slice %29 {offsets = [1, 0, 0], sizes = [17, 2, 48], strides = [1, 1, 1]} : vector<19x2x48xf32> to vector<17x2x48xf32>
    %38 = vector.extract_strided_slice %31 {offsets = [1, 0, 0], sizes = [1, 48, 48], strides = [1, 1, 1]} : vector<3x48x48xf32> to vector<1x48x48xf32>
    %39 = vector.shape_cast %38 : vector<1x48x48xf32> to vector<48x48xf32>
    %cst_15 = arith.constant dense<0.000000e+00> : vector<17x2x48xf32>
    %40 = tpu.matmul %37, %39, %cst_15 {dimension_numbers = #tpu.dot_dimension_numbers<[2], [0], [0, 1], [1], [0, 0, 0, 1, 1, 1], [], []>} : vector<17x2x48xf32>, vector<48x48xf32>, vector<17x2x48xf32> -> vector<17x2x48xf32>
    %41 = arith.addf %36, %40 : vector<17x2x48xf32>
    %42 = vector.extract_strided_slice %29 {offsets = [2, 0, 0], sizes = [17, 2, 48], strides = [1, 1, 1]} : vector<19x2x48xf32> to vector<17x2x48xf32>
    %43 = vector.extract_strided_slice %31 {offsets = [2, 0, 0], sizes = [1, 48, 48], strides = [1, 1, 1]} : vector<3x48x48xf32> to vector<1x48x48xf32>
    %44 = vector.shape_cast %43 : vector<1x48x48xf32> to vector<48x48xf32>
    %cst_16 = arith.constant dense<0.000000e+00> : vector<17x2x48xf32>
    %45 = tpu.matmul %42, %44, %cst_16 {dimension_numbers = #tpu.dot_dimension_numbers<[2], [0], [0, 1], [1], [0, 0, 0, 1, 1, 1], [], []>} : vector<17x2x48xf32>, vector<48x48xf32>, vector<17x2x48xf32> -> vector<17x2x48xf32>
    %46 = arith.addf %41, %45 : vector<17x2x48xf32>
    %47 = vector.shape_cast %32 : vector<1x48xf32> to vector<1x1x48xf32>
    %48 = vector.broadcast %47 : vector<1x1x48xf32> to vector<17x2x48xf32>
    %49 = arith.addf %46, %48 : vector<17x2x48xf32>
    %cst_17 = arith.constant 0.000000e+00 : f32
    %50 = vector.broadcast %cst_17 : f32 to vector<17x2x48xf32>
    %51 = arith.maximumf %49, %50 : vector<17x2x48xf32>
    %52 = vector.extract_strided_slice %51 {offsets = [0, 0, 0], sizes = [16, 2, 48], strides = [1, 1, 1]} : vector<17x2x48xf32> to vector<16x2x48xf32>
    %53 = vector.shape_cast %52 : vector<16x2x48xf32> to vector<8x2x2x48xf32>
    %54 = vector.extract_strided_slice %53 {offsets = [0, 0, 0, 0], sizes = [8, 1, 2, 48], strides = [1, 1, 1, 1]} : vector<8x2x2x48xf32> to vector<8x1x2x48xf32>
    %55 = vector.shape_cast %54 : vector<8x1x2x48xf32> to vector<8x2x48xf32>
    %56 = vector.extract_strided_slice %53 {offsets = [0, 1, 0, 0], sizes = [8, 1, 2, 48], strides = [1, 1, 1, 1]} : vector<8x2x2x48xf32> to vector<8x1x2x48xf32>
    %57 = vector.shape_cast %56 : vector<8x1x2x48xf32> to vector<8x2x48xf32>
    %58 = arith.maximumf %55, %57 : vector<8x2x48xf32>
    %59 = vector.extract_strided_slice %2 {offsets = [1, 0, 0, 0], sizes = [1, 3, 48, 48], strides = [1, 1, 1, 1]} : vector<2x3x48x48xf32> to vector<1x3x48x48xf32>
    %60 = vector.shape_cast %59 : vector<1x3x48x48xf32> to vector<3x48x48xf32>
    %61 = vector.extract_strided_slice %1 {offsets = [2, 0], sizes = [1, 48], strides = [1, 1]} : vector<8x768xf32> to vector<1x48xf32>
    %62 = vector.extract_strided_slice %58 {offsets = [0, 0, 0], sizes = [6, 2, 48], strides = [1, 1, 1]} : vector<8x2x48xf32> to vector<6x2x48xf32>
    %63 = vector.extract_strided_slice %60 {offsets = [0, 0, 0], sizes = [1, 48, 48], strides = [1, 1, 1]} : vector<3x48x48xf32> to vector<1x48x48xf32>
    %64 = vector.shape_cast %63 : vector<1x48x48xf32> to vector<48x48xf32>
    %cst_18 = arith.constant dense<0.000000e+00> : vector<6x2x48xf32>
    %65 = tpu.matmul %62, %64, %cst_18 {dimension_numbers = #tpu.dot_dimension_numbers<[2], [0], [0, 1], [1], [0, 0, 0, 1, 1, 1], [], []>} : vector<6x2x48xf32>, vector<48x48xf32>, vector<6x2x48xf32> -> vector<6x2x48xf32>
    %66 = vector.extract_strided_slice %58 {offsets = [1, 0, 0], sizes = [6, 2, 48], strides = [1, 1, 1]} : vector<8x2x48xf32> to vector<6x2x48xf32>
    %67 = vector.extract_strided_slice %60 {offsets = [1, 0, 0], sizes = [1, 48, 48], strides = [1, 1, 1]} : vector<3x48x48xf32> to vector<1x48x48xf32>
    %68 = vector.shape_cast %67 : vector<1x48x48xf32> to vector<48x48xf32>
    %cst_19 = arith.constant dense<0.000000e+00> : vector<6x2x48xf32>
    %69 = tpu.matmul %66, %68, %cst_19 {dimension_numbers = #tpu.dot_dimension_numbers<[2], [0], [0, 1], [1], [0, 0, 0, 1, 1, 1], [], []>} : vector<6x2x48xf32>, vector<48x48xf32>, vector<6x2x48xf32> -> vector<6x2x48xf32>
    %70 = arith.addf %65, %69 : vector<6x2x48xf32>
    %71 = vector.extract_strided_slice %58 {offsets = [2, 0, 0], sizes = [6, 2, 48], strides = [1, 1, 1]} : vector<8x2x48xf32> to vector<6x2x48xf32>
    %72 = vector.extract_strided_slice %60 {offsets = [2, 0, 0], sizes = [1, 48, 48], strides = [1, 1, 1]} : vector<3x48x48xf32> to vector<1x48x48xf32>
    %73 = vector.shape_cast %72 : vector<1x48x48xf32> to vector<48x48xf32>
    %cst_20 = arith.constant dense<0.000000e+00> : vector<6x2x48xf32>
    %74 = tpu.matmul %71, %73, %cst_20 {dimension_numbers = #tpu.dot_dimension_numbers<[2], [0], [0, 1], [1], [0, 0, 0, 1, 1, 1], [], []>} : vector<6x2x48xf32>, vector<48x48xf32>, vector<6x2x48xf32> -> vector<6x2x48xf32>
    %75 = arith.addf %70, %74 : vector<6x2x48xf32>
    %76 = vector.shape_cast %61 : vector<1x48xf32> to vector<1x1x48xf32>
    %77 = vector.broadcast %76 : vector<1x1x48xf32> to vector<6x2x48xf32>
    %78 = arith.addf %75, %77 : vector<6x2x48xf32>
    %cst_21 = arith.constant 0.000000e+00 : f32
    %79 = vector.broadcast %cst_21 : f32 to vector<6x2x48xf32>
    %80 = arith.maximumf %78, %79 : vector<6x2x48xf32>
    %81 = vector.shape_cast %80 : vector<6x2x48xf32> to vector<3x2x2x48xf32>
    %82 = vector.extract_strided_slice %81 {offsets = [0, 0, 0, 0], sizes = [3, 1, 2, 48], strides = [1, 1, 1, 1]} : vector<3x2x2x48xf32> to vector<3x1x2x48xf32>
    %83 = vector.shape_cast %82 : vector<3x1x2x48xf32> to vector<3x2x48xf32>
    %84 = vector.extract_strided_slice %81 {offsets = [0, 1, 0, 0], sizes = [3, 1, 2, 48], strides = [1, 1, 1, 1]} : vector<3x2x2x48xf32> to vector<3x1x2x48xf32>
    %85 = vector.shape_cast %84 : vector<3x1x2x48xf32> to vector<3x2x48xf32>
    %86 = arith.maximumf %83, %85 : vector<3x2x48xf32>
    %87 = vector.extract_strided_slice %1 {offsets = [3, 0], sizes = [1, 768], strides = [1, 1]} : vector<8x768xf32> to vector<1x768xf32>
    %88 = vector.extract_strided_slice %1 {offsets = [4, 0], sizes = [1, 768], strides = [1, 1]} : vector<8x768xf32> to vector<1x768xf32>
    %c0_22 = arith.constant 0 : index
    %c0_23 = arith.constant 0 : index
    %89 = vector.load %arg4[%c0_22, %c0_23] : memref<48x768xf32, #tpu.memory_space<vmem>>, vector<48x768xf32>
    %cst_24 = arith.constant dense<0.000000e+00> : vector<3x2x768xf32>
    %90 = tpu.matmul %86, %89, %cst_24 {dimension_numbers = #tpu.dot_dimension_numbers<[2], [0], [0, 1], [1], [0, 0, 0, 1, 1, 1], [], []>} : vector<3x2x48xf32>, vector<48x768xf32>, vector<3x2x768xf32> -> vector<3x2x768xf32>
    %91 = vector.shape_cast %87 : vector<1x768xf32> to vector<1x1x768xf32>
    %92 = vector.broadcast %91 : vector<1x1x768xf32> to vector<3x2x768xf32>
    %93 = arith.addf %90, %92 : vector<3x2x768xf32>
    %c0_25 = arith.constant 0 : index
    %c0_26 = arith.constant 0 : index
    %94 = vector.load %arg5[%c0_25, %c0_26] : memref<192x768xf32, #tpu.memory_space<vmem>>, vector<192x768xf32>
    %cst_27 = arith.constant 0.000000e+00 : f32
    %95 = vector.broadcast %cst_27 : f32 to vector<2x192xf32>
    %cst_28 = arith.constant dense<0.000000e+00> : vector<2x768xf32>
    %96 = tpu.matmul %95, %94, %cst_28 {dimension_numbers = #tpu.dot_dimension_numbers<[1], [0], [0], [1], [0, 0, 1, 1], [], []>} : vector<2x192xf32>, vector<192x768xf32>, vector<2x768xf32> -> vector<2x768xf32>
    %97 = vector.broadcast %88 : vector<1x768xf32> to vector<2x768xf32>
    %98 = arith.addf %96, %97 : vector<2x768xf32>
    %99 = vector.extract_strided_slice %93 {offsets = [0, 0, 0], sizes = [1, 2, 768], strides = [1, 1, 1]} : vector<3x2x768xf32> to vector<1x2x768xf32>
    %100 = vector.shape_cast %99 : vector<1x2x768xf32> to vector<2x768xf32>
    %101 = vector.extract_strided_slice %100 {offsets = [0, 0], sizes = [2, 192], strides = [1, 1]} : vector<2x768xf32> to vector<2x192xf32>
    %102 = vector.extract_strided_slice %98 {offsets = [0, 0], sizes = [2, 192], strides = [1, 1]} : vector<2x768xf32> to vector<2x192xf32>
    %103 = arith.addf %101, %102 : vector<2x192xf32>
    %104 = arith.negf %103 : vector<2x192xf32>
    %105 = math.exp %104 : vector<2x192xf32>
    %cst_29 = arith.constant 1.000000e+00 : f32
    %106 = vector.broadcast %cst_29 : f32 to vector<2x192xf32>
    %107 = arith.addf %106, %105 : vector<2x192xf32>
    %108 = arith.divf %106, %107 : vector<2x192xf32>
    %109 = vector.extract_strided_slice %100 {offsets = [0, 256], sizes = [2, 192], strides = [1, 1]} : vector<2x768xf32> to vector<2x192xf32>
    %110 = vector.extract_strided_slice %98 {offsets = [0, 256], sizes = [2, 192], strides = [1, 1]} : vector<2x768xf32> to vector<2x192xf32>
    %111 = arith.addf %109, %110 : vector<2x192xf32>
    %112 = arith.negf %111 : vector<2x192xf32>
    %113 = math.exp %112 : vector<2x192xf32>
    %cst_30 = arith.constant 1.000000e+00 : f32
    %114 = vector.broadcast %cst_30 : f32 to vector<2x192xf32>
    %115 = arith.addf %114, %113 : vector<2x192xf32>
    %116 = arith.divf %114, %115 : vector<2x192xf32>
    %117 = vector.extract_strided_slice %100 {offsets = [0, 512], sizes = [2, 192], strides = [1, 1]} : vector<2x768xf32> to vector<2x192xf32>
    %118 = vector.extract_strided_slice %98 {offsets = [0, 512], sizes = [2, 192], strides = [1, 1]} : vector<2x768xf32> to vector<2x192xf32>
    %119 = arith.mulf %108, %118 : vector<2x192xf32>
    %120 = arith.addf %117, %119 : vector<2x192xf32>
    %121 = math.tanh %120 : vector<2x192xf32>
    %cst_31 = arith.constant 1.000000e+00 : f32
    %122 = vector.broadcast %cst_31 : f32 to vector<2x192xf32>
    %123 = arith.subf %122, %116 : vector<2x192xf32>
    %124 = arith.mulf %123, %121 : vector<2x192xf32>
    %125 = arith.mulf %116, %95 : vector<2x192xf32>
    %126 = arith.addf %124, %125 : vector<2x192xf32>
    %cst_32 = arith.constant dense<0.000000e+00> : vector<2x768xf32>
    %127 = tpu.matmul %126, %94, %cst_32 {dimension_numbers = #tpu.dot_dimension_numbers<[1], [0], [0], [1], [0, 0, 1, 1], [], []>} : vector<2x192xf32>, vector<192x768xf32>, vector<2x768xf32> -> vector<2x768xf32>
    %128 = vector.broadcast %88 : vector<1x768xf32> to vector<2x768xf32>
    %129 = arith.addf %127, %128 : vector<2x768xf32>
    %130 = vector.extract_strided_slice %93 {offsets = [1, 0, 0], sizes = [1, 2, 768], strides = [1, 1, 1]} : vector<3x2x768xf32> to vector<1x2x768xf32>
    %131 = vector.shape_cast %130 : vector<1x2x768xf32> to vector<2x768xf32>
    %132 = vector.extract_strided_slice %131 {offsets = [0, 0], sizes = [2, 192], strides = [1, 1]} : vector<2x768xf32> to vector<2x192xf32>
    %133 = vector.extract_strided_slice %129 {offsets = [0, 0], sizes = [2, 192], strides = [1, 1]} : vector<2x768xf32> to vector<2x192xf32>
    %134 = arith.addf %132, %133 : vector<2x192xf32>
    %135 = arith.negf %134 : vector<2x192xf32>
    %136 = math.exp %135 : vector<2x192xf32>
    %cst_33 = arith.constant 1.000000e+00 : f32
    %137 = vector.broadcast %cst_33 : f32 to vector<2x192xf32>
    %138 = arith.addf %137, %136 : vector<2x192xf32>
    %139 = arith.divf %137, %138 : vector<2x192xf32>
    %140 = vector.extract_strided_slice %131 {offsets = [0, 256], sizes = [2, 192], strides = [1, 1]} : vector<2x768xf32> to vector<2x192xf32>
    %141 = vector.extract_strided_slice %129 {offsets = [0, 256], sizes = [2, 192], strides = [1, 1]} : vector<2x768xf32> to vector<2x192xf32>
    %142 = arith.addf %140, %141 : vector<2x192xf32>
    %143 = arith.negf %142 : vector<2x192xf32>
    %144 = math.exp %143 : vector<2x192xf32>
    %cst_34 = arith.constant 1.000000e+00 : f32
    %145 = vector.broadcast %cst_34 : f32 to vector<2x192xf32>
    %146 = arith.addf %145, %144 : vector<2x192xf32>
    %147 = arith.divf %145, %146 : vector<2x192xf32>
    %148 = vector.extract_strided_slice %131 {offsets = [0, 512], sizes = [2, 192], strides = [1, 1]} : vector<2x768xf32> to vector<2x192xf32>
    %149 = vector.extract_strided_slice %129 {offsets = [0, 512], sizes = [2, 192], strides = [1, 1]} : vector<2x768xf32> to vector<2x192xf32>
    %150 = arith.mulf %139, %149 : vector<2x192xf32>
    %151 = arith.addf %148, %150 : vector<2x192xf32>
    %152 = math.tanh %151 : vector<2x192xf32>
    %cst_35 = arith.constant 1.000000e+00 : f32
    %153 = vector.broadcast %cst_35 : f32 to vector<2x192xf32>
    %154 = arith.subf %153, %147 : vector<2x192xf32>
    %155 = arith.mulf %154, %152 : vector<2x192xf32>
    %156 = arith.mulf %147, %126 : vector<2x192xf32>
    %157 = arith.addf %155, %156 : vector<2x192xf32>
    %cst_36 = arith.constant dense<0.000000e+00> : vector<2x768xf32>
    %158 = tpu.matmul %157, %94, %cst_36 {dimension_numbers = #tpu.dot_dimension_numbers<[1], [0], [0], [1], [0, 0, 1, 1], [], []>} : vector<2x192xf32>, vector<192x768xf32>, vector<2x768xf32> -> vector<2x768xf32>
    %159 = vector.broadcast %88 : vector<1x768xf32> to vector<2x768xf32>
    %160 = arith.addf %158, %159 : vector<2x768xf32>
    %161 = vector.extract_strided_slice %93 {offsets = [2, 0, 0], sizes = [1, 2, 768], strides = [1, 1, 1]} : vector<3x2x768xf32> to vector<1x2x768xf32>
    %162 = vector.shape_cast %161 : vector<1x2x768xf32> to vector<2x768xf32>
    %163 = vector.extract_strided_slice %162 {offsets = [0, 0], sizes = [2, 192], strides = [1, 1]} : vector<2x768xf32> to vector<2x192xf32>
    %164 = vector.extract_strided_slice %160 {offsets = [0, 0], sizes = [2, 192], strides = [1, 1]} : vector<2x768xf32> to vector<2x192xf32>
    %165 = arith.addf %163, %164 : vector<2x192xf32>
    %166 = arith.negf %165 : vector<2x192xf32>
    %167 = math.exp %166 : vector<2x192xf32>
    %cst_37 = arith.constant 1.000000e+00 : f32
    %168 = vector.broadcast %cst_37 : f32 to vector<2x192xf32>
    %169 = arith.addf %168, %167 : vector<2x192xf32>
    %170 = arith.divf %168, %169 : vector<2x192xf32>
    %171 = vector.extract_strided_slice %162 {offsets = [0, 256], sizes = [2, 192], strides = [1, 1]} : vector<2x768xf32> to vector<2x192xf32>
    %172 = vector.extract_strided_slice %160 {offsets = [0, 256], sizes = [2, 192], strides = [1, 1]} : vector<2x768xf32> to vector<2x192xf32>
    %173 = arith.addf %171, %172 : vector<2x192xf32>
    %174 = arith.negf %173 : vector<2x192xf32>
    %175 = math.exp %174 : vector<2x192xf32>
    %cst_38 = arith.constant 1.000000e+00 : f32
    %176 = vector.broadcast %cst_38 : f32 to vector<2x192xf32>
    %177 = arith.addf %176, %175 : vector<2x192xf32>
    %178 = arith.divf %176, %177 : vector<2x192xf32>
    %179 = vector.extract_strided_slice %162 {offsets = [0, 512], sizes = [2, 192], strides = [1, 1]} : vector<2x768xf32> to vector<2x192xf32>
    %180 = vector.extract_strided_slice %160 {offsets = [0, 512], sizes = [2, 192], strides = [1, 1]} : vector<2x768xf32> to vector<2x192xf32>
    %181 = arith.mulf %170, %180 : vector<2x192xf32>
    %182 = arith.addf %179, %181 : vector<2x192xf32>
    %183 = math.tanh %182 : vector<2x192xf32>
    %cst_39 = arith.constant 1.000000e+00 : f32
    %184 = vector.broadcast %cst_39 : f32 to vector<2x192xf32>
    %185 = arith.subf %184, %178 : vector<2x192xf32>
    %186 = arith.mulf %185, %183 : vector<2x192xf32>
    %187 = arith.mulf %178, %157 : vector<2x192xf32>
    %188 = arith.addf %186, %187 : vector<2x192xf32>
    %c0_40 = arith.constant 0 : index
    %c0_41 = arith.constant 0 : index
    %189 = vector.load %arg6[%c0_40, %c0_41] : memref<192x64xf32, #tpu.memory_space<vmem>>, vector<192x64xf32>
    %cst_42 = arith.constant dense<0.000000e+00> : vector<2x64xf32>
    %190 = tpu.matmul %188, %189, %cst_42 {dimension_numbers = #tpu.dot_dimension_numbers<[1], [0], [0], [1], [0, 0, 1, 1], [], []>} : vector<2x192xf32>, vector<192x64xf32>, vector<2x64xf32> -> vector<2x64xf32>
    %191 = vector.extract_strided_slice %1 {offsets = [5, 0], sizes = [1, 64], strides = [1, 1]} : vector<8x768xf32> to vector<1x64xf32>
    %192 = vector.broadcast %191 : vector<1x64xf32> to vector<2x64xf32>
    %193 = arith.addf %190, %192 : vector<2x64xf32>
    %cst_43 = arith.constant 0.000000e+00 : f32
    %194 = vector.broadcast %cst_43 : f32 to vector<2x64xf32>
    %195 = arith.maximumf %193, %194 : vector<2x64xf32>
    %c0_44 = arith.constant 0 : index
    %c0_45 = arith.constant 0 : index
    %196 = vector.load %arg7[%c0_44, %c0_45] : memref<64x64xf32, #tpu.memory_space<vmem>>, vector<64x64xf32>
    %cst_46 = arith.constant dense<0.000000e+00> : vector<2x64xf32>
    %197 = tpu.matmul %195, %196, %cst_46 {dimension_numbers = #tpu.dot_dimension_numbers<[1], [0], [0], [1], [0, 0, 1, 1], [], []>} : vector<2x64xf32>, vector<64x64xf32>, vector<2x64xf32> -> vector<2x64xf32>
    %198 = vector.extract_strided_slice %1 {offsets = [6, 0], sizes = [1, 64], strides = [1, 1]} : vector<8x768xf32> to vector<1x64xf32>
    %199 = vector.broadcast %198 : vector<1x64xf32> to vector<2x64xf32>
    %200 = arith.addf %197, %199 : vector<2x64xf32>
    %cst_47 = arith.constant 0.000000e+00 : f32
    %201 = vector.broadcast %cst_47 : f32 to vector<2x64xf32>
    %202 = arith.maximumf %200, %201 : vector<2x64xf32>
    %c0_48 = arith.constant 0 : index
    %c0_49 = arith.constant 0 : index
    %203 = vector.load %arg8[%c0_48, %c0_49] : memref<64x128xf32, #tpu.memory_space<vmem>>, vector<64x128xf32>
    %cst_50 = arith.constant dense<0.000000e+00> : vector<2x128xf32>
    %204 = tpu.matmul %202, %203, %cst_50 {dimension_numbers = #tpu.dot_dimension_numbers<[1], [0], [0], [1], [0, 0, 1, 1], [], []>} : vector<2x64xf32>, vector<64x128xf32>, vector<2x128xf32> -> vector<2x128xf32>
    %205 = vector.extract_strided_slice %1 {offsets = [7, 0], sizes = [1, 128], strides = [1, 1]} : vector<8x768xf32> to vector<1x128xf32>
    %206 = vector.broadcast %205 : vector<1x128xf32> to vector<2x128xf32>
    %207 = arith.addf %204, %206 : vector<2x128xf32>
    %c0_51 = arith.constant 0 : index
    %c0_52 = arith.constant 0 : index
    %208 = vector.load %arg10[%c0_51, %c0_52] : memref<2x128xf32, #tpu.memory_space<vmem>>, vector<2x128xf32>
    tpu.vector_store %arg10[%c0_51, %c0_52], %207 {strides = array<i32>} : memref<2x128xf32, #tpu.memory_space<vmem>>, vector<2x128xf32>,
    return
  }
  func.func @transform_0(%arg0: i32) -> (i32, i32, i32) {
    %c0_i32 = arith.constant 0 : i32
    %c0_i32_0 = arith.constant 0 : i32
    %c0_i32_1 = arith.constant 0 : i32
    return %c0_i32, %arg0, %c0_i32_0 : i32, i32, i32
  }
  func.func @transform_1(%arg0: i32) -> (i32, i32, i32) {
    %c0_i32 = arith.constant 0 : i32
    %c0_i32_0 = arith.constant 0 : i32
    %c0_i32_1 = arith.constant 0 : i32
    %c0_i32_2 = arith.constant 0 : i32
    return %c0_i32, %c0_i32_0, %c0_i32_1 : i32, i32, i32
  }
  func.func @transform_2(%arg0: i32) -> (i32, i32, i32, i32) {
    %c0_i32 = arith.constant 0 : i32
    %c0_i32_0 = arith.constant 0 : i32
    %c0_i32_1 = arith.constant 0 : i32
    %c0_i32_2 = arith.constant 0 : i32
    %c0_i32_3 = arith.constant 0 : i32
    return %c0_i32, %c0_i32_0, %c0_i32_1, %c0_i32_2 : i32, i32, i32, i32
  }
  func.func @transform_3(%arg0: i32) -> (i32, i32) {
    %c0_i32 = arith.constant 0 : i32
    %c0_i32_0 = arith.constant 0 : i32
    %c0_i32_1 = arith.constant 0 : i32
    return %c0_i32, %c0_i32_0 : i32, i32
  }
  func.func @transform_4(%arg0: i32) -> (i32, i32) {
    %c0_i32 = arith.constant 0 : i32
    %c0_i32_0 = arith.constant 0 : i32
    %c0_i32_1 = arith.constant 0 : i32
    return %c0_i32, %c0_i32_0 : i32, i32
  }
  func.func @transform_5(%arg0: i32) -> (i32, i32) {
    %c0_i32 = arith.constant 0 : i32
    %c0_i32_0 = arith.constant 0 : i32
    %c0_i32_1 = arith.constant 0 : i32
    return %c0_i32, %c0_i32_0 : i32, i32
  }
  func.func @transform_6(%arg0: i32) -> (i32, i32) {
    %c0_i32 = arith.constant 0 : i32
    %c0_i32_0 = arith.constant 0 : i32
    %c0_i32_1 = arith.constant 0 : i32
    return %c0_i32, %c0_i32_0 : i32, i32
  }
  func.func @transform_7(%arg0: i32) -> (i32, i32) {
    %c0_i32 = arith.constant 0 : i32
    %c0_i32_0 = arith.constant 0 : i32
    %c0_i32_1 = arith.constant 0 : i32
    return %c0_i32, %c0_i32_0 : i32, i32
  }
  func.func @transform_8(%arg0: i32) -> (i32, i32) {
    %c0_i32 = arith.constant 0 : i32
    %c0_i32_0 = arith.constant 0 : i32
    %c0_i32_1 = arith.constant 0 : i32
    return %c0_i32, %c0_i32_0 : i32, i32
  }
  func.func @transform_9(%arg0: i32) -> (i32, i32) {
    %c0_i32 = arith.constant 0 : i32
    %c0_i32_0 = arith.constant 0 : i32
    return %arg0, %c0_i32 : i32, i32
  }
}

</mosaic_0001>

<llo_original>
// kernel: ehtask_forward.1
$region0: #{ehtask_forward.1}
  #allocation0 [shape = 'u32[]', space=smem, size = 0x4, offset = 0x4, fixed_abs, tag = 'smem constant byte address 0x4 - core index']
  #allocation1 [shape = 'u32[144,128]{1,0:T(1,128)}', space=vmem, size = 0x12000, scoped, tag = 'internal scratch']
  %s0 = inlined_call_operand.vmem [shape: f32[40,2,6], index: 0, kind: input, shape index: {}]
  %s1 = inlined_call_operand.vmem [shape: f32[3,6,48], index: 1, kind: input, shape index: {}]
  %s2 = inlined_call_operand.hbm [shape: f32[2,3,48,48], index: 2, kind: input, shape index: {}]
  %s3 = inlined_call_operand.hbm [shape: f32[48,768], index: 3, kind: input, shape index: {}]
  %s4 = inlined_call_operand.vmem [shape: f32[192,768], index: 4, kind: input, shape index: {}]
  %s5 = inlined_call_operand.vmem [shape: f32[192,64], index: 5, kind: input, shape index: {}]
  %s6 = inlined_call_operand.vmem [shape: f32[64,64], index: 6, kind: input, shape index: {}]
  %s7 = inlined_call_operand.vmem [shape: f32[64,128], index: 7, kind: input, shape index: {}]
  %s8 = inlined_call_operand.vmem [shape: f32[8,768], index: 8, kind: input, shape index: {}]
  %s9 = inlined_call_operand.hbm [shape: f32[2,128], index: 9, kind: output, shape index: {}]
  %s10 = sld [smem:[#allocation0]]
  $region54: #{ehtask_forward.1} parent=0
    _
  %s12 = ssub.s32 1, %s10
  %s13 = scalar_select 0, %s12, %s10
  $region1: #{ehtask_forward.1} parent=0
    #allocation2 [shape = 'u8[147456]{0}', space=vmem, size = 0x24000, scoped, tag = 'input window, operand 2, single buffered']
    #allocation3 [shape = 's32[1]{0}', space=sflag, size = 0x4, scoped, tag = 'scoped memory for ehtask_forward.1']
    #allocation4 [shape = 's32[1]{0}', space=sflag, size = 0x4, scoped, tag = 'scoped memory for ehtask_forward.1']
    #allocation5 [shape = 'u8[147456]{0}', space=vmem, size = 0x24000, scoped, tag = 'input window, operand 3, single buffered']
    #allocation6 [shape = 's32[1]{0}', space=sflag, size = 0x4, scoped, tag = 'scoped memory for ehtask_forward.1']
    #allocation7 [shape = 'u8[1024]{0}', space=vmem, size = 0x400, scoped, tag = 'output window, operand 0, single buffered']
    %14 = vsyncpa [#allocation3], 0
    %15 = vsyncpa [#allocation6], 0
    %16 = vsyncpa [#allocation4], 0
    // Predicated region
    $region2: #{ehtask_forward.1} parent=1 // pred_check
      _
    $region3: #{ehtask_forward.1} parent=1 // pred_check_branch
      %18 = sbr.rel (0) target = $region5
    $region4: #{ehtask_forward.1} parent=1 // pred_region
      _
    $region5: #{ehtask_forward.1} parent=1 // pred_fallthru
      _
    // Predicated region
    $region6: #{ehtask_forward.1} parent=1 // pred_check
      _
    $region7: #{ehtask_forward.1} parent=1 // pred_check_branch
      %20 = sbr.rel (0) target = $region9
    $region8: #{ehtask_forward.1} parent=1 // pred_region
      _
    $region9: #{ehtask_forward.1} parent=1 // pred_fallthru
      _
    // Predicated region
    $region10: #{ehtask_forward.1} parent=1 // pred_check
      _
    $region11: #{ehtask_forward.1} parent=1 // pred_check_branch
      %22 = sbr.rel (0) target = $region13
    $region12: #{ehtask_forward.1} parent=1 // pred_region
      %s24 = ssub.s32 4608, 4608
      %25 = vsyncadd [#allocation3], %s24
      %s26 = sshll.u32 [#allocation2], 4
      %s27 = int_to_ptr.vmem [resolvable:$true] %s26
      %32 = dma.hbm_to_vmem [thread:$0]  %s2, 4608, %s27, [#allocation3], 128, 128, 8
    $region13: #{ehtask_forward.1} parent=1 // pred_fallthru
      _
    // Predicated region
    $region14: #{ehtask_forward.1} parent=1 // pred_check
      _
    $region15: #{ehtask_forward.1} parent=1 // pred_check_branch
      %34 = sbr.rel (0) target = $region17
    $region16: #{ehtask_forward.1} parent=1 // pred_region
      %s36 = ssub.s32 4608, 4608
      %37 = vsyncadd [#allocation6], %s36
      %s38 = sshll.u32 [#allocation5], 4
      %s39 = int_to_ptr.vmem [resolvable:$true] %s38
      %44 = dma.hbm_to_vmem [thread:$0]  %s3, 4608, %s39, [#allocation6], 768, 768, 48
    $region17: #{ehtask_forward.1} parent=1 // pred_fallthru
      _
    // Predicated region
    $region18: #{ehtask_forward.1} parent=1 // pred_check
      _
    $region19: #{ehtask_forward.1} parent=1 // pred_check_branch
      %46 = sbr.rel (0) target = $region21
    $region20: #{ehtask_forward.1} parent=1 // pred_region
      _
    $region21: #{ehtask_forward.1} parent=1 // pred_fallthru
      _
    // Predicated region
    $region22: #{ehtask_forward.1} parent=1 // pred_check
      _
    $region23: #{ehtask_forward.1} parent=1 // pred_check_branch
      %48 = sbr.rel (0) target = $region25
    $region24: #{ehtask_forward.1} parent=1 // pred_region
      _
    $region25: #{ehtask_forward.1} parent=1 // pred_fallthru
      _
    // Predicated region
    $region26: #{ehtask_forward.1} parent=1 // pred_check
      _
    $region27: #{ehtask_forward.1} parent=1 // pred_check_branch
      %50 = sbr.rel (0) target = $region29
    $region28: #{ehtask_forward.1} parent=1 // pred_region
      _
    $region29: #{ehtask_forward.1} parent=1 // pred_fallthru
      _
    // Predicated region
    $region30: #{ehtask_forward.1} parent=1 // pred_check
      _
    $region31: #{ehtask_forward.1} parent=1 // pred_check_branch
      %52 = sbr.rel (0) target = $region33
    $region32: #{ehtask_forward.1} parent=1 // pred_region
      _
    $region33: #{ehtask_forward.1} parent=1 // pred_fallthru
      _
    // Predicated region
    $region34: #{ehtask_forward.1} parent=1 // pred_check
      _
    $region35: #{ehtask_forward.1} parent=1 // pred_check_branch
      %54 = sbr.rel (0) target = $region37
    $region36: #{ehtask_forward.1} parent=1 // pred_region
      _
    $region37: #{ehtask_forward.1} parent=1 // pred_fallthru
      _
    // Predicated region
    $region38: #{ehtask_forward.1} parent=1 // pred_check
      _
    $region39: #{ehtask_forward.1} parent=1 // pred_check_branch
      %56 = sbr.rel (0) target = $region41
    $region40: #{ehtask_forward.1} parent=1 // pred_region
      %57 = dma.done [#allocation3], 4608
    $region41: #{ehtask_forward.1} parent=1 // pred_fallthru
      _
    // Predicated region
    $region42: #{ehtask_forward.1} parent=1 // pred_check
      _
    $region43: #{ehtask_forward.1} parent=1 // pred_check_branch
      %59 = sbr.rel (0) target = $region45
    $region44: #{ehtask_forward.1} parent=1 // pred_region
      %60 = dma.done [#allocation6], 4608
    $region45: #{ehtask_forward.1} parent=1 // pred_fallthru
      _
    %v61 = vld [vmem:[%s0] sm:$0x3]
    %v62 = vld [vmem:[%s0 + $0x2] sm:$0x3]
    %v63 = vld [vmem:[%s0 + $0x4] sm:$0x3]
    %v64 = vld [vmem:[%s0 + $0x6] sm:$0x3]
    %v65 = vld [vmem:[%s0 + $0x8] sm:$0x3]
    %v66 = vld [vmem:[%s0 + $0xa] sm:$0x3]
    %v67 = vld [vmem:[%s0 + $0xc] sm:$0x3]
    %v68 = vld [vmem:[%s0 + $0xe] sm:$0x3]
    %v69 = vld [vmem:[%s0 + $0x10] sm:$0x3]
    %v70 = vld [vmem:[%s0 + $0x12] sm:$0x3]
    %v71 = vld [vmem:[%s0 + $0x14] sm:$0x3]
    %v72 = vld [vmem:[%s0 + $0x16] sm:$0x3]
    %v73 = vld [vmem:[%s0 + $0x18] sm:$0x3]
    %v74 = vld [vmem:[%s0 + $0x1a] sm:$0x3]
    %v75 = vld [vmem:[%s0 + $0x1c] sm:$0x3]
    %v76 = vld [vmem:[%s0 + $0x1e] sm:$0x3]
    %v77 = vld [vmem:[%s0 + $0x20] sm:$0x3]
    %v78 = vld [vmem:[%s0 + $0x22] sm:$0x3]
    %v79 = vld [vmem:[%s0 + $0x24] sm:$0x3]
    %v80 = vld [vmem:[%s0 + $0x26] sm:$0x3]
    %v81 = vld [vmem:[%s0 + $0x28] sm:$0x3]
    %v82 = vld [vmem:[%s0 + $0x2a] sm:$0x3]
    %v83 = vld [vmem:[%s0 + $0x2c] sm:$0x3]
    %v84 = vld [vmem:[%s0 + $0x2e] sm:$0x3]
    %v85 = vld [vmem:[%s0 + $0x30] sm:$0x3]
    %v86 = vld [vmem:[%s0 + $0x32] sm:$0x3]
    %v87 = vld [vmem:[%s0 + $0x34] sm:$0x3]
    %v88 = vld [vmem:[%s0 + $0x36] sm:$0x3]
    %v89 = vld [vmem:[%s0 + $0x38] sm:$0x3]
    %v90 = vld [vmem:[%s0 + $0x3a] sm:$0x3]
    %v91 = vld [vmem:[%s0 + $0x3c] sm:$0x3]
    %v92 = vld [vmem:[%s0 + $0x3e] sm:$0x3]
    %v93 = vld [vmem:[%s0 + $0x40] sm:$0x3]
    %v94 = vld [vmem:[%s0 + $0x42] sm:$0x3]
    %v95 = vld [vmem:[%s0 + $0x44] sm:$0x3]
    %v96 = vld [vmem:[%s0 + $0x46] sm:$0x3]
    %v97 = vld [vmem:[%s0 + $0x48] sm:$0x3]
    %v98 = vld [vmem:[%s0 + $0x4a] sm:$0x3]
    %v99 = vld [vmem:[%s0 + $0x4c] sm:$0x3]
    %v100 = vld [vmem:[%s0 + $0x4e] sm:$0x3]
    %v101 = vld [vmem:[%s8] sm:$0xff]
    %v102 = vld [vmem:[%s8 + $0x8] sm:$0xff]
    %v103 = vld [vmem:[%s8 + $0x10] sm:$0xff]
    %v104 = vld [vmem:[%s8 + $0x18] sm:$0xff]
    %v105 = vld [vmem:[%s8 + $0x20] sm:$0xff]
    %v106 = vld [vmem:[%s8 + $0x28] sm:$0xff]
    %v107 = vld [vmem:[#allocation2] sm:$0xff]
    %v108 = vld [vmem:[#allocation2 + $0x8] sm:$0xff]
    %v109 = vld [vmem:[#allocation2 + $0x10] sm:$0xff]
    %v110 = vld [vmem:[#allocation2 + $0x18] sm:$0xff]
    %v111 = vld [vmem:[#allocation2 + $0x20] sm:$0xff]
    %v112 = vld [vmem:[#allocation2 + $0x28] sm:$0xff]
    %v113 = vld [vmem:[#allocation2 + $0x30] sm:$0xff]
    %v114 = vld [vmem:[#allocation2 + $0x38] sm:$0xff]
    %v115 = vld [vmem:[#allocation2 + $0x40] sm:$0xff]
    %v116 = vld [vmem:[#allocation2 + $0x48] sm:$0xff]
    %v117 = vld [vmem:[#allocation2 + $0x50] sm:$0xff]
    %v118 = vld [vmem:[#allocation2 + $0x58] sm:$0xff]
    %v119 = vld [vmem:[#allocation2 + $0x60] sm:$0xff]
    %v120 = vld [vmem:[#allocation2 + $0x68] sm:$0xff]
    %v121 = vld [vmem:[#allocation2 + $0x70] sm:$0xff]
    %v122 = vld [vmem:[#allocation2 + $0x78] sm:$0xff]
    %v123 = vld [vmem:[#allocation2 + $0x80] sm:$0xff]
    %v124 = vld [vmem:[#allocation2 + $0x88] sm:$0xff]
    %v125 = vld [vmem:[#allocation2 + $0x90] sm:$0xff]
    %v126 = vld [vmem:[#allocation2 + $0x98] sm:$0xff]
    %v127 = vld [vmem:[#allocation2 + $0xa0] sm:$0xff]
    %v128 = vld [vmem:[#allocation2 + $0xa8] sm:$0xff]
    %v129 = vld [vmem:[#allocation2 + $0xb0] sm:$0xff]
    %v130 = vld [vmem:[#allocation2 + $0xb8] sm:$0xff]
    %v131 = vld [vmem:[#allocation2 + $0xc0] sm:$0xff]
    %v132 = vld [vmem:[#allocation2 + $0xc8] sm:$0xff]
    %v133 = vld [vmem:[#allocation2 + $0xd0] sm:$0xff]
    %v134 = vld [vmem:[#allocation2 + $0xd8] sm:$0xff]
    %v135 = vld [vmem:[#allocation2 + $0xe0] sm:$0xff]
    %v136 = vld [vmem:[#allocation2 + $0xe8] sm:$0xff]
    %v137 = vld [vmem:[#allocation2 + $0xf0] sm:$0xff]
    %v138 = vld [vmem:[#allocation2 + $0xf8] sm:$0xff]
    %v139 = vld [vmem:[#allocation2 + $0x100] sm:$0xff]
    %v140 = vld [vmem:[#allocation2 + $0x108] sm:$0xff]
    %v141 = vld [vmem:[#allocation2 + $0x110] sm:$0xff]
    %v142 = vld [vmem:[#allocation2 + $0x118] sm:$0xff]
    %v143 = vld [vmem:[%s1] sm:$0x3f]
    %v144 = vld [vmem:[%s1 + $0x8] sm:$0x3f]
    %v145 = vld [vmem:[%s1 + $0x10] sm:$0x3f]
    %v184 = vcombine.low %v62, %v63
    %v185 = vcombine.low %v64, %v65
    %v187 = vunpack.c.l.s4 1983009808
    %v188 = vunpack.c.0.s8 %v187
    %v189 = vlaneseq
    %v190 = vshrl.u32 %v189, 7
    %v191 = vsub.s32 %v188, %v190
    %v192 = vrot.slane %v184, %v191
    %v194 = vunpack.c.l.s4 1983009808
    %v195 = vunpack.c.0.s8 %v194
    %v196 = vlaneseq
    %v197 = vshrl.u32 %v196, 7
    %v198 = vsub.s32 %v195, %v197
    %v199 = vrot.slane %v185, %v198
    %v200 = vcombine.low %v192, %v199
    %v201 = vcombine.low %v66, %v67
    %v202 = vcombine.low %v68, %v69
    %v204 = vunpack.c.l.s4 1983009808
    %v205 = vunpack.c.0.s8 %v204
    %v206 = vlaneseq
    %v207 = vshrl.u32 %v206, 7
    %v208 = vsub.s32 %v205, %v207
    %v209 = vrot.slane %v201, %v208
    %v211 = vunpack.c.l.s4 1983009808
    %v212 = vunpack.c.0.s8 %v211
    %v213 = vlaneseq
    %v214 = vshrl.u32 %v213, 7
    %v215 = vsub.s32 %v212, %v214
    %v216 = vrot.slane %v202, %v215
    %v217 = vcombine.low %v209, %v216
    %v218 = vcombine.low %v70, %v71
    %v219 = vcombine.low %v72, %v73
    %v221 = vunpack.c.l.s4 1983009808
    %v222 = vunpack.c.0.s8 %v221
    %v223 = vlaneseq
    %v224 = vshrl.u32 %v223, 7
    %v225 = vsub.s32 %v222, %v224
    %v226 = vrot.slane %v218, %v225
    %v228 = vunpack.c.l.s4 1983009808
    %v229 = vunpack.c.0.s8 %v228
    %v230 = vlaneseq
    %v231 = vshrl.u32 %v230, 7
    %v232 = vsub.s32 %v229, %v231
    %v233 = vrot.slane %v219, %v232
    %v234 = vcombine.low %v226, %v233
    %v235 = vcombine.low %v74, %v75
    %v236 = vcombine.low %v76, %v77
    %v238 = vunpack.c.l.s4 1983009808
    %v239 = vunpack.c.0.s8 %v238
    %v240 = vlaneseq
    %v241 = vshrl.u32 %v240, 7
    %v242 = vsub.s32 %v239, %v241
    %v243 = vrot.slane %v235, %v242
    %v245 = vunpack.c.l.s4 1983009808
    %v246 = vunpack.c.0.s8 %v245
    %v247 = vlaneseq
    %v248 = vshrl.u32 %v247, 7
    %v249 = vsub.s32 %v246, %v248
    %v250 = vrot.slane %v236, %v249
    %v251 = vcombine.low %v243, %v250
    %v252 = vcombine.low %v78, %v79
    %v253 = vcombine.low %v80, %v81
    %v255 = vunpack.c.l.s4 1983009808
    %v256 = vunpack.c.0.s8 %v255
    %v257 = vlaneseq
    %v258 = vshrl.u32 %v257, 7
    %v259 = vsub.s32 %v256, %v258
    %v260 = vrot.slane %v252, %v259
    %v262 = vunpack.c.l.s4 1983009808
    %v263 = vunpack.c.0.s8 %v262
    %v264 = vlaneseq
    %v265 = vshrl.u32 %v264, 7
    %v266 = vsub.s32 %v263, %v265
    %v267 = vrot.slane %v253, %v266
    %v268 = vcombine.low %v260, %v267
    %v269 = vcombine.low %v82, %v83
    %v270 = vcombine.low %v84, %v85
    %v272 = vunpack.c.l.s4 1983009808
    %v273 = vunpack.c.0.s8 %v272
    %v274 = vlaneseq
    %v275 = vshrl.u32 %v274, 7
    %v276 = vsub.s32 %v273, %v275
    %v277 = vrot.slane %v269, %v276
    %v279 = vunpack.c.l.s4 1983009808
    %v280 = vunpack.c.0.s8 %v279
    %v281 = vlaneseq
    %v282 = vshrl.u32 %v281, 7
    %v283 = vsub.s32 %v280, %v282
    %v284 = vrot.slane %v270, %v283
    %v285 = vcombine.low %v277, %v284
    %v286 = vcombine.low %v86, %v87
    %v287 = vcombine.low %v88, %v89
    %v289 = vunpack.c.l.s4 1983009808
    %v290 = vunpack.c.0.s8 %v289
    %v291 = vlaneseq
    %v292 = vshrl.u32 %v291, 7
    %v293 = vsub.s32 %v290, %v292
    %v294 = vrot.slane %v286, %v293
    %v296 = vunpack.c.l.s4 1983009808
    %v297 = vunpack.c.0.s8 %v296
    %v298 = vlaneseq
    %v299 = vshrl.u32 %v298, 7
    %v300 = vsub.s32 %v297, %v299
    %v301 = vrot.slane %v287, %v300
    %v302 = vcombine.low %v294, %v301
    %v303 = vcombine.low %v90, %v91
    %v304 = vcombine.low %v92, %v93
    %v306 = vunpack.c.l.s4 1983009808
    %v307 = vunpack.c.0.s8 %v306
    %v308 = vlaneseq
    %v309 = vshrl.u32 %v308, 7
    %v310 = vsub.s32 %v307, %v309
    %v311 = vrot.slane %v303, %v310
    %v313 = vunpack.c.l.s4 1983009808
    %v314 = vunpack.c.0.s8 %v313
    %v315 = vlaneseq
    %v316 = vshrl.u32 %v315, 7
    %v317 = vsub.s32 %v314, %v316
    %v318 = vrot.slane %v304, %v317
    %v319 = vcombine.low %v311, %v318
    %v320 = vcombine.low %v94, %v95
    %v321 = vcombine.low %v96, %v97
    %v323 = vunpack.c.l.s4 1983009808
    %v324 = vunpack.c.0.s8 %v323
    %v325 = vlaneseq
    %v326 = vshrl.u32 %v325, 7
    %v327 = vsub.s32 %v324, %v326
    %v328 = vrot.slane %v320, %v327
    %v330 = vunpack.c.l.s4 1983009808
    %v331 = vunpack.c.0.s8 %v330
    %v332 = vlaneseq
    %v333 = vshrl.u32 %v332, 7
    %v334 = vsub.s32 %v331, %v333
    %v335 = vrot.slane %v321, %v334
    %v336 = vcombine.low %v328, %v335
    %v337 = vcombine.low %v98, %v99
    %v339 = vunpack.c.l.s4 1983009808
    %v340 = vunpack.c.0.s8 %v339
    %v341 = vlaneseq
    %v342 = vshrl.u32 %v341, 7
    %v343 = vsub.s32 %v340, %v342
    %v344 = vrot.slane %v337, %v343
    %vm345 = vcmask 48128
    %v346 = vsel %vm345, %v200, 0
    %v348 = vsel %vm345, %v217, 0
    %v350 = vsel %vm345, %v234, 0
    %v352 = vsel %vm345, %v251, 0
    %v354 = vsel %vm345, %v268, 0
    %v356 = vsel %vm345, %v285, 0
    %v358 = vsel %vm345, %v302, 0
    %v360 = vsel %vm345, %v319, 0
    %v362 = vsel %vm345, %v336, 0
    %v364 = vsel %vm345, %v344, 0
    %vm366 = vcmask 1045504
    %v368 = vsel %vm366, %v144, 0
    %370 = vmatprep.subr.mxu0 0.0
    %371 = vmatpush1.msra.mxu0 %v368
    %372 = vmatprep.subr.mxu0 0.0
    %373 = vmatpush1.msra.mxu0 0.0
    %374 = vmatprep.subr.mxu0 0.0
    %375 = vmatpush1.msra.mxu0 0.0
    %376 = vmatprep.subr.mxu0 0.0
    %377 = vmatpush1.msra.mxu0 0.0
    %378 = vmatprep.subr.mxu0 0.0
    %379 = vmatpush1.msra.mxu0 0.0
    %380 = vmatprep.subr.mxu0 0.0
    %381 = vmatpush1.msra.mxu0 0.0
    %382 = vmatprep.subr.mxu0 0.0
    %383 = vmatpush1.msra.mxu0 0.0
    %384 = vmatprep.subr.mxu0 0.0
    %385 = vmatpush1.msra.mxu0 0.0
    %386 = vmatprep.subr.mxu0 0.0
    %387 = vmatpush1.msra.mxu0 0.0
    %388 = vmatprep.subr.mxu0 0.0
    %389 = vmatpush1.msra.mxu0 0.0
    %390 = vmatprep.subr.mxu0 0.0
    %391 = vmatpush1.msra.mxu0 0.0
    %392 = vmatprep.subr.mxu0 0.0
    %393 = vmatpush1.msra.mxu0 0.0
    %394 = vmatprep.subr.mxu0 0.0
    %395 = vmatpush1.msra.mxu0 0.0
    %396 = vmatprep.subr.mxu0 0.0
    %397 = vmatpush1.msra.mxu0 0.0
    %398 = vmatprep.subr.mxu0 0.0
    %399 = vmatpush1.msra.mxu0 0.0
    %400 = vmatprep.subr.mxu0 0.0
    %401 = vmatpush1.msra.mxu0 0.0
    %402 = vmatprep.subr.mxu0 0.0
    %403 = vmatpush1.msra.mxu0 0.0
    %404 = vmatprep.subr.mxu0 0.0
    %405 = vmatpush1.msra.mxu0 0.0
    %406 = vmatprep.subr.mxu0 0.0
    %407 = vmatpush1.msra.mxu0 0.0
    %408 = vmatprep.subr.mxu0 0.0
    %409 = vmatpush1.msra.mxu0 0.0
    %410 = vmatprep.subr.mxu0 0.0
    %411 = vmatpush1.msra.mxu0 0.0
    %412 = vmatprep.subr.mxu0 0.0
    %413 = vmatpush1.msra.mxu0 0.0
    %414 = vmatprep.subr.mxu0 0.0
    %415 = vmatpush1.msra.mxu0 0.0
    %416 = vmatprep.subr.mxu0 0.0
    %417 = vmatpush1.msra.mxu0 0.0
    %418 = vmatprep.subr.mxu0 0.0
    %419 = vmatpush1.msra.mxu0 0.0
    %420 = vmatprep.subr.mxu0 0.0
    %421 = vmatpush1.msra.mxu0 0.0
    %422 = vmatprep.subr.mxu0 0.0
    %423 = vmatpush1.msra.mxu0 0.0
    %424 = vmatprep.subr.mxu0 0.0
    %425 = vmatpush1.msra.mxu0 0.0
    %426 = vmatprep.subr.mxu0 0.0
    %427 = vmatpush1.msra.mxu0 0.0
    %428 = vmatprep.subr.mxu0 0.0
    %429 = vmatpush1.msra.mxu0 0.0
    %430 = vmatprep.subr.mxu0 0.0
    %431 = vmatpush1.msra.mxu0 0.0
    %432 = vmatprep.subr.mxu0 0.0
    %433 = vmatpush1.msra.mxu0 0.0
    %434 = vmatprep.mubr.f32.mxu0 0.0
    %435 = vmatmul.mubr.f32.gmra.mrb[0].mxu0 %v346
    %v436 = vpop.f32.mrb[0].mxu0
    %v437 = vadd.f32 0.0, %v436
    %v438 = vpop.f32.mrb[0].mxu0
    %439 = vmatprep.mubr.f32.mxu0 0.0
    %440 = vmatmul.mubr.f32.gmra.mrb[0].mxu0 %v348
    %v441 = vpop.f32.mrb[0].mxu0
    %v442 = vadd.f32 0.0, %v441
    %v443 = vpop.f32.mrb[0].mxu0
    %444 = vmatprep.mubr.f32.mxu0 0.0
    %445 = vmatmul.mubr.f32.gmra.mrb[0].mxu0 %v350
    %v446 = vpop.f32.mrb[0].mxu0
    %v447 = vadd.f32 0.0, %v446
    %v448 = vpop.f32.mrb[0].mxu0
    %449 = vmatprep.mubr.f32.mxu0 0.0
    %450 = vmatmul.mubr.f32.gmra.mrb[0].mxu0 %v352
    %v451 = vpop.f32.mrb[0].mxu0
    %v452 = vadd.f32 0.0, %v451
    %v453 = vpop.f32.mrb[0].mxu0
    %454 = vmatprep.mubr.f32.mxu0 0.0
    %455 = vmatmul.mubr.f32.gmra.mrb[0].mxu0 %v354
    %v456 = vpop.f32.mrb[0].mxu0
    %v457 = vadd.f32 0.0, %v456
    %v458 = vpop.f32.mrb[0].mxu0
    %459 = vmatprep.mubr.f32.mxu0 0.0
    %460 = vmatmul.mubr.f32.gmra.mrb[0].mxu0 %v356
    %v461 = vpop.f32.mrb[0].mxu0
    %v462 = vadd.f32 0.0, %v461
    %v463 = vpop.f32.mrb[0].mxu0
    %464 = vmatprep.mubr.f32.mxu0 0.0
    %465 = vmatmul.mubr.f32.gmra.mrb[0].mxu0 %v358
    %v466 = vpop.f32.mrb[0].mxu0
    %v467 = vadd.f32 0.0, %v466
    %v468 = vpop.f32.mrb[0].mxu0
    %469 = vmatprep.mubr.f32.mxu0 0.0
    %470 = vmatmul.mubr.f32.gmra.mrb[0].mxu0 %v360
    %v471 = vpop.f32.mrb[0].mxu0
    %v472 = vadd.f32 0.0, %v471
    %v473 = vpop.f32.mrb[0].mxu0
    %474 = vmatprep.mubr.f32.mxu0 0.0
    %475 = vmatmul.mubr.f32.gmra.mrb[0].mxu0 %v362
    %v476 = vpop.f32.mrb[0].mxu0
    %v477 = vadd.f32 0.0, %v476
    %v478 = vpop.f32.mrb[0].mxu0
    %479 = vmatprep.mubr.f32.mxu0 0.0
    %480 = vmatmul.mubr.f32.gmra.mrb[0].mxu0 %v364
    %v481 = vpop.f32.mrb[0].mxu0
    %v482 = vadd.f32 0.0, %v481
    %v483 = vpop.f32.mrb[0].mxu0
    %484 = vdwg.mxu0
    %v486 = vcombine.low %v61, %v62
    %v487 = vcombine.low %v63, %v64
    %v489 = vunpack.c.l.s4 1983009808
    %v490 = vunpack.c.0.s8 %v489
    %v491 = vlaneseq
    %v492 = vshrl.u32 %v491, 7
    %v493 = vsub.s32 %v490, %v492
    %v494 = vrot.slane %v486, %v493
    %v496 = vunpack.c.l.s4 1983009808
    %v497 = vunpack.c.0.s8 %v496
    %v498 = vlaneseq
    %v499 = vshrl.u32 %v498, 7
    %v500 = vsub.s32 %v497, %v499
    %v501 = vrot.slane %v487, %v500
    %v502 = vcombine.low %v494, %v501
    %v503 = vcombine.low %v65, %v66
    %v504 = vcombine.low %v67, %v68
    %v506 = vunpack.c.l.s4 1983009808
    %v507 = vunpack.c.0.s8 %v506
    %v508 = vlaneseq
    %v509 = vshrl.u32 %v508, 7
    %v510 = vsub.s32 %v507, %v509
    %v511 = vrot.slane %v503, %v510
    %v513 = vunpack.c.l.s4 1983009808
    %v514 = vunpack.c.0.s8 %v513
    %v515 = vlaneseq
    %v516 = vshrl.u32 %v515, 7
    %v517 = vsub.s32 %v514, %v516
    %v518 = vrot.slane %v504, %v517
    %v519 = vcombine.low %v511, %v518
    %v520 = vcombine.low %v69, %v70
    %v521 = vcombine.low %v71, %v72
    %v523 = vunpack.c.l.s4 1983009808
    %v524 = vunpack.c.0.s8 %v523
    %v525 = vlaneseq
    %v526 = vshrl.u32 %v525, 7
    %v527 = vsub.s32 %v524, %v526
    %v528 = vrot.slane %v520, %v527
    %v530 = vunpack.c.l.s4 1983009808
    %v531 = vunpack.c.0.s8 %v530
    %v532 = vlaneseq
    %v533 = vshrl.u32 %v532, 7
    %v534 = vsub.s32 %v531, %v533
    %v535 = vrot.slane %v521, %v534
    %v536 = vcombine.low %v528, %v535
    %v537 = vcombine.low %v73, %v74
    %v538 = vcombine.low %v75, %v76
    %v540 = vunpack.c.l.s4 1983009808
    %v541 = vunpack.c.0.s8 %v540
    %v542 = vlaneseq
    %v543 = vshrl.u32 %v542, 7
    %v544 = vsub.s32 %v541, %v543
    %v545 = vrot.slane %v537, %v544
    %v547 = vunpack.c.l.s4 1983009808
    %v548 = vunpack.c.0.s8 %v547
    %v549 = vlaneseq
    %v550 = vshrl.u32 %v549, 7
    %v551 = vsub.s32 %v548, %v550
    %v552 = vrot.slane %v538, %v551
    %v553 = vcombine.low %v545, %v552
    %v554 = vcombine.low %v77, %v78
    %v555 = vcombine.low %v79, %v80
    %v557 = vunpack.c.l.s4 1983009808
    %v558 = vunpack.c.0.s8 %v557
    %v559 = vlaneseq
    %v560 = vshrl.u32 %v559, 7
    %v561 = vsub.s32 %v558, %v560
    %v562 = vrot.slane %v554, %v561
    %v564 = vunpack.c.l.s4 1983009808
    %v565 = vunpack.c.0.s8 %v564
    %v566 = vlaneseq
    %v567 = vshrl.u32 %v566, 7
    %v568 = vsub.s32 %v565, %v567
    %v569 = vrot.slane %v555, %v568
    %v570 = vcombine.low %v562, %v569
    %v571 = vcombine.low %v81, %v82
    %v572 = vcombine.low %v83, %v84
    %v574 = vunpack.c.l.s4 1983009808
    %v575 = vunpack.c.0.s8 %v574
    %v576 = vlaneseq
    %v577 = vshrl.u32 %v576, 7
    %v578 = vsub.s32 %v575, %v577
    %v579 = vrot.slane %v571, %v578
    %v581 = vunpack.c.l.s4 1983009808
    %v582 = vunpack.c.0.s8 %v581
    %v583 = vlaneseq
    %v584 = vshrl.u32 %v583, 7
    %v585 = vsub.s32 %v582, %v584
    %v586 = vrot.slane %v572, %v585
    %v587 = vcombine.low %v579, %v586
    %v588 = vcombine.low %v85, %v86
    %v589 = vcombine.low %v87, %v88
    %v591 = vunpack.c.l.s4 1983009808
    %v592 = vunpack.c.0.s8 %v591
    %v593 = vlaneseq
    %v594 = vshrl.u32 %v593, 7
    %v595 = vsub.s32 %v592, %v594
    %v596 = vrot.slane %v588, %v595
    %v598 = vunpack.c.l.s4 1983009808
    %v599 = vunpack.c.0.s8 %v598
    %v600 = vlaneseq
    %v601 = vshrl.u32 %v600, 7
    %v602 = vsub.s32 %v599, %v601
    %v603 = vrot.slane %v589, %v602
    %v604 = vcombine.low %v596, %v603
    %v605 = vcombine.low %v89, %v90
    %v606 = vcombine.low %v91, %v92
    %v608 = vunpack.c.l.s4 1983009808
    %v609 = vunpack.c.0.s8 %v608
    %v610 = vlaneseq
    %v611 = vshrl.u32 %v610, 7
    %v612 = vsub.s32 %v609, %v611
    %v613 = vrot.slane %v605, %v612
    %v615 = vunpack.c.l.s4 1983009808
    %v616 = vunpack.c.0.s8 %v615
    %v617 = vlaneseq
    %v618 = vshrl.u32 %v617, 7
    %v619 = vsub.s32 %v616, %v618
    %v620 = vrot.slane %v606, %v619
    %v621 = vcombine.low %v613, %v620
    %v622 = vcombine.low %v93, %v94
    %v623 = vcombine.low %v95, %v96
    %v625 = vunpack.c.l.s4 1983009808
    %v626 = vunpack.c.0.s8 %v625
    %v627 = vlaneseq
    %v628 = vshrl.u32 %v627, 7
    %v629 = vsub.s32 %v626, %v628
    %v630 = vrot.slane %v622, %v629
    %v632 = vunpack.c.l.s4 1983009808
    %v633 = vunpack.c.0.s8 %v632
    %v634 = vlaneseq
    %v635 = vshrl.u32 %v634, 7
    %v636 = vsub.s32 %v633, %v635
    %v637 = vrot.slane %v623, %v636
    %v638 = vcombine.low %v630, %v637
    %v639 = vcombine.low %v97, %v98
    %v641 = vunpack.c.l.s4 1983009808
    %v642 = vunpack.c.0.s8 %v641
    %v643 = vlaneseq
    %v644 = vshrl.u32 %v643, 7
    %v645 = vsub.s32 %v642, %v644
    %v646 = vrot.slane %v639, %v645
    %v647 = vsel %vm345, %v502, 0
    %v649 = vsel %vm345, %v519, 0
    %v651 = vsel %vm345, %v536, 0
    %v653 = vsel %vm345, %v553, 0
    %v655 = vsel %vm345, %v570, 0
    %v657 = vsel %vm345, %v587, 0
    %v659 = vsel %vm345, %v604, 0
    %v661 = vsel %vm345, %v621, 0
    %v663 = vsel %vm345, %v638, 0
    %v665 = vsel %vm345, %v646, 0
    %v668 = vsel %vm366, %v143, 0
    %670 = vmatprep.subr.mxu0 0.0
    %671 = vmatpush1.msra.mxu0 %v668
    %672 = vmatprep.subr.mxu0 0.0
    %673 = vmatpush1.msra.mxu0 0.0
    %674 = vmatprep.subr.mxu0 0.0
    %675 = vmatpush1.msra.mxu0 0.0
    %676 = vmatprep.subr.mxu0 0.0
    %677 = vmatpush1.msra.mxu0 0.0
    %678 = vmatprep.subr.mxu0 0.0
    %679 = vmatpush1.msra.mxu0 0.0
    %680 = vmatprep.subr.mxu0 0.0
    %681 = vmatpush1.msra.mxu0 0.0
    %682 = vmatprep.subr.mxu0 0.0
    %683 = vmatpush1.msra.mxu0 0.0
    %684 = vmatprep.subr.mxu0 0.0
    %685 = vmatpush1.msra.mxu0 0.0
    %686 = vmatprep.subr.mxu0 0.0
    %687 = vmatpush1.msra.mxu0 0.0
    %688 = vmatprep.subr.mxu0 0.0
    %689 = vmatpush1.msra.mxu0 0.0
    %690 = vmatprep.subr.mxu0 0.0
    %691 = vmatpush1.msra.mxu0 0.0
    %692 = vmatprep.subr.mxu0 0.0
    %693 = vmatpush1.msra.mxu0 0.0
    %694 = vmatprep.subr.mxu0 0.0
    %695 = vmatpush1.msra.mxu0 0.0
    %696 = vmatprep.subr.mxu0 0.0
    %697 = vmatpush1.msra.mxu0 0.0
    %698 = vmatprep.subr.mxu0 0.0
    %699 = vmatpush1.msra.mxu0 0.0
    %700 = vmatprep.subr.mxu0 0.0
    %701 = vmatpush1.msra.mxu0 0.0
    %702 = vmatprep.subr.mxu0 0.0
    %703 = vmatpush1.msra.mxu0 0.0
    %704 = vmatprep.subr.mxu0 0.0
    %705 = vmatpush1.msra.mxu0 0.0
    %706 = vmatprep.subr.mxu0 0.0
    %707 = vmatpush1.msra.mxu0 0.0
    %708 = vmatprep.subr.mxu0 0.0
    %709 = vmatpush1.msra.mxu0 0.0
    %710 = vmatprep.subr.mxu0 0.0
    %711 = vmatpush1.msra.mxu0 0.0
    %712 = vmatprep.subr.mxu0 0.0
    %713 = vmatpush1.msra.mxu0 0.0
    %714 = vmatprep.subr.mxu0 0.0
    %715 = vmatpush1.msra.mxu0 0.0
    %716 = vmatprep.subr.mxu0 0.0
    %717 = vmatpush1.msra.mxu0 0.0
    %718 = vmatprep.subr.mxu0 0.0
    %719 = vmatpush1.msra.mxu0 0.0
    %720 = vmatprep.subr.mxu0 0.0
    %721 = vmatpush1.msra.mxu0 0.0
    %722 = vmatprep.subr.mxu0 0.0
    %723 = vmatpush1.msra.mxu0 0.0
    %724 = vmatprep.subr.mxu0 0.0
    %725 = vmatpush1.msra.mxu0 0.0
    %726 = vmatprep.subr.mxu0 0.0
    %727 = vmatpush1.msra.mxu0 0.0
    %728 = vmatprep.subr.mxu0 0.0
    %729 = vmatpush1.msra.mxu0 0.0
    %730 = vmatprep.subr.mxu0 0.0
    %731 = vmatpush1.msra.mxu0 0.0
    %732 = vmatprep.subr.mxu0 0.0
    %733 = vmatpush1.msra.mxu0 0.0
    %734 = vmatprep.mubr.f32.mxu0 0.0
    %735 = vmatmul.mubr.f32.gmra.mrb[0].mxu0 %v647
    %v736 = vpop.f32.mrb[0].mxu0
    %v737 = vadd.f32 %v437, %v736
    %v738 = vpop.f32.mrb[0].mxu0
    %739 = vmatprep.mubr.f32.mxu0 0.0
    %740 = vmatmul.mubr.f32.gmra.mrb[0].mxu0 %v649
    %v741 = vpop.f32.mrb[0].mxu0
    %v742 = vadd.f32 %v442, %v741
    %v743 = vpop.f32.mrb[0].mxu0
    %744 = vmatprep.mubr.f32.mxu0 0.0
    %745 = vmatmul.mubr.f32.gmra.mrb[0].mxu0 %v651
    %v746 = vpop.f32.mrb[0].mxu0
    %v747 = vadd.f32 %v447, %v746
    %v748 = vpop.f32.mrb[0].mxu0
    %749 = vmatprep.mubr.f32.mxu0 0.0
    %750 = vmatmul.mubr.f32.gmra.mrb[0].mxu0 %v653
    %v751 = vpop.f32.mrb[0].mxu0
    %v752 = vadd.f32 %v452, %v751
    %v753 = vpop.f32.mrb[0].mxu0
    %754 = vmatprep.mubr.f32.mxu0 0.0
    %755 = vmatmul.mubr.f32.gmra.mrb[0].mxu0 %v655
    %v756 = vpop.f32.mrb[0].mxu0
    %v757 = vadd.f32 %v457, %v756
    %v758 = vpop.f32.mrb[0].mxu0
    %759 = vmatprep.mubr.f32.mxu0 0.0
    %760 = vmatmul.mubr.f32.gmra.mrb[0].mxu0 %v657
    %v761 = vpop.f32.mrb[0].mxu0
    %v762 = vadd.f32 %v462, %v761
    %v763 = vpop.f32.mrb[0].mxu0
    %764 = vmatprep.mubr.f32.mxu0 0.0
    %765 = vmatmul.mubr.f32.gmra.mrb[0].mxu0 %v659
    %v766 = vpop.f32.mrb[0].mxu0
    %v767 = vadd.f32 %v467, %v766
    %v768 = vpop.f32.mrb[0].mxu0
    %769 = vmatprep.mubr.f32.mxu0 0.0
    %770 = vmatmul.mubr.f32.gmra.mrb[0].mxu0 %v661
    %v771 = vpop.f32.mrb[0].mxu0
    %v772 = vadd.f32 %v472, %v771
    %v773 = vpop.f32.mrb[0].mxu0
    %774 = vmatprep.mubr.f32.mxu0 0.0
    %775 = vmatmul.mubr.f32.gmra.mrb[0].mxu0 %v663
    %v776 = vpop.f32.mrb[0].mxu0
    %v777 = vadd.f32 %v477, %v776
    %v778 = vpop.f32.mrb[0].mxu0
    %779 = vmatprep.mubr.f32.mxu0 0.0
    %780 = vmatmul.mubr.f32.gmra.mrb[0].mxu0 %v665
    %v781 = vpop.f32.mrb[0].mxu0
    %v782 = vadd.f32 %v482, %v781
    %v783 = vpop.f32.mrb[0].mxu0
    %784 = vdwg.mxu0
    %v795 = vcombine.high %v737, %v737
    %v797 = vunpack.c.l.s4 1983009808
    %v798 = vunpack.c.0.s8 %v797
    %v799 = vlaneseq
    %v800 = vshrl.u32 %v799, 7
    %v801 = vsub.s32 %v798, %v800
    %v802 = vrot.slane %v737, %v801
    %v804 = vunpack.c.l.s4 1983009808
    %v805 = vunpack.c.0.s8 %v804
    %v806 = vlaneseq
    %v807 = vshrl.u32 %v806, 7
    %v808 = vsub.s32 %v805, %v807
    %v809 = vrot.slane %v795, %v808
    %v810 = vcombine.high %v802, %v802
    %v811 = vcombine.high %v809, %v809
    %v812 = vcombine.high %v742, %v742
    %v814 = vunpack.c.l.s4 1983009808
    %v815 = vunpack.c.0.s8 %v814
    %v816 = vlaneseq
    %v817 = vshrl.u32 %v816, 7
    %v818 = vsub.s32 %v815, %v817
    %v819 = vrot.slane %v742, %v818
    %v821 = vunpack.c.l.s4 1983009808
    %v822 = vunpack.c.0.s8 %v821
    %v823 = vlaneseq
    %v824 = vshrl.u32 %v823, 7
    %v825 = vsub.s32 %v822, %v824
    %v826 = vrot.slane %v812, %v825
    %v827 = vcombine.high %v819, %v819
    %v828 = vcombine.high %v826, %v826
    %v829 = vcombine.high %v747, %v747
    %v831 = vunpack.c.l.s4 1983009808
    %v832 = vunpack.c.0.s8 %v831
    %v833 = vlaneseq
    %v834 = vshrl.u32 %v833, 7
    %v835 = vsub.s32 %v832, %v834
    %v836 = vrot.slane %v747, %v835
    %v838 = vunpack.c.l.s4 1983009808
    %v839 = vunpack.c.0.s8 %v838
    %v840 = vlaneseq
    %v841 = vshrl.u32 %v840, 7
    %v842 = vsub.s32 %v839, %v841
    %v843 = vrot.slane %v829, %v842
    %v844 = vcombine.high %v836, %v836
    %v845 = vcombine.high %v843, %v843
    %v846 = vcombine.high %v752, %v752
    %v848 = vunpack.c.l.s4 1983009808
    %v849 = vunpack.c.0.s8 %v848
    %v850 = vlaneseq
    %v851 = vshrl.u32 %v850, 7
    %v852 = vsub.s32 %v849, %v851
    %v853 = vrot.slane %v752, %v852
    %v855 = vunpack.c.l.s4 1983009808
    %v856 = vunpack.c.0.s8 %v855
    %v857 = vlaneseq
    %v858 = vshrl.u32 %v857, 7
    %v859 = vsub.s32 %v856, %v858
    %v860 = vrot.slane %v846, %v859
    %v861 = vcombine.high %v853, %v853
    %v862 = vcombine.high %v860, %v860
    %v863 = vcombine.high %v757, %v757
    %v865 = vunpack.c.l.s4 1983009808
    %v866 = vunpack.c.0.s8 %v865
    %v867 = vlaneseq
    %v868 = vshrl.u32 %v867, 7
    %v869 = vsub.s32 %v866, %v868
    %v870 = vrot.slane %v757, %v869
    %v872 = vunpack.c.l.s4 1983009808
    %v873 = vunpack.c.0.s8 %v872
    %v874 = vlaneseq
    %v875 = vshrl.u32 %v874, 7
    %v876 = vsub.s32 %v873, %v875
    %v877 = vrot.slane %v863, %v876
    %v878 = vcombine.high %v870, %v870
    %v879 = vcombine.high %v877, %v877
    %v880 = vcombine.high %v762, %v762
    %v882 = vunpack.c.l.s4 1983009808
    %v883 = vunpack.c.0.s8 %v882
    %v884 = vlaneseq
    %v885 = vshrl.u32 %v884, 7
    %v886 = vsub.s32 %v883, %v885
    %v887 = vrot.slane %v762, %v886
    %v889 = vunpack.c.l.s4 1983009808
    %v890 = vunpack.c.0.s8 %v889
    %v891 = vlaneseq
    %v892 = vshrl.u32 %v891, 7
    %v893 = vsub.s32 %v890, %v892
    %v894 = vrot.slane %v880, %v893
    %v895 = vcombine.high %v887, %v887
    %v896 = vcombine.high %v894, %v894
    %v897 = vcombine.high %v767, %v767
    %v899 = vunpack.c.l.s4 1983009808
    %v900 = vunpack.c.0.s8 %v899
    %v901 = vlaneseq
    %v902 = vshrl.u32 %v901, 7
    %v903 = vsub.s32 %v900, %v902
    %v904 = vrot.slane %v767, %v903
    %v906 = vunpack.c.l.s4 1983009808
    %v907 = vunpack.c.0.s8 %v906
    %v908 = vlaneseq
    %v909 = vshrl.u32 %v908, 7
    %v910 = vsub.s32 %v907, %v909
    %v911 = vrot.slane %v897, %v910
    %v912 = vcombine.high %v904, %v904
    %v913 = vcombine.high %v911, %v911
    %v914 = vcombine.high %v772, %v772
    %v916 = vunpack.c.l.s4 1983009808
    %v917 = vunpack.c.0.s8 %v916
    %v918 = vlaneseq
    %v919 = vshrl.u32 %v918, 7
    %v920 = vsub.s32 %v917, %v919
    %v921 = vrot.slane %v772, %v920
    %v923 = vunpack.c.l.s4 1983009808
    %v924 = vunpack.c.0.s8 %v923
    %v925 = vlaneseq
    %v926 = vshrl.u32 %v925, 7
    %v927 = vsub.s32 %v924, %v926
    %v928 = vrot.slane %v914, %v927
    %v929 = vcombine.high %v921, %v921
    %v930 = vcombine.high %v928, %v928
    %v931 = vcombine.high %v777, %v777
    %v933 = vunpack.c.l.s4 1983009808
    %v934 = vunpack.c.0.s8 %v933
    %v935 = vlaneseq
    %v936 = vshrl.u32 %v935, 7
    %v937 = vsub.s32 %v934, %v936
    %v938 = vrot.slane %v777, %v937
    %v940 = vunpack.c.l.s4 1983009808
    %v941 = vunpack.c.0.s8 %v940
    %v942 = vlaneseq
    %v943 = vshrl.u32 %v942, 7
    %v944 = vsub.s32 %v941, %v943
    %v945 = vrot.slane %v931, %v944
    %v946 = vcombine.high %v938, %v938
    %v947 = vcombine.high %v945, %v945
    %v949 = vunpack.c.l.s4 1983009808
    %v950 = vunpack.c.0.s8 %v949
    %v951 = vlaneseq
    %v952 = vshrl.u32 %v951, 7
    %v953 = vsub.s32 %v950, %v952
    %v954 = vrot.slane %v782, %v953
    %v955 = vcombine.high %v954, %v954
    %v995 = vcombine.low %v501, %v511
    %v996 = vcombine.low %v518, %v528
    %v997 = vcombine.low %v535, %v545
    %v998 = vcombine.low %v552, %v562
    %v999 = vcombine.low %v569, %v579
    %v1000 = vcombine.low %v586, %v596
    %v1001 = vcombine.low %v603, %v613
    %v1002 = vcombine.low %v620, %v630
    %v1003 = vcombine.low %v637, %v646
    %v1004 = vcombine.low %v99, %v100
    %v1006 = vunpack.c.l.s4 1983009808
    %v1007 = vunpack.c.0.s8 %v1006
    %v1008 = vlaneseq
    %v1009 = vshrl.u32 %v1008, 7
    %v1010 = vsub.s32 %v1007, %v1009
    %v1011 = vrot.slane %v1004, %v1010
    %v1012 = vsel %vm345, %v995, 0
    %v1014 = vsel %vm345, %v996, 0
    %v1016 = vsel %vm345, %v997, 0
    %v1018 = vsel %vm345, %v998, 0
    %v1020 = vsel %vm345, %v999, 0
    %v1022 = vsel %vm345, %v1000, 0
    %v1024 = vsel %vm345, %v1001, 0
    %v1026 = vsel %vm345, %v1002, 0
    %v1028 = vsel %vm345, %v1003, 0
    %v1030 = vsel %vm345, %v1011, 0
    %v1033 = vsel %vm366, %v145, 0
    %1035 = vmatprep.subr.mxu0 0.0
    %1036 = vmatpush1.msra.mxu0 %v1033
    %1037 = vmatprep.subr.mxu0 0.0
    %1038 = vmatpush1.msra.mxu0 0.0
    %1039 = vmatprep.subr.mxu0 0.0
    %1040 = vmatpush1.msra.mxu0 0.0
    %1041 = vmatprep.subr.mxu0 0.0
    %1042 = vmatpush1.msra.mxu0 0.0
    %1043 = vmatprep.subr.mxu0 0.0
    %1044 = vmatpush1.msra.mxu0 0.0
    %1045 = vmatprep.subr.mxu0 0.0
    %1046 = vmatpush1.msra.mxu0 0.0
    %1047 = vmatprep.subr.mxu0 0.0
    %1048 = vmatpush1.msra.mxu0 0.0
    %1049 = vmatprep.subr.mxu0 0.0
    %1050 = vmatpush1.msra.mxu0 0.0
    %1051 = vmatprep.subr.mxu0 0.0
    %1052 = vmatpush1.msra.mxu0 0.0
    %1053 = vmatprep.subr.mxu0 0.0
    %1054 = vmatpush1.msra.mxu0 0.0
    %1055 = vmatprep.subr.mxu0 0.0
    %1056 = vmatpush1.msra.mxu0 0.0
    %1057 = vmatprep.subr.mxu0 0.0
    %1058 = vmatpush1.msra.mxu0 0.0
    %1059 = vmatprep.subr.mxu0 0.0
    %1060 = vmatpush1.msra.mxu0 0.0
    %1061 = vmatprep.subr.mxu0 0.0
    %1062 = vmatpush1.msra.mxu0 0.0
    %1063 = vmatprep.subr.mxu0 0.0
    %1064 = vmatpush1.msra.mxu0 0.0
    %1065 = vmatprep.subr.mxu0 0.0
    %1066 = vmatpush1.msra.mxu0 0.0
    %1067 = vmatprep.subr.mxu0 0.0
    %1068 = vmatpush1.msra.mxu0 0.0
    %1069 = vmatprep.subr.mxu0 0.0
    %1070 = vmatpush1.msra.mxu0 0.0
    %1071 = vmatprep.subr.mxu0 0.0
    %1072 = vmatpush1.msra.mxu0 0.0
    %1073 = vmatprep.subr.mxu0 0.0
    %1074 = vmatpush1.msra.mxu0 0.0
    %1075 = vmatprep.subr.mxu0 0.0
    %1076 = vmatpush1.msra.mxu0 0.0
    %1077 = vmatprep.subr.mxu0 0.0
    %1078 = vmatpush1.msra.mxu0 0.0
    %1079 = vmatprep.subr.mxu0 0.0
    %1080 = vmatpush1.msra.mxu0 0.0
    %1081 = vmatprep.subr.mxu0 0.0
    %1082 = vmatpush1.msra.mxu0 0.0
    %1083 = vmatprep.subr.mxu0 0.0
    %1084 = vmatpush1.msra.mxu0 0.0
    %1085 = vmatprep.subr.mxu0 0.0
    %1086 = vmatpush1.msra.mxu0 0.0
    %1087 = vmatprep.subr.mxu0 0.0
    %1088 = vmatpush1.msra.mxu0 0.0
    %1089 = vmatprep.subr.mxu0 0.0
    %1090 = vmatpush1.msra.mxu0 0.0
    %1091 = vmatprep.subr.mxu0 0.0
    %1092 = vmatpush1.msra.mxu0 0.0
    %1093 = vmatprep.subr.mxu0 0.0
    %1094 = vmatpush1.msra.mxu0 0.0
    %1095 = vmatprep.subr.mxu0 0.0
    %1096 = vmatpush1.msra.mxu0 0.0
    %1097 = vmatprep.subr.mxu0 0.0
    %1098 = vmatpush1.msra.mxu0 0.0
    %1099 = vmatprep.mubr.f32.mxu0 0.0
    %1100 = vmatmul.mubr.f32.gmra.mrb[0].mxu0 %v1012
    %v1101 = vpop.f32.mrb[0].mxu0
    %v1102 = vadd.f32 0.0, %v1101
    %v1103 = vpop.f32.mrb[0].mxu0
    %1104 = vmatprep.mubr.f32.mxu0 0.0
    %1105 = vmatmul.mubr.f32.gmra.mrb[0].mxu0 %v1014
    %v1106 = vpop.f32.mrb[0].mxu0
    %v1107 = vadd.f32 0.0, %v1106
    %v1108 = vpop.f32.mrb[0].mxu0
    %1109 = vmatprep.mubr.f32.mxu0 0.0
    %1110 = vmatmul.mubr.f32.gmra.mrb[0].mxu0 %v1016
    %v1111 = vpop.f32.mrb[0].mxu0
    %v1112 = vadd.f32 0.0, %v1111
    %v1113 = vpop.f32.mrb[0].mxu0
    %1114 = vmatprep.mubr.f32.mxu0 0.0
    %1115 = vmatmul.mubr.f32.gmra.mrb[0].mxu0 %v1018
    %v1116 = vpop.f32.mrb[0].mxu0
    %v1117 = vadd.f32 0.0, %v1116
    %v1118 = vpop.f32.mrb[0].mxu0
    %1119 = vmatprep.mubr.f32.mxu0 0.0
    %1120 = vmatmul.mubr.f32.gmra.mrb[0].mxu0 %v1020
    %v1121 = vpop.f32.mrb[0].mxu0
    %v1122 = vadd.f32 0.0, %v1121
    %v1123 = vpop.f32.mrb[0].mxu0
    %1124 = vmatprep.mubr.f32.mxu0 0.0
    %1125 = vmatmul.mubr.f32.gmra.mrb[0].mxu0 %v1022
    %v1126 = vpop.f32.mrb[0].mxu0
    %v1127 = vadd.f32 0.0, %v1126
    %v1128 = vpop.f32.mrb[0].mxu0
    %1129 = vmatprep.mubr.f32.mxu0 0.0
    %1130 = vmatmul.mubr.f32.gmra.mrb[0].mxu0 %v1024
    %v1131 = vpop.f32.mrb[0].mxu0
    %v1132 = vadd.f32 0.0, %v1131
    %v1133 = vpop.f32.mrb[0].mxu0
    %1134 = vmatprep.mubr.f32.mxu0 0.0
    %1135 = vmatmul.mubr.f32.gmra.mrb[0].mxu0 %v1026
    %v1136 = vpop.f32.mrb[0].mxu0
    %v1137 = vadd.f32 0.0, %v1136
    %v1138 = vpop.f32.mrb[0].mxu0
    %1139 = vmatprep.mubr.f32.mxu0 0.0
    %1140 = vmatmul.mubr.f32.gmra.mrb[0].mxu0 %v1028
    %v1141 = vpop.f32.mrb[0].mxu0
    %v1142 = vadd.f32 0.0, %v1141
    %v1143 = vpop.f32.mrb[0].mxu0
    %1144 = vmatprep.mubr.f32.mxu0 0.0
    %1145 = vmatmul.mubr.f32.gmra.mrb[0].mxu0 %v1030
    %v1146 = vpop.f32.mrb[0].mxu0
    %v1147 = vadd.f32 0.0, %v1146
    %v1148 = vpop.f32.mrb[0].mxu0
    %1149 = vdwg.mxu0
    %v1160 = vcombine.high %v1102, %v1102
    %v1162 = vunpack.c.l.s4 1983009808
    %v1163 = vunpack.c.0.s8 %v1162
    %v1164 = vlaneseq
    %v1165 = vshrl.u32 %v1164, 7
    %v1166 = vsub.s32 %v1163, %v1165
    %v1167 = vrot.slane %v1102, %v1166
    %v1169 = vunpack.c.l.s4 1983009808
    %v1170 = vunpack.c.0.s8 %v1169
    %v1171 = vlaneseq
    %v1172 = vshrl.u32 %v1171, 7
    %v1173 = vsub.s32 %v1170, %v1172
    %v1174 = vrot.slane %v1160, %v1173
    %v1175 = vcombine.high %v1167, %v1167
    %v1176 = vcombine.high %v1174, %v1174
    %v1177 = vcombine.high %v1107, %v1107
    %v1179 = vunpack.c.l.s4 1983009808
    %v1180 = vunpack.c.0.s8 %v1179
    %v1181 = vlaneseq
    %v1182 = vshrl.u32 %v1181, 7
    %v1183 = vsub.s32 %v1180, %v1182
    %v1184 = vrot.slane %v1107, %v1183
    %v1186 = vunpack.c.l.s4 1983009808
    %v1187 = vunpack.c.0.s8 %v1186
    %v1188 = vlaneseq
    %v1189 = vshrl.u32 %v1188, 7
    %v1190 = vsub.s32 %v1187, %v1189
    %v1191 = vrot.slane %v1177, %v1190
    %v1192 = vcombine.high %v1184, %v1184
    %v1193 = vcombine.high %v1191, %v1191
    %v1194 = vcombine.high %v1112, %v1112
    %v1196 = vunpack.c.l.s4 1983009808
    %v1197 = vunpack.c.0.s8 %v1196
    %v1198 = vlaneseq
    %v1199 = vshrl.u32 %v1198, 7
    %v1200 = vsub.s32 %v1197, %v1199
    %v1201 = vrot.slane %v1112, %v1200
    %v1203 = vunpack.c.l.s4 1983009808
    %v1204 = vunpack.c.0.s8 %v1203
    %v1205 = vlaneseq
    %v1206 = vshrl.u32 %v1205, 7
    %v1207 = vsub.s32 %v1204, %v1206
    %v1208 = vrot.slane %v1194, %v1207
    %v1209 = vcombine.high %v1201, %v1201
    %v1210 = vcombine.high %v1208, %v1208
    %v1211 = vcombine.high %v1117, %v1117
    %v1213 = vunpack.c.l.s4 1983009808
    %v1214 = vunpack.c.0.s8 %v1213
    %v1215 = vlaneseq
    %v1216 = vshrl.u32 %v1215, 7
    %v1217 = vsub.s32 %v1214, %v1216
    %v1218 = vrot.slane %v1117, %v1217
    %v1220 = vunpack.c.l.s4 1983009808
    %v1221 = vunpack.c.0.s8 %v1220
    %v1222 = vlaneseq
    %v1223 = vshrl.u32 %v1222, 7
    %v1224 = vsub.s32 %v1221, %v1223
    %v1225 = vrot.slane %v1211, %v1224
    %v1226 = vcombine.high %v1218, %v1218
    %v1227 = vcombine.high %v1225, %v1225
    %v1228 = vcombine.high %v1122, %v1122
    %v1230 = vunpack.c.l.s4 1983009808
    %v1231 = vunpack.c.0.s8 %v1230
    %v1232 = vlaneseq
    %v1233 = vshrl.u32 %v1232, 7
    %v1234 = vsub.s32 %v1231, %v1233
    %v1235 = vrot.slane %v1122, %v1234
    %v1237 = vunpack.c.l.s4 1983009808
    %v1238 = vunpack.c.0.s8 %v1237
    %v1239 = vlaneseq
    %v1240 = vshrl.u32 %v1239, 7
    %v1241 = vsub.s32 %v1238, %v1240
    %v1242 = vrot.slane %v1228, %v1241
    %v1243 = vcombine.high %v1235, %v1235
    %v1244 = vcombine.high %v1242, %v1242
    %v1245 = vcombine.high %v1127, %v1127
    %v1247 = vunpack.c.l.s4 1983009808
    %v1248 = vunpack.c.0.s8 %v1247
    %v1249 = vlaneseq
    %v1250 = vshrl.u32 %v1249, 7
    %v1251 = vsub.s32 %v1248, %v1250
    %v1252 = vrot.slane %v1127, %v1251
    %v1254 = vunpack.c.l.s4 1983009808
    %v1255 = vunpack.c.0.s8 %v1254
    %v1256 = vlaneseq
    %v1257 = vshrl.u32 %v1256, 7
    %v1258 = vsub.s32 %v1255, %v1257
    %v1259 = vrot.slane %v1245, %v1258
    %v1260 = vcombine.high %v1252, %v1252
    %v1261 = vcombine.high %v1259, %v1259
    %v1262 = vcombine.high %v1132, %v1132
    %v1264 = vunpack.c.l.s4 1983009808
    %v1265 = vunpack.c.0.s8 %v1264
    %v1266 = vlaneseq
    %v1267 = vshrl.u32 %v1266, 7
    %v1268 = vsub.s32 %v1265, %v1267
    %v1269 = vrot.slane %v1132, %v1268
    %v1271 = vunpack.c.l.s4 1983009808
    %v1272 = vunpack.c.0.s8 %v1271
    %v1273 = vlaneseq
    %v1274 = vshrl.u32 %v1273, 7
    %v1275 = vsub.s32 %v1272, %v1274
    %v1276 = vrot.slane %v1262, %v1275
    %v1277 = vcombine.high %v1269, %v1269
    %v1278 = vcombine.high %v1276, %v1276
    %v1279 = vcombine.high %v1137, %v1137
    %v1281 = vunpack.c.l.s4 1983009808
    %v1282 = vunpack.c.0.s8 %v1281
    %v1283 = vlaneseq
    %v1284 = vshrl.u32 %v1283, 7
    %v1285 = vsub.s32 %v1282, %v1284
    %v1286 = vrot.slane %v1137, %v1285
    %v1288 = vunpack.c.l.s4 1983009808
    %v1289 = vunpack.c.0.s8 %v1288
    %v1290 = vlaneseq
    %v1291 = vshrl.u32 %v1290, 7
    %v1292 = vsub.s32 %v1289, %v1291
    %v1293 = vrot.slane %v1279, %v1292
    %v1294 = vcombine.high %v1286, %v1286
    %v1295 = vcombine.high %v1293, %v1293
    %v1296 = vcombine.high %v1142, %v1142
    %v1298 = vunpack.c.l.s4 1983009808
    %v1299 = vunpack.c.0.s8 %v1298
    %v1300 = vlaneseq
    %v1301 = vshrl.u32 %v1300, 7
    %v1302 = vsub.s32 %v1299, %v1301
    %v1303 = vrot.slane %v1142, %v1302
    %v1305 = vunpack.c.l.s4 1983009808
    %v1306 = vunpack.c.0.s8 %v1305
    %v1307 = vlaneseq
    %v1308 = vshrl.u32 %v1307, 7
    %v1309 = vsub.s32 %v1306, %v1308
    %v1310 = vrot.slane %v1296, %v1309
    %v1311 = vcombine.high %v1303, %v1303
    %v1312 = vcombine.high %v1310, %v1310
    %v1314 = vunpack.c.l.s4 1983009808
    %v1315 = vunpack.c.0.s8 %v1314
    %v1316 = vlaneseq
    %v1317 = vshrl.u32 %v1316, 7
    %v1318 = vsub.s32 %v1315, %v1317
    %v1319 = vrot.slane %v1147, %v1318
    %v1320 = vcombine.high %v1319, %v1319
    %v1359 = vadd.f32 %v802, %v1167
    %v1360 = vadd.f32 %v810, %v1175
    %v1361 = vadd.f32 %v809, %v1174
    %v1362 = vadd.f32 %v811, %v1176
    %v1363 = vadd.f32 %v819, %v1184
    %v1364 = vadd.f32 %v827, %v1192
    %v1365 = vadd.f32 %v826, %v1191
    %v1366 = vadd.f32 %v828, %v1193
    %v1367 = vadd.f32 %v836, %v1201
    %v1368 = vadd.f32 %v844, %v1209
    %v1369 = vadd.f32 %v843, %v1208
    %v1370 = vadd.f32 %v845, %v1210
    %v1371 = vadd.f32 %v853, %v1218
    %v1372 = vadd.f32 %v861, %v1226
    %v1373 = vadd.f32 %v860, %v1225
    %v1374 = vadd.f32 %v862, %v1227
    %v1375 = vadd.f32 %v870, %v1235
    %v1376 = vadd.f32 %v878, %v1243
    %v1377 = vadd.f32 %v877, %v1242
    %v1378 = vadd.f32 %v879, %v1244
    %v1379 = vadd.f32 %v887, %v1252
    %v1380 = vadd.f32 %v895, %v1260
    %v1381 = vadd.f32 %v894, %v1259
    %v1382 = vadd.f32 %v896, %v1261
    %v1383 = vadd.f32 %v904, %v1269
    %v1384 = vadd.f32 %v912, %v1277
    %v1385 = vadd.f32 %v911, %v1276
    %v1386 = vadd.f32 %v913, %v1278
    %v1387 = vadd.f32 %v921, %v1286
    %v1388 = vadd.f32 %v929, %v1294
    %v1389 = vadd.f32 %v928, %v1293
    %v1390 = vadd.f32 %v930, %v1295
    %v1391 = vadd.f32 %v938, %v1303
    %v1392 = vadd.f32 %v946, %v1311
    %v1393 = vadd.f32 %v945, %v1310
    %v1394 = vadd.f32 %v947, %v1312
    %v1395 = vadd.f32 %v954, %v1319
    %v1396 = vadd.f32 %v955, %v1320
    %v1397 = vlaneseq
    %v1398 = vshrl.u32 %v1397, 7
    %v1399 = vsub.s32 0, %v1398
    %v1400 = vrot.slane %v101, %v1399
    %v1401 = vadd.f32 %v1359, %v1400
    %v1402 = vadd.f32 %v1360, %v1400
    %v1403 = vadd.f32 %v1361, %v1400
    %v1404 = vadd.f32 %v1362, %v1400
    %v1405 = vadd.f32 %v1363, %v1400
    %v1406 = vadd.f32 %v1364, %v1400
    %v1407 = vadd.f32 %v1365, %v1400
    %v1408 = vadd.f32 %v1366, %v1400
    %v1409 = vadd.f32 %v1367, %v1400
    %v1410 = vadd.f32 %v1368, %v1400
    %v1411 = vadd.f32 %v1369, %v1400
    %v1412 = vadd.f32 %v1370, %v1400
    %v1413 = vadd.f32 %v1371, %v1400
    %v1414 = vadd.f32 %v1372, %v1400
    %v1415 = vadd.f32 %v1373, %v1400
    %v1416 = vadd.f32 %v1374, %v1400
    %v1417 = vadd.f32 %v1375, %v1400
    %v1418 = vadd.f32 %v1376, %v1400
    %v1419 = vadd.f32 %v1377, %v1400
    %v1420 = vadd.f32 %v1378, %v1400
    %v1421 = vadd.f32 %v1379, %v1400
    %v1422 = vadd.f32 %v1380, %v1400
    %v1423 = vadd.f32 %v1381, %v1400
    %v1424 = vadd.f32 %v1382, %v1400
    %v1425 = vadd.f32 %v1383, %v1400
    %v1426 = vadd.f32 %v1384, %v1400
    %v1427 = vadd.f32 %v1385, %v1400
    %v1428 = vadd.f32 %v1386, %v1400
    %v1429 = vadd.f32 %v1387, %v1400
    %v1430 = vadd.f32 %v1388, %v1400
    %v1431 = vadd.f32 %v1389, %v1400
    %v1432 = vadd.f32 %v1390, %v1400
    %v1433 = vadd.f32 %v1391, %v1400
    %v1434 = vadd.f32 %v1392, %v1400
    %v1435 = vadd.f32 %v1393, %v1400
    %v1436 = vadd.f32 %v1394, %v1400
    %v1437 = vadd.f32 %v1395, %v1400
    %v1438 = vadd.f32 %v1396, %v1400
    %v1439 = vmax.f32 %v1401, 0.0
    %v1440 = vmax.f32 %v1402, 0.0
    %v1441 = vmax.f32 %v1403, 0.0
    %v1442 = vmax.f32 %v1404, 0.0
    %v1443 = vmax.f32 %v1405, 0.0
    %v1444 = vmax.f32 %v1406, 0.0
    %v1445 = vmax.f32 %v1407, 0.0
    %v1446 = vmax.f32 %v1408, 0.0
    %v1447 = vmax.f32 %v1409, 0.0
    %v1448 = vmax.f32 %v1410, 0.0
    %v1449 = vmax.f32 %v1411, 0.0
    %v1450 = vmax.f32 %v1412, 0.0
    %v1451 = vmax.f32 %v1413, 0.0
    %v1452 = vmax.f32 %v1414, 0.0
    %v1453 = vmax.f32 %v1415, 0.0
    %v1454 = vmax.f32 %v1416, 0.0
    %v1455 = vmax.f32 %v1417, 0.0
    %v1456 = vmax.f32 %v1418, 0.0
    %v1457 = vmax.f32 %v1419, 0.0
    %v1458 = vmax.f32 %v1420, 0.0
    %v1459 = vmax.f32 %v1421, 0.0
    %v1460 = vmax.f32 %v1422, 0.0
    %v1461 = vmax.f32 %v1423, 0.0
    %v1462 = vmax.f32 %v1424, 0.0
    %v1463 = vmax.f32 %v1425, 0.0
    %v1464 = vmax.f32 %v1426, 0.0
    %v1465 = vmax.f32 %v1427, 0.0
    %v1466 = vmax.f32 %v1428, 0.0
    %v1467 = vmax.f32 %v1429, 0.0
    %v1468 = vmax.f32 %v1430, 0.0
    %v1469 = vmax.f32 %v1431, 0.0
    %v1470 = vmax.f32 %v1432, 0.0
    %v1471 = vmax.f32 %v1433, 0.0
    %v1472 = vmax.f32 %v1434, 0.0
    %v1473 = vmax.f32 %v1435, 0.0
    %v1474 = vmax.f32 %v1436, 0.0
    %v1475 = vmax.f32 %v1437, 0.0
    %v1476 = vmax.f32 %v1438, 0.0
    %v1477 = vmax.f32 %v1439, %v1440
    %v1478 = vmax.f32 %v1441, %v1442
    %v1479 = vmax.f32 %v1443, %v1444
    %v1480 = vmax.f32 %v1445, %v1446
    %v1481 = vmax.f32 %v1447, %v1448
    %v1482 = vmax.f32 %v1449, %v1450
    %v1483 = vmax.f32 %v1451, %v1452
    %v1484 = vmax.f32 %v1453, %v1454
    %v1485 = vmax.f32 %v1455, %v1456
    %v1486 = vmax.f32 %v1457, %v1458
    %v1487 = vmax.f32 %v1459, %v1460
    %v1488 = vmax.f32 %v1461, %v1462
    %v1489 = vmax.f32 %v1463, %v1464
    %v1490 = vmax.f32 %v1465, %v1466
    %v1491 = vmax.f32 %v1467, %v1468
    %v1492 = vmax.f32 %v1469, %v1470
    %v1493 = vmax.f32 %v1471, %v1472
    %v1494 = vmax.f32 %v1473, %v1474
    %v1495 = vmax.f32 %v1475, %v1476
    %v1513 = vcombine.low %v1478, %v1479
    %v1514 = vcombine.low %v1480, %v1481
    %v1516 = vunpack.c.l.s4 1983009808
    %v1517 = vunpack.c.0.s8 %v1516
    %v1518 = vlaneseq
    %v1519 = vshrl.u32 %v1518, 7
    %v1520 = vsub.s32 %v1517, %v1519
    %v1521 = vrot.slane %v1513, %v1520
    %v1523 = vunpack.c.l.s4 1983009808
    %v1524 = vunpack.c.0.s8 %v1523
    %v1525 = vlaneseq
    %v1526 = vshrl.u32 %v1525, 7
    %v1527 = vsub.s32 %v1524, %v1526
    %v1528 = vrot.slane %v1514, %v1527
    %v1529 = vcombine.low %v1521, %v1528
    %v1530 = vcombine.low %v1482, %v1483
    %v1531 = vcombine.low %v1484, %v1485
    %v1533 = vunpack.c.l.s4 1983009808
    %v1534 = vunpack.c.0.s8 %v1533
    %v1535 = vlaneseq
    %v1536 = vshrl.u32 %v1535, 7
    %v1537 = vsub.s32 %v1534, %v1536
    %v1538 = vrot.slane %v1530, %v1537
    %v1540 = vunpack.c.l.s4 1983009808
    %v1541 = vunpack.c.0.s8 %v1540
    %v1542 = vlaneseq
    %v1543 = vshrl.u32 %v1542, 7
    %v1544 = vsub.s32 %v1541, %v1543
    %v1545 = vrot.slane %v1531, %v1544
    %v1546 = vcombine.low %v1538, %v1545
    %v1547 = vcombine.low %v1486, %v1487
    %v1548 = vcombine.low %v1488, %v1489
    %v1550 = vunpack.c.l.s4 1983009808
    %v1551 = vunpack.c.0.s8 %v1550
    %v1552 = vlaneseq
    %v1553 = vshrl.u32 %v1552, 7
    %v1554 = vsub.s32 %v1551, %v1553
    %v1555 = vrot.slane %v1547, %v1554
    %v1557 = vunpack.c.l.s4 1983009808
    %v1558 = vunpack.c.0.s8 %v1557
    %v1559 = vlaneseq
    %v1560 = vshrl.u32 %v1559, 7
    %v1561 = vsub.s32 %v1558, %v1560
    %v1562 = vrot.slane %v1548, %v1561
    %v1563 = vcombine.low %v1555, %v1562
    %v1564 = vcombine.low %v1490, %v1491
    %v1565 = vcombine.low %v1492, %v1493
    %v1567 = vunpack.c.l.s4 1983009808
    %v1568 = vunpack.c.0.s8 %v1567
    %v1569 = vlaneseq
    %v1570 = vshrl.u32 %v1569, 7
    %v1571 = vsub.s32 %v1568, %v1570
    %v1572 = vrot.slane %v1564, %v1571
    %v1574 = vunpack.c.l.s4 1983009808
    %v1575 = vunpack.c.0.s8 %v1574
    %v1576 = vlaneseq
    %v1577 = vshrl.u32 %v1576, 7
    %v1578 = vsub.s32 %v1575, %v1577
    %v1579 = vrot.slane %v1565, %v1578
    %v1580 = vcombine.low %v1572, %v1579
    %v1582 = vunpack.c.l.s4 1983009808
    %v1583 = vunpack.c.0.s8 %v1582
    %v1584 = vlaneseq
    %v1585 = vshrl.u32 %v1584, 7
    %v1586 = vsub.s32 %v1583, %v1585
    %v1587 = vrot.slane %v1494, %v1586
    %vm1588 = vcmask 392192
    %v1589 = vsel %vm1588, %v1529, 0
    %v1591 = vsel %vm1588, %v1546, 0
    %v1593 = vsel %vm1588, %v1563, 0
    %v1595 = vsel %vm1588, %v1580, 0
    %v1597 = vsel %vm1588, %v1587, 0
    %1599 = vmatprep.subr.mxu0 0.0
    %1600 = vmatpush1.msra.mxu0 %v113
    %1601 = vmatprep.subr.mxu0 0.0
    %1602 = vmatpush1.msra.mxu0 %v114
    %1603 = vmatprep.subr.mxu0 0.0
    %1604 = vmatpush1.msra.mxu0 %v115
    %1605 = vmatprep.subr.mxu0 0.0
    %1606 = vmatpush1.msra.mxu0 %v116
    %1607 = vmatprep.subr.mxu0 0.0
    %1608 = vmatpush1.msra.mxu0 %v117
    %1609 = vmatprep.subr.mxu0 0.0
    %1610 = vmatpush1.msra.mxu0 %v118
    %1611 = vmatprep.subr.mxu0 0.0
    %1612 = vmatpush1.msra.mxu0 0.0
    %1613 = vmatprep.subr.mxu0 0.0
    %1614 = vmatpush1.msra.mxu0 0.0
    %1615 = vmatprep.subr.mxu0 0.0
    %1616 = vmatpush1.msra.mxu0 0.0
    %1617 = vmatprep.subr.mxu0 0.0
    %1618 = vmatpush1.msra.mxu0 0.0
    %1619 = vmatprep.subr.mxu0 0.0
    %1620 = vmatpush1.msra.mxu0 0.0
    %1621 = vmatprep.subr.mxu0 0.0
    %1622 = vmatpush1.msra.mxu0 0.0
    %1623 = vmatprep.subr.mxu0 0.0
    %1624 = vmatpush1.msra.mxu0 0.0
    %1625 = vmatprep.subr.mxu0 0.0
    %1626 = vmatpush1.msra.mxu0 0.0
    %1627 = vmatprep.subr.mxu0 0.0
    %1628 = vmatpush1.msra.mxu0 0.0
    %1629 = vmatprep.subr.mxu0 0.0
    %1630 = vmatpush1.msra.mxu0 0.0
    %1631 = vmatprep.subr.mxu0 0.0
    %1632 = vmatpush1.msra.mxu0 0.0
    %1633 = vmatprep.subr.mxu0 0.0
    %1634 = vmatpush1.msra.mxu0 0.0
    %1635 = vmatprep.subr.mxu0 0.0
    %1636 = vmatpush1.msra.mxu0 0.0
    %1637 = vmatprep.subr.mxu0 0.0
    %1638 = vmatpush1.msra.mxu0 0.0
    %1639 = vmatprep.subr.mxu0 0.0
    %1640 = vmatpush1.msra.mxu0 0.0
    %1641 = vmatprep.subr.mxu0 0.0
    %1642 = vmatpush1.msra.mxu0 0.0
    %1643 = vmatprep.subr.mxu0 0.0
    %1644 = vmatpush1.msra.mxu0 0.0
    %1645 = vmatprep.subr.mxu0 0.0
    %1646 = vmatpush1.msra.mxu0 0.0
    %1647 = vmatprep.subr.mxu0 0.0
    %1648 = vmatpush1.msra.mxu0 0.0
    %1649 = vmatprep.subr.mxu0 0.0
    %1650 = vmatpush1.msra.mxu0 0.0
    %1651 = vmatprep.subr.mxu0 0.0
    %1652 = vmatpush1.msra.mxu0 0.0
    %1653 = vmatprep.subr.mxu0 0.0
    %1654 = vmatpush1.msra.mxu0 0.0
    %1655 = vmatprep.subr.mxu0 0.0
    %1656 = vmatpush1.msra.mxu0 0.0
    %1657 = vmatprep.subr.mxu0 0.0
    %1658 = vmatpush1.msra.mxu0 0.0
    %1659 = vmatprep.subr.mxu0 0.0
    %1660 = vmatpush1.msra.mxu0 0.0
    %1661 = vmatprep.subr.mxu0 0.0
    %1662 = vmatpush1.msra.mxu0 0.0
    %1663 = vmatprep.mubr.f32.mxu0 0.0
    %1664 = vmatmul.mubr.f32.gmra.mrb[0].mxu0 %v1589
    %v1665 = vpop.f32.mrb[0].mxu0
    %v1666 = vadd.f32 0.0, %v1665
    %v1667 = vpop.f32.mrb[0].mxu0
    %1668 = vmatprep.mubr.f32.mxu0 0.0
    %1669 = vmatmul.mubr.f32.gmra.mrb[0].mxu0 %v1591
    %v1670 = vpop.f32.mrb[0].mxu0
    %v1671 = vadd.f32 0.0, %v1670
    %v1672 = vpop.f32.mrb[0].mxu0
    %1673 = vmatprep.mubr.f32.mxu0 0.0
    %1674 = vmatmul.mubr.f32.gmra.mrb[0].mxu0 %v1593
    %v1675 = vpop.f32.mrb[0].mxu0
    %v1676 = vadd.f32 0.0, %v1675
    %v1677 = vpop.f32.mrb[0].mxu0
    %1678 = vmatprep.mubr.f32.mxu0 0.0
    %1679 = vmatmul.mubr.f32.gmra.mrb[0].mxu0 %v1595
    %v1680 = vpop.f32.mrb[0].mxu0
    %v1681 = vadd.f32 0.0, %v1680
    %v1682 = vpop.f32.mrb[0].mxu0
    %1683 = vmatprep.mubr.f32.mxu0 0.0
    %1684 = vmatmul.mubr.f32.gmra.mrb[0].mxu0 %v1597
    %v1685 = vpop.f32.mrb[0].mxu0
    %v1686 = vpop.f32.mrb[0].mxu0
    %1687 = vdwg.mxu0
    %v1689 = vcombine.low %v1477, %v1478
    %v1690 = vcombine.low %v1479, %v1480
    %v1692 = vunpack.c.l.s4 1983009808
    %v1693 = vunpack.c.0.s8 %v1692
    %v1694 = vlaneseq
    %v1695 = vshrl.u32 %v1694, 7
    %v1696 = vsub.s32 %v1693, %v1695
    %v1697 = vrot.slane %v1689, %v1696
    %v1699 = vunpack.c.l.s4 1983009808
    %v1700 = vunpack.c.0.s8 %v1699
    %v1701 = vlaneseq
    %v1702 = vshrl.u32 %v1701, 7
    %v1703 = vsub.s32 %v1700, %v1702
    %v1704 = vrot.slane %v1690, %v1703
    %v1705 = vcombine.low %v1697, %v1704
    %v1706 = vcombine.low %v1481, %v1482
    %v1707 = vcombine.low %v1483, %v1484
    %v1709 = vunpack.c.l.s4 1983009808
    %v1710 = vunpack.c.0.s8 %v1709
    %v1711 = vlaneseq
    %v1712 = vshrl.u32 %v1711, 7
    %v1713 = vsub.s32 %v1710, %v1712
    %v1714 = vrot.slane %v1706, %v1713
    %v1716 = vunpack.c.l.s4 1983009808
    %v1717 = vunpack.c.0.s8 %v1716
    %v1718 = vlaneseq
    %v1719 = vshrl.u32 %v1718, 7
    %v1720 = vsub.s32 %v1717, %v1719
    %v1721 = vrot.slane %v1707, %v1720
    %v1722 = vcombine.low %v1714, %v1721
    %v1723 = vcombine.low %v1485, %v1486
    %v1724 = vcombine.low %v1487, %v1488
    %v1726 = vunpack.c.l.s4 1983009808
    %v1727 = vunpack.c.0.s8 %v1726
    %v1728 = vlaneseq
    %v1729 = vshrl.u32 %v1728, 7
    %v1730 = vsub.s32 %v1727, %v1729
    %v1731 = vrot.slane %v1723, %v1730
    %v1733 = vunpack.c.l.s4 1983009808
    %v1734 = vunpack.c.0.s8 %v1733
    %v1735 = vlaneseq
    %v1736 = vshrl.u32 %v1735, 7
    %v1737 = vsub.s32 %v1734, %v1736
    %v1738 = vrot.slane %v1724, %v1737
    %v1739 = vcombine.low %v1731, %v1738
    %v1740 = vcombine.low %v1489, %v1490
    %v1741 = vcombine.low %v1491, %v1492
    %v1743 = vunpack.c.l.s4 1983009808
    %v1744 = vunpack.c.0.s8 %v1743
    %v1745 = vlaneseq
    %v1746 = vshrl.u32 %v1745, 7
    %v1747 = vsub.s32 %v1744, %v1746
    %v1748 = vrot.slane %v1740, %v1747
    %v1750 = vunpack.c.l.s4 1983009808
    %v1751 = vunpack.c.0.s8 %v1750
    %v1752 = vlaneseq
    %v1753 = vshrl.u32 %v1752, 7
    %v1754 = vsub.s32 %v1751, %v1753
    %v1755 = vrot.slane %v1741, %v1754
    %v1756 = vcombine.low %v1748, %v1755
    %v1758 = vunpack.c.l.s4 1983009808
    %v1759 = vunpack.c.0.s8 %v1758
    %v1760 = vlaneseq
    %v1761 = vshrl.u32 %v1760, 7
    %v1762 = vsub.s32 %v1759, %v1761
    %v1763 = vrot.slane %v1493, %v1762
    %v1764 = vsel %vm1588, %v1705, 0
    %v1766 = vsel %vm1588, %v1722, 0
    %v1768 = vsel %vm1588, %v1739, 0
    %v1770 = vsel %vm1588, %v1756, 0
    %v1772 = vsel %vm1588, %v1763, 0
    %1774 = vmatprep.subr.mxu0 0.0
    %1775 = vmatpush1.msra.mxu0 %v107
    %1776 = vmatprep.subr.mxu0 0.0
    %1777 = vmatpush1.msra.mxu0 %v108
    %1778 = vmatprep.subr.mxu0 0.0
    %1779 = vmatpush1.msra.mxu0 %v109
    %1780 = vmatprep.subr.mxu0 0.0
    %1781 = vmatpush1.msra.mxu0 %v110
    %1782 = vmatprep.subr.mxu0 0.0
    %1783 = vmatpush1.msra.mxu0 %v111
    %1784 = vmatprep.subr.mxu0 0.0
    %1785 = vmatpush1.msra.mxu0 %v112
    %1786 = vmatprep.subr.mxu0 0.0
    %1787 = vmatpush1.msra.mxu0 0.0
    %1788 = vmatprep.subr.mxu0 0.0
    %1789 = vmatpush1.msra.mxu0 0.0
    %1790 = vmatprep.subr.mxu0 0.0
    %1791 = vmatpush1.msra.mxu0 0.0
    %1792 = vmatprep.subr.mxu0 0.0
    %1793 = vmatpush1.msra.mxu0 0.0
    %1794 = vmatprep.subr.mxu0 0.0
    %1795 = vmatpush1.msra.mxu0 0.0
    %1796 = vmatprep.subr.mxu0 0.0
    %1797 = vmatpush1.msra.mxu0 0.0
    %1798 = vmatprep.subr.mxu0 0.0
    %1799 = vmatpush1.msra.mxu0 0.0
    %1800 = vmatprep.subr.mxu0 0.0
    %1801 = vmatpush1.msra.mxu0 0.0
    %1802 = vmatprep.subr.mxu0 0.0
    %1803 = vmatpush1.msra.mxu0 0.0
    %1804 = vmatprep.subr.mxu0 0.0
    %1805 = vmatpush1.msra.mxu0 0.0
    %1806 = vmatprep.subr.mxu0 0.0
    %1807 = vmatpush1.msra.mxu0 0.0
    %1808 = vmatprep.subr.mxu0 0.0
    %1809 = vmatpush1.msra.mxu0 0.0
    %1810 = vmatprep.subr.mxu0 0.0
    %1811 = vmatpush1.msra.mxu0 0.0
    %1812 = vmatprep.subr.mxu0 0.0
    %1813 = vmatpush1.msra.mxu0 0.0
    %1814 = vmatprep.subr.mxu0 0.0
    %1815 = vmatpush1.msra.mxu0 0.0
    %1816 = vmatprep.subr.mxu0 0.0
    %1817 = vmatpush1.msra.mxu0 0.0
    %1818 = vmatprep.subr.mxu0 0.0
    %1819 = vmatpush1.msra.mxu0 0.0
    %1820 = vmatprep.subr.mxu0 0.0
    %1821 = vmatpush1.msra.mxu0 0.0
    %1822 = vmatprep.subr.mxu0 0.0
    %1823 = vmatpush1.msra.mxu0 0.0
    %1824 = vmatprep.subr.mxu0 0.0
    %1825 = vmatpush1.msra.mxu0 0.0
    %1826 = vmatprep.subr.mxu0 0.0
    %1827 = vmatpush1.msra.mxu0 0.0
    %1828 = vmatprep.subr.mxu0 0.0
    %1829 = vmatpush1.msra.mxu0 0.0
    %1830 = vmatprep.subr.mxu0 0.0
    %1831 = vmatpush1.msra.mxu0 0.0
    %1832 = vmatprep.subr.mxu0 0.0
    %1833 = vmatpush1.msra.mxu0 0.0
    %1834 = vmatprep.subr.mxu0 0.0
    %1835 = vmatpush1.msra.mxu0 0.0
    %1836 = vmatprep.subr.mxu0 0.0
    %1837 = vmatpush1.msra.mxu0 0.0
    %1838 = vmatprep.mubr.f32.mxu0 0.0
    %1839 = vmatmul.mubr.f32.gmra.mrb[0].mxu0 %v1764
    %v1840 = vpop.f32.mrb[0].mxu0
    %v1841 = vadd.f32 %v1666, %v1840
    %v1842 = vpop.f32.mrb[0].mxu0
    %1843 = vmatprep.mubr.f32.mxu0 0.0
    %1844 = vmatmul.mubr.f32.gmra.mrb[0].mxu0 %v1766
    %v1845 = vpop.f32.mrb[0].mxu0
    %v1846 = vadd.f32 %v1671, %v1845
    %v1847 = vpop.f32.mrb[0].mxu0
    %1848 = vmatprep.mubr.f32.mxu0 0.0
    %1849 = vmatmul.mubr.f32.gmra.mrb[0].mxu0 %v1768
    %v1850 = vpop.f32.mrb[0].mxu0
    %v1851 = vadd.f32 %v1676, %v1850
    %v1852 = vpop.f32.mrb[0].mxu0
    %1853 = vmatprep.mubr.f32.mxu0 0.0
    %1854 = vmatmul.mubr.f32.gmra.mrb[0].mxu0 %v1770
    %v1855 = vpop.f32.mrb[0].mxu0
    %v1856 = vadd.f32 %v1681, %v1855
    %v1857 = vpop.f32.mrb[0].mxu0
    %1858 = vmatprep.mubr.f32.mxu0 0.0
    %1859 = vmatmul.mubr.f32.gmra.mrb[0].mxu0 %v1772
    %v1860 = vpop.f32.mrb[0].mxu0
    %v1861 = vpop.f32.mrb[0].mxu0
    %1862 = vdwg.mxu0
    %v1867 = vcombine.high %v1841, %v1841
    %v1869 = vunpack.c.l.s4 1983009808
    %v1870 = vunpack.c.0.s8 %v1869
    %v1871 = vlaneseq
    %v1872 = vshrl.u32 %v1871, 7
    %v1873 = vsub.s32 %v1870, %v1872
    %v1874 = vrot.slane %v1841, %v1873
    %v1876 = vunpack.c.l.s4 1983009808
    %v1877 = vunpack.c.0.s8 %v1876
    %v1878 = vlaneseq
    %v1879 = vshrl.u32 %v1878, 7
    %v1880 = vsub.s32 %v1877, %v1879
    %v1881 = vrot.slane %v1867, %v1880
    %v1882 = vcombine.high %v1874, %v1874
    %v1883 = vcombine.high %v1881, %v1881
    %v1884 = vcombine.high %v1846, %v1846
    %v1886 = vunpack.c.l.s4 1983009808
    %v1887 = vunpack.c.0.s8 %v1886
    %v1888 = vlaneseq
    %v1889 = vshrl.u32 %v1888, 7
    %v1890 = vsub.s32 %v1887, %v1889
    %v1891 = vrot.slane %v1846, %v1890
    %v1893 = vunpack.c.l.s4 1983009808
    %v1894 = vunpack.c.0.s8 %v1893
    %v1895 = vlaneseq
    %v1896 = vshrl.u32 %v1895, 7
    %v1897 = vsub.s32 %v1894, %v1896
    %v1898 = vrot.slane %v1884, %v1897
    %v1899 = vcombine.high %v1891, %v1891
    %v1900 = vcombine.high %v1898, %v1898
    %v1901 = vcombine.high %v1851, %v1851
    %v1903 = vunpack.c.l.s4 1983009808
    %v1904 = vunpack.c.0.s8 %v1903
    %v1905 = vlaneseq
    %v1906 = vshrl.u32 %v1905, 7
    %v1907 = vsub.s32 %v1904, %v1906
    %v1908 = vrot.slane %v1851, %v1907
    %v1910 = vunpack.c.l.s4 1983009808
    %v1911 = vunpack.c.0.s8 %v1910
    %v1912 = vlaneseq
    %v1913 = vshrl.u32 %v1912, 7
    %v1914 = vsub.s32 %v1911, %v1913
    %v1915 = vrot.slane %v1901, %v1914
    %v1916 = vcombine.high %v1908, %v1908
    %v1917 = vcombine.high %v1915, %v1915
    %v1918 = vcombine.high %v1856, %v1856
    %v1920 = vunpack.c.l.s4 1983009808
    %v1921 = vunpack.c.0.s8 %v1920
    %v1922 = vlaneseq
    %v1923 = vshrl.u32 %v1922, 7
    %v1924 = vsub.s32 %v1921, %v1923
    %v1925 = vrot.slane %v1856, %v1924
    %v1927 = vunpack.c.l.s4 1983009808
    %v1928 = vunpack.c.0.s8 %v1927
    %v1929 = vlaneseq
    %v1930 = vshrl.u32 %v1929, 7
    %v1931 = vsub.s32 %v1928, %v1930
    %v1932 = vrot.slane %v1918, %v1931
    %v1933 = vcombine.high %v1925, %v1925
    %v1934 = vcombine.high %v1932, %v1932
    %v1952 = vcombine.low %v1704, %v1714
    %v1953 = vcombine.low %v1721, %v1731
    %v1954 = vcombine.low %v1738, %v1748
    %v1955 = vcombine.low %v1493, %v1494
    %v1957 = vunpack.c.l.s4 1983009808
    %v1958 = vunpack.c.0.s8 %v1957
    %v1959 = vlaneseq
    %v1960 = vshrl.u32 %v1959, 7
    %v1961 = vsub.s32 %v1958, %v1960
    %v1962 = vrot.slane %v1955, %v1961
    %v1963 = vcombine.low %v1755, %v1962
    %v1965 = vunpack.c.l.s4 1983009808
    %v1966 = vunpack.c.0.s8 %v1965
    %v1967 = vlaneseq
    %v1968 = vshrl.u32 %v1967, 7
    %v1969 = vsub.s32 %v1966, %v1968
    %v1970 = vrot.slane %v1495, %v1969
    %v1971 = vsel %vm1588, %v1952, 0
    %v1973 = vsel %vm1588, %v1953, 0
    %v1975 = vsel %vm1588, %v1954, 0
    %v1977 = vsel %vm1588, %v1963, 0
    %v1979 = vsel %vm1588, %v1970, 0
    %1981 = vmatprep.subr.mxu0 0.0
    %1982 = vmatpush1.msra.mxu0 %v119
    %1983 = vmatprep.subr.mxu0 0.0
    %1984 = vmatpush1.msra.mxu0 %v120
    %1985 = vmatprep.subr.mxu0 0.0
    %1986 = vmatpush1.msra.mxu0 %v121
    %1987 = vmatprep.subr.mxu0 0.0
    %1988 = vmatpush1.msra.mxu0 %v122
    %1989 = vmatprep.subr.mxu0 0.0
    %1990 = vmatpush1.msra.mxu0 %v123
    %1991 = vmatprep.subr.mxu0 0.0
    %1992 = vmatpush1.msra.mxu0 %v124
    %1993 = vmatprep.subr.mxu0 0.0
    %1994 = vmatpush1.msra.mxu0 0.0
    %1995 = vmatprep.subr.mxu0 0.0
    %1996 = vmatpush1.msra.mxu0 0.0
    %1997 = vmatprep.subr.mxu0 0.0
    %1998 = vmatpush1.msra.mxu0 0.0
    %1999 = vmatprep.subr.mxu0 0.0
    %2000 = vmatpush1.msra.mxu0 0.0
    %2001 = vmatprep.subr.mxu0 0.0
    %2002 = vmatpush1.msra.mxu0 0.0
    %2003 = vmatprep.subr.mxu0 0.0
    %2004 = vmatpush1.msra.mxu0 0.0
    %2005 = vmatprep.subr.mxu0 0.0
    %2006 = vmatpush1.msra.mxu0 0.0
    %2007 = vmatprep.subr.mxu0 0.0
    %2008 = vmatpush1.msra.mxu0 0.0
    %2009 = vmatprep.subr.mxu0 0.0
    %2010 = vmatpush1.msra.mxu0 0.0
    %2011 = vmatprep.subr.mxu0 0.0
    %2012 = vmatpush1.msra.mxu0 0.0
    %2013 = vmatprep.subr.mxu0 0.0
    %2014 = vmatpush1.msra.mxu0 0.0
    %2015 = vmatprep.subr.mxu0 0.0
    %2016 = vmatpush1.msra.mxu0 0.0
    %2017 = vmatprep.subr.mxu0 0.0
    %2018 = vmatpush1.msra.mxu0 0.0
    %2019 = vmatprep.subr.mxu0 0.0
    %2020 = vmatpush1.msra.mxu0 0.0
    %2021 = vmatprep.subr.mxu0 0.0
    %2022 = vmatpush1.msra.mxu0 0.0
    %2023 = vmatprep.subr.mxu0 0.0
    %2024 = vmatpush1.msra.mxu0 0.0
    %2025 = vmatprep.subr.mxu0 0.0
    %2026 = vmatpush1.msra.mxu0 0.0
    %2027 = vmatprep.subr.mxu0 0.0
    %2028 = vmatpush1.msra.mxu0 0.0
    %2029 = vmatprep.subr.mxu0 0.0
    %2030 = vmatpush1.msra.mxu0 0.0
    %2031 = vmatprep.subr.mxu0 0.0
    %2032 = vmatpush1.msra.mxu0 0.0
    %2033 = vmatprep.subr.mxu0 0.0
    %2034 = vmatpush1.msra.mxu0 0.0
    %2035 = vmatprep.subr.mxu0 0.0
    %2036 = vmatpush1.msra.mxu0 0.0
    %2037 = vmatprep.subr.mxu0 0.0
    %2038 = vmatpush1.msra.mxu0 0.0
    %2039 = vmatprep.subr.mxu0 0.0
    %2040 = vmatpush1.msra.mxu0 0.0
    %2041 = vmatprep.subr.mxu0 0.0
    %2042 = vmatpush1.msra.mxu0 0.0
    %2043 = vmatprep.subr.mxu0 0.0
    %2044 = vmatpush1.msra.mxu0 0.0
    %2045 = vmatprep.mubr.f32.mxu0 0.0
    %2046 = vmatmul.mubr.f32.gmra.mrb[0].mxu0 %v1971
    %v2047 = vpop.f32.mrb[0].mxu0
    %v2048 = vadd.f32 0.0, %v2047
    %v2049 = vpop.f32.mrb[0].mxu0
    %2050 = vmatprep.mubr.f32.mxu0 0.0
    %2051 = vmatmul.mubr.f32.gmra.mrb[0].mxu0 %v1973
    %v2052 = vpop.f32.mrb[0].mxu0
    %v2053 = vadd.f32 0.0, %v2052
    %v2054 = vpop.f32.mrb[0].mxu0
    %2055 = vmatprep.mubr.f32.mxu0 0.0
    %2056 = vmatmul.mubr.f32.gmra.mrb[0].mxu0 %v1975
    %v2057 = vpop.f32.mrb[0].mxu0
    %v2058 = vadd.f32 0.0, %v2057
    %v2059 = vpop.f32.mrb[0].mxu0
    %2060 = vmatprep.mubr.f32.mxu0 0.0
    %2061 = vmatmul.mubr.f32.gmra.mrb[0].mxu0 %v1977
    %v2062 = vpop.f32.mrb[0].mxu0
    %v2063 = vadd.f32 0.0, %v2062
    %v2064 = vpop.f32.mrb[0].mxu0
    %2065 = vmatprep.mubr.f32.mxu0 0.0
    %2066 = vmatmul.mubr.f32.gmra.mrb[0].mxu0 %v1979
    %v2067 = vpop.f32.mrb[0].mxu0
    %v2068 = vpop.f32.mrb[0].mxu0
    %2069 = vdwg.mxu0
    %v2074 = vcombine.high %v2048, %v2048
    %v2076 = vunpack.c.l.s4 1983009808
    %v2077 = vunpack.c.0.s8 %v2076
    %v2078 = vlaneseq
    %v2079 = vshrl.u32 %v2078, 7
    %v2080 = vsub.s32 %v2077, %v2079
    %v2081 = vrot.slane %v2048, %v2080
    %v2083 = vunpack.c.l.s4 1983009808
    %v2084 = vunpack.c.0.s8 %v2083
    %v2085 = vlaneseq
    %v2086 = vshrl.u32 %v2085, 7
    %v2087 = vsub.s32 %v2084, %v2086
    %v2088 = vrot.slane %v2074, %v2087
    %v2089 = vcombine.high %v2081, %v2081
    %v2090 = vcombine.high %v2088, %v2088
    %v2091 = vcombine.high %v2053, %v2053
    %v2093 = vunpack.c.l.s4 1983009808
    %v2094 = vunpack.c.0.s8 %v2093
    %v2095 = vlaneseq
    %v2096 = vshrl.u32 %v2095, 7
    %v2097 = vsub.s32 %v2094, %v2096
    %v2098 = vrot.slane %v2053, %v2097
    %v2100 = vunpack.c.l.s4 1983009808
    %v2101 = vunpack.c.0.s8 %v2100
    %v2102 = vlaneseq
    %v2103 = vshrl.u32 %v2102, 7
    %v2104 = vsub.s32 %v2101, %v2103
    %v2105 = vrot.slane %v2091, %v2104
    %v2106 = vcombine.high %v2098, %v2098
    %v2107 = vcombine.high %v2105, %v2105
    %v2108 = vcombine.high %v2058, %v2058
    %v2110 = vunpack.c.l.s4 1983009808
    %v2111 = vunpack.c.0.s8 %v2110
    %v2112 = vlaneseq
    %v2113 = vshrl.u32 %v2112, 7
    %v2114 = vsub.s32 %v2111, %v2113
    %v2115 = vrot.slane %v2058, %v2114
    %v2117 = vunpack.c.l.s4 1983009808
    %v2118 = vunpack.c.0.s8 %v2117
    %v2119 = vlaneseq
    %v2120 = vshrl.u32 %v2119, 7
    %v2121 = vsub.s32 %v2118, %v2120
    %v2122 = vrot.slane %v2108, %v2121
    %v2123 = vcombine.high %v2115, %v2115
    %v2124 = vcombine.high %v2122, %v2122
    %v2125 = vcombine.high %v2063, %v2063
    %v2127 = vunpack.c.l.s4 1983009808
    %v2128 = vunpack.c.0.s8 %v2127
    %v2129 = vlaneseq
    %v2130 = vshrl.u32 %v2129, 7
    %v2131 = vsub.s32 %v2128, %v2130
    %v2132 = vrot.slane %v2063, %v2131
    %v2134 = vunpack.c.l.s4 1983009808
    %v2135 = vunpack.c.0.s8 %v2134
    %v2136 = vlaneseq
    %v2137 = vshrl.u32 %v2136, 7
    %v2138 = vsub.s32 %v2135, %v2137
    %v2139 = vrot.slane %v2125, %v2138
    %v2140 = vcombine.high %v2132, %v2132
    %v2141 = vcombine.high %v2139, %v2139
    %v2158 = vadd.f32 %v1874, %v2081
    %v2159 = vadd.f32 %v1882, %v2089
    %v2160 = vadd.f32 %v1881, %v2088
    %v2161 = vadd.f32 %v1883, %v2090
    %v2162 = vadd.f32 %v1891, %v2098
    %v2163 = vadd.f32 %v1899, %v2106
    %v2164 = vadd.f32 %v1898, %v2105
    %v2165 = vadd.f32 %v1900, %v2107
    %v2166 = vadd.f32 %v1908, %v2115
    %v2167 = vadd.f32 %v1916, %v2123
    %v2168 = vadd.f32 %v1915, %v2122
    %v2169 = vadd.f32 %v1917, %v2124
    %v2170 = vadd.f32 %v1925, %v2132
    %v2171 = vadd.f32 %v1933, %v2140
    %v2172 = vadd.f32 %v1932, %v2139
    %v2173 = vadd.f32 %v1934, %v2141
    %v2174 = vlaneseq
    %v2175 = vshrl.u32 %v2174, 7
    %v2176 = vsub.s32 1, %v2175
    %v2177 = vrot.slane %v101, %v2176
    %v2178 = vadd.f32 %v2158, %v2177
    %v2179 = vadd.f32 %v2159, %v2177
    %v2180 = vadd.f32 %v2160, %v2177
    %v2181 = vadd.f32 %v2161, %v2177
    %v2182 = vadd.f32 %v2162, %v2177
    %v2183 = vadd.f32 %v2163, %v2177
    %v2184 = vadd.f32 %v2164, %v2177
    %v2185 = vadd.f32 %v2165, %v2177
    %v2186 = vadd.f32 %v2166, %v2177
    %v2187 = vadd.f32 %v2167, %v2177
    %v2188 = vadd.f32 %v2168, %v2177
    %v2189 = vadd.f32 %v2169, %v2177
    %v2190 = vadd.f32 %v2170, %v2177
    %v2191 = vadd.f32 %v2171, %v2177
    %v2192 = vadd.f32 %v2172, %v2177
    %v2193 = vadd.f32 %v2173, %v2177
    %v2194 = vmax.f32 %v2178, 0.0
    %v2195 = vmax.f32 %v2179, 0.0
    %v2196 = vmax.f32 %v2180, 0.0
    %v2197 = vmax.f32 %v2181, 0.0
    %v2198 = vmax.f32 %v2182, 0.0
    %v2199 = vmax.f32 %v2183, 0.0
    %v2200 = vmax.f32 %v2184, 0.0
    %v2201 = vmax.f32 %v2185, 0.0
    %v2202 = vmax.f32 %v2186, 0.0
    %v2203 = vmax.f32 %v2187, 0.0
    %v2204 = vmax.f32 %v2188, 0.0
    %v2205 = vmax.f32 %v2189, 0.0
    %v2206 = vmax.f32 %v2190, 0.0
    %v2207 = vmax.f32 %v2191, 0.0
    %v2208 = vmax.f32 %v2192, 0.0
    %v2209 = vmax.f32 %v2193, 0.0
    %v2210 = vmax.f32 %v2194, %v2195
    %v2211 = vmax.f32 %v2196, %v2197
    %v2212 = vmax.f32 %v2198, %v2199
    %v2213 = vmax.f32 %v2200, %v2201
    %v2214 = vmax.f32 %v2202, %v2203
    %v2215 = vmax.f32 %v2204, %v2205
    %v2216 = vmax.f32 %v2206, %v2207
    %v2217 = vmax.f32 %v2208, %v2209
    %v2224 = vcombine.low %v2211, %v2212
    %v2225 = vcombine.low %v2213, %v2214
    %v2227 = vunpack.c.l.s4 1983009808
    %v2228 = vunpack.c.0.s8 %v2227
    %v2229 = vlaneseq
    %v2230 = vshrl.u32 %v2229, 7
    %v2231 = vsub.s32 %v2228, %v2230
    %v2232 = vrot.slane %v2224, %v2231
    %v2234 = vunpack.c.l.s4 1983009808
    %v2235 = vunpack.c.0.s8 %v2234
    %v2236 = vlaneseq
    %v2237 = vshrl.u32 %v2236, 7
    %v2238 = vsub.s32 %v2235, %v2237
    %v2239 = vrot.slane %v2225, %v2238
    %v2240 = vcombine.low %v2232, %v2239
    %v2241 = vcombine.low %v2215, %v2216
    %v2243 = vunpack.c.l.s4 1983009808
    %v2244 = vunpack.c.0.s8 %v2243
    %v2245 = vlaneseq
    %v2246 = vshrl.u32 %v2245, 7
    %v2247 = vsub.s32 %v2244, %v2246
    %v2248 = vrot.slane %v2241, %v2247
    %v2249 = vsel %vm1588, %v2240, 0
    %v2251 = vsel %vm1588, %v2248, 0
    %2253 = vmatprep.subr.mxu0 0.0
    %2254 = vmatpush1.msra.mxu0 %v131
    %2255 = vmatprep.subr.mxu0 0.0
    %2256 = vmatpush1.msra.mxu0 %v132
    %2257 = vmatprep.subr.mxu0 0.0
    %2258 = vmatpush1.msra.mxu0 %v133
    %2259 = vmatprep.subr.mxu0 0.0
    %2260 = vmatpush1.msra.mxu0 %v134
    %2261 = vmatprep.subr.mxu0 0.0
    %2262 = vmatpush1.msra.mxu0 %v135
    %2263 = vmatprep.subr.mxu0 0.0
    %2264 = vmatpush1.msra.mxu0 %v136
    %2265 = vmatprep.subr.mxu0 0.0
    %2266 = vmatpush1.msra.mxu0 0.0
    %2267 = vmatprep.subr.mxu0 0.0
    %2268 = vmatpush1.msra.mxu0 0.0
    %2269 = vmatprep.subr.mxu0 0.0
    %2270 = vmatpush1.msra.mxu0 0.0
    %2271 = vmatprep.subr.mxu0 0.0
    %2272 = vmatpush1.msra.mxu0 0.0
    %2273 = vmatprep.subr.mxu0 0.0
    %2274 = vmatpush1.msra.mxu0 0.0
    %2275 = vmatprep.subr.mxu0 0.0
    %2276 = vmatpush1.msra.mxu0 0.0
    %2277 = vmatprep.subr.mxu0 0.0
    %2278 = vmatpush1.msra.mxu0 0.0
    %2279 = vmatprep.subr.mxu0 0.0
    %2280 = vmatpush1.msra.mxu0 0.0
    %2281 = vmatprep.subr.mxu0 0.0
    %2282 = vmatpush1.msra.mxu0 0.0
    %2283 = vmatprep.subr.mxu0 0.0
    %2284 = vmatpush1.msra.mxu0 0.0
    %2285 = vmatprep.subr.mxu0 0.0
    %2286 = vmatpush1.msra.mxu0 0.0
    %2287 = vmatprep.subr.mxu0 0.0
    %2288 = vmatpush1.msra.mxu0 0.0
    %2289 = vmatprep.subr.mxu0 0.0
    %2290 = vmatpush1.msra.mxu0 0.0
    %2291 = vmatprep.subr.mxu0 0.0
    %2292 = vmatpush1.msra.mxu0 0.0
    %2293 = vmatprep.subr.mxu0 0.0
    %2294 = vmatpush1.msra.mxu0 0.0
    %2295 = vmatprep.subr.mxu0 0.0
    %2296 = vmatpush1.msra.mxu0 0.0
    %2297 = vmatprep.subr.mxu0 0.0
    %2298 = vmatpush1.msra.mxu0 0.0
    %2299 = vmatprep.subr.mxu0 0.0
    %2300 = vmatpush1.msra.mxu0 0.0
    %2301 = vmatprep.subr.mxu0 0.0
    %2302 = vmatpush1.msra.mxu0 0.0
    %2303 = vmatprep.subr.mxu0 0.0
    %2304 = vmatpush1.msra.mxu0 0.0
    %2305 = vmatprep.subr.mxu0 0.0
    %2306 = vmatpush1.msra.mxu0 0.0
    %2307 = vmatprep.subr.mxu0 0.0
    %2308 = vmatpush1.msra.mxu0 0.0
    %2309 = vmatprep.subr.mxu0 0.0
    %2310 = vmatpush1.msra.mxu0 0.0
    %2311 = vmatprep.subr.mxu0 0.0
    %2312 = vmatpush1.msra.mxu0 0.0
    %2313 = vmatprep.subr.mxu0 0.0
    %2314 = vmatpush1.msra.mxu0 0.0
    %2315 = vmatprep.subr.mxu0 0.0
    %2316 = vmatpush1.msra.mxu0 0.0
    %2317 = vmatprep.mubr.f32.mxu0 0.0
    %2318 = vmatmul.mubr.f32.gmra.mrb[0].mxu0 %v2249
    %v2319 = vpop.f32.mrb[0].mxu0
    %v2320 = vadd.f32 0.0, %v2319
    %v2321 = vpop.f32.mrb[0].mxu0
    %2322 = vmatprep.mubr.f32.mxu0 0.0
    %2323 = vmatmul.mubr.f32.gmra.mrb[0].mxu0 %v2251
    %v2324 = vpop.f32.mrb[0].mxu0
    %v2325 = vadd.f32 0.0, %v2324
    %v2326 = vpop.f32.mrb[0].mxu0
    %2327 = vdwg.mxu0
    %v2329 = vcombine.low %v2210, %v2211
    %v2330 = vcombine.low %v2212, %v2213
    %v2332 = vunpack.c.l.s4 1983009808
    %v2333 = vunpack.c.0.s8 %v2332
    %v2334 = vlaneseq
    %v2335 = vshrl.u32 %v2334, 7
    %v2336 = vsub.s32 %v2333, %v2335
    %v2337 = vrot.slane %v2329, %v2336
    %v2339 = vunpack.c.l.s4 1983009808
    %v2340 = vunpack.c.0.s8 %v2339
    %v2341 = vlaneseq
    %v2342 = vshrl.u32 %v2341, 7
    %v2343 = vsub.s32 %v2340, %v2342
    %v2344 = vrot.slane %v2330, %v2343
    %v2345 = vcombine.low %v2337, %v2344
    %v2346 = vcombine.low %v2214, %v2215
    %v2348 = vunpack.c.l.s4 1983009808
    %v2349 = vunpack.c.0.s8 %v2348
    %v2350 = vlaneseq
    %v2351 = vshrl.u32 %v2350, 7
    %v2352 = vsub.s32 %v2349, %v2351
    %v2353 = vrot.slane %v2346, %v2352
    %v2354 = vsel %vm1588, %v2345, 0
    %v2356 = vsel %vm1588, %v2353, 0
    %2358 = vmatprep.subr.mxu0 0.0
    %2359 = vmatpush1.msra.mxu0 %v125
    %2360 = vmatprep.subr.mxu0 0.0
    %2361 = vmatpush1.msra.mxu0 %v126
    %2362 = vmatprep.subr.mxu0 0.0
    %2363 = vmatpush1.msra.mxu0 %v127
    %2364 = vmatprep.subr.mxu0 0.0
    %2365 = vmatpush1.msra.mxu0 %v128
    %2366 = vmatprep.subr.mxu0 0.0
    %2367 = vmatpush1.msra.mxu0 %v129
    %2368 = vmatprep.subr.mxu0 0.0
    %2369 = vmatpush1.msra.mxu0 %v130
    %2370 = vmatprep.subr.mxu0 0.0
    %2371 = vmatpush1.msra.mxu0 0.0
    %2372 = vmatprep.subr.mxu0 0.0
    %2373 = vmatpush1.msra.mxu0 0.0
    %2374 = vmatprep.subr.mxu0 0.0
    %2375 = vmatpush1.msra.mxu0 0.0
    %2376 = vmatprep.subr.mxu0 0.0
    %2377 = vmatpush1.msra.mxu0 0.0
    %2378 = vmatprep.subr.mxu0 0.0
    %2379 = vmatpush1.msra.mxu0 0.0
    %2380 = vmatprep.subr.mxu0 0.0
    %2381 = vmatpush1.msra.mxu0 0.0
    %2382 = vmatprep.subr.mxu0 0.0
    %2383 = vmatpush1.msra.mxu0 0.0
    %2384 = vmatprep.subr.mxu0 0.0
    %2385 = vmatpush1.msra.mxu0 0.0
    %2386 = vmatprep.subr.mxu0 0.0
    %2387 = vmatpush1.msra.mxu0 0.0
    %2388 = vmatprep.subr.mxu0 0.0
    %2389 = vmatpush1.msra.mxu0 0.0
    %2390 = vmatprep.subr.mxu0 0.0
    %2391 = vmatpush1.msra.mxu0 0.0
    %2392 = vmatprep.subr.mxu0 0.0
    %2393 = vmatpush1.msra.mxu0 0.0
    %2394 = vmatprep.subr.mxu0 0.0
    %2395 = vmatpush1.msra.mxu0 0.0
    %2396 = vmatprep.subr.mxu0 0.0
    %2397 = vmatpush1.msra.mxu0 0.0
    %2398 = vmatprep.subr.mxu0 0.0
    %2399 = vmatpush1.msra.mxu0 0.0
    %2400 = vmatprep.subr.mxu0 0.0
    %2401 = vmatpush1.msra.mxu0 0.0
    %2402 = vmatprep.subr.mxu0 0.0
    %2403 = vmatpush1.msra.mxu0 0.0
    %2404 = vmatprep.subr.mxu0 0.0
    %2405 = vmatpush1.msra.mxu0 0.0
    %2406 = vmatprep.subr.mxu0 0.0
    %2407 = vmatpush1.msra.mxu0 0.0
    %2408 = vmatprep.subr.mxu0 0.0
    %2409 = vmatpush1.msra.mxu0 0.0
    %2410 = vmatprep.subr.mxu0 0.0
    %2411 = vmatpush1.msra.mxu0 0.0
    %2412 = vmatprep.subr.mxu0 0.0
    %2413 = vmatpush1.msra.mxu0 0.0
    %2414 = vmatprep.subr.mxu0 0.0
    %2415 = vmatpush1.msra.mxu0 0.0
    %2416 = vmatprep.subr.mxu0 0.0
    %2417 = vmatpush1.msra.mxu0 0.0
    %2418 = vmatprep.subr.mxu0 0.0
    %2419 = vmatpush1.msra.mxu0 0.0
    %2420 = vmatprep.subr.mxu0 0.0
    %2421 = vmatpush1.msra.mxu0 0.0
    %2422 = vmatprep.mubr.f32.mxu0 0.0
    %2423 = vmatmul.mubr.f32.gmra.mrb[0].mxu0 %v2354
    %v2424 = vpop.f32.mrb[0].mxu0
    %v2425 = vadd.f32 %v2320, %v2424
    %v2426 = vpop.f32.mrb[0].mxu0
    %2427 = vmatprep.mubr.f32.mxu0 0.0
    %2428 = vmatmul.mubr.f32.gmra.mrb[0].mxu0 %v2356
    %v2429 = vpop.f32.mrb[0].mxu0
    %v2430 = vadd.f32 %v2325, %v2429
    %v2431 = vpop.f32.mrb[0].mxu0
    %2432 = vdwg.mxu0
    %v2435 = vcombine.high %v2425, %v2425
    %v2437 = vunpack.c.l.s4 1983009808
    %v2438 = vunpack.c.0.s8 %v2437
    %v2439 = vlaneseq
    %v2440 = vshrl.u32 %v2439, 7
    %v2441 = vsub.s32 %v2438, %v2440
    %v2442 = vrot.slane %v2425, %v2441
    %v2444 = vunpack.c.l.s4 1983009808
    %v2445 = vunpack.c.0.s8 %v2444
    %v2446 = vlaneseq
    %v2447 = vshrl.u32 %v2446, 7
    %v2448 = vsub.s32 %v2445, %v2447
    %v2449 = vrot.slane %v2435, %v2448
    %v2450 = vcombine.high %v2442, %v2442
    %v2451 = vcombine.high %v2449, %v2449
    %v2453 = vunpack.c.l.s4 1983009808
    %v2454 = vunpack.c.0.s8 %v2453
    %v2455 = vlaneseq
    %v2456 = vshrl.u32 %v2455, 7
    %v2457 = vsub.s32 %v2454, %v2456
    %v2458 = vrot.slane %v2430, %v2457
    %v2459 = vcombine.high %v2458, %v2458
    %v2467 = vcombine.low %v2344, %v2353
    %v2468 = vcombine.low %v2216, %v2217
    %v2470 = vunpack.c.l.s4 1983009808
    %v2471 = vunpack.c.0.s8 %v2470
    %v2472 = vlaneseq
    %v2473 = vshrl.u32 %v2472, 7
    %v2474 = vsub.s32 %v2471, %v2473
    %v2475 = vrot.slane %v2468, %v2474
    %v2476 = vsel %vm1588, %v2467, 0
    %v2478 = vsel %vm1588, %v2475, 0
    %2480 = vmatprep.subr.mxu0 0.0
    %2481 = vmatpush1.msra.mxu0 %v137
    %2482 = vmatprep.subr.mxu0 0.0
    %2483 = vmatpush1.msra.mxu0 %v138
    %2484 = vmatprep.subr.mxu0 0.0
    %2485 = vmatpush1.msra.mxu0 %v139
    %2486 = vmatprep.subr.mxu0 0.0
    %2487 = vmatpush1.msra.mxu0 %v140
    %2488 = vmatprep.subr.mxu0 0.0
    %2489 = vmatpush1.msra.mxu0 %v141
    %2490 = vmatprep.subr.mxu0 0.0
    %2491 = vmatpush1.msra.mxu0 %v142
    %2492 = vmatprep.subr.mxu0 0.0
    %2493 = vmatpush1.msra.mxu0 0.0
    %2494 = vmatprep.subr.mxu0 0.0
    %2495 = vmatpush1.msra.mxu0 0.0
    %2496 = vmatprep.subr.mxu0 0.0
    %2497 = vmatpush1.msra.mxu0 0.0
    %2498 = vmatprep.subr.mxu0 0.0
    %2499 = vmatpush1.msra.mxu0 0.0
    %2500 = vmatprep.subr.mxu0 0.0
    %2501 = vmatpush1.msra.mxu0 0.0
    %2502 = vmatprep.subr.mxu0 0.0
    %2503 = vmatpush1.msra.mxu0 0.0
    %2504 = vmatprep.subr.mxu0 0.0
    %2505 = vmatpush1.msra.mxu0 0.0
    %2506 = vmatprep.subr.mxu0 0.0
    %2507 = vmatpush1.msra.mxu0 0.0
    %2508 = vmatprep.subr.mxu0 0.0
    %2509 = vmatpush1.msra.mxu0 0.0
    %2510 = vmatprep.subr.mxu0 0.0
    %2511 = vmatpush1.msra.mxu0 0.0
    %2512 = vmatprep.subr.mxu0 0.0
    %2513 = vmatpush1.msra.mxu0 0.0
    %2514 = vmatprep.subr.mxu0 0.0
    %2515 = vmatpush1.msra.mxu0 0.0
    %2516 = vmatprep.subr.mxu0 0.0
    %2517 = vmatpush1.msra.mxu0 0.0
    %2518 = vmatprep.subr.mxu0 0.0
    %2519 = vmatpush1.msra.mxu0 0.0
    %2520 = vmatprep.subr.mxu0 0.0
    %2521 = vmatpush1.msra.mxu0 0.0
    %2522 = vmatprep.subr.mxu0 0.0
    %2523 = vmatpush1.msra.mxu0 0.0
    %2524 = vmatprep.subr.mxu0 0.0
    %2525 = vmatpush1.msra.mxu0 0.0
    %2526 = vmatprep.subr.mxu0 0.0
    %2527 = vmatpush1.msra.mxu0 0.0
    %2528 = vmatprep.subr.mxu0 0.0
    %2529 = vmatpush1.msra.mxu0 0.0
    %2530 = vmatprep.subr.mxu0 0.0
    %2531 = vmatpush1.msra.mxu0 0.0
    %2532 = vmatprep.subr.mxu0 0.0
    %2533 = vmatpush1.msra.mxu0 0.0
    %2534 = vmatprep.subr.mxu0 0.0
    %2535 = vmatpush1.msra.mxu0 0.0
    %2536 = vmatprep.subr.mxu0 0.0
    %2537 = vmatpush1.msra.mxu0 0.0
    %2538 = vmatprep.subr.mxu0 0.0
    %2539 = vmatpush1.msra.mxu0 0.0
    %2540 = vmatprep.subr.mxu0 0.0
    %2541 = vmatpush1.msra.mxu0 0.0
    %2542 = vmatprep.subr.mxu0 0.0
    %2543 = vmatpush1.msra.mxu0 0.0
    %2544 = vmatprep.mubr.f32.mxu0 0.0
    %2545 = vmatmul.mubr.f32.gmra.mrb[0].mxu0 %v2476
    %v2546 = vpop.f32.mrb[0].mxu0
    %v2547 = vadd.f32 0.0, %v2546
    %v2548 = vpop.f32.mrb[0].mxu0
    %2549 = vmatprep.mubr.f32.mxu0 0.0
    %2550 = vmatmul.mubr.f32.gmra.mrb[0].mxu0 %v2478
    %v2551 = vpop.f32.mrb[0].mxu0
    %v2552 = vadd.f32 0.0, %v2551
    %v2553 = vpop.f32.mrb[0].mxu0
    %2554 = vdwg.mxu0
    %v2557 = vcombine.high %v2547, %v2547
    %v2559 = vunpack.c.l.s4 1983009808
    %v2560 = vunpack.c.0.s8 %v2559
    %v2561 = vlaneseq
    %v2562 = vshrl.u32 %v2561, 7
    %v2563 = vsub.s32 %v2560, %v2562
    %v2564 = vrot.slane %v2547, %v2563
    %v2566 = vunpack.c.l.s4 1983009808
    %v2567 = vunpack.c.0.s8 %v2566
    %v2568 = vlaneseq
    %v2569 = vshrl.u32 %v2568, 7
    %v2570 = vsub.s32 %v2567, %v2569
    %v2571 = vrot.slane %v2557, %v2570
    %v2572 = vcombine.high %v2564, %v2564
    %v2573 = vcombine.high %v2571, %v2571
    %v2575 = vunpack.c.l.s4 1983009808
    %v2576 = vunpack.c.0.s8 %v2575
    %v2577 = vlaneseq
    %v2578 = vshrl.u32 %v2577, 7
    %v2579 = vsub.s32 %v2576, %v2578
    %v2580 = vrot.slane %v2552, %v2579
    %v2581 = vcombine.high %v2580, %v2580
    %v2588 = vadd.f32 %v2442, %v2564
    %v2589 = vadd.f32 %v2450, %v2572
    %v2590 = vadd.f32 %v2449, %v2571
    %v2591 = vadd.f32 %v2451, %v2573
    %v2592 = vadd.f32 %v2458, %v2580
    %v2593 = vadd.f32 %v2459, %v2581
    %v2594 = vlaneseq
    %v2595 = vshrl.u32 %v2594, 7
    %v2596 = vsub.s32 2, %v2595
    %v2597 = vrot.slane %v101, %v2596
    %v2598 = vadd.f32 %v2588, %v2597
    %v2599 = vadd.f32 %v2589, %v2597
    %v2600 = vadd.f32 %v2590, %v2597
    %v2601 = vadd.f32 %v2591, %v2597
    %v2602 = vadd.f32 %v2592, %v2597
    %v2603 = vadd.f32 %v2593, %v2597
    %v2604 = vmax.f32 %v2598, 0.0
    %v2605 = vmax.f32 %v2599, 0.0
    %v2606 = vmax.f32 %v2600, 0.0
    %v2607 = vmax.f32 %v2601, 0.0
    %v2608 = vmax.f32 %v2602, 0.0
    %v2609 = vmax.f32 %v2603, 0.0
    %v2610 = vmax.f32 %v2604, %v2605
    %v2611 = vmax.f32 %v2606, %v2607
    %v2612 = vmax.f32 %v2608, %v2609
    %v2613 = vld [vmem:[#allocation5] sm:$0xff]
    %v2614 = vld [vmem:[#allocation5 + $0x8] sm:$0xff]
    %v2615 = vld [vmem:[#allocation5 + $0x10] sm:$0xff]
    %v2616 = vld [vmem:[#allocation5 + $0x18] sm:$0xff]
    %v2617 = vld [vmem:[#allocation5 + $0x20] sm:$0xff]
    %v2618 = vld [vmem:[#allocation5 + $0x28] sm:$0xff]
    %v2619 = vld [vmem:[#allocation5 + $0x30] sm:$0xff]
    %v2620 = vld [vmem:[#allocation5 + $0x38] sm:$0xff]
    %v2621 = vld [vmem:[#allocation5 + $0x40] sm:$0xff]
    %v2622 = vld [vmem:[#allocation5 + $0x48] sm:$0xff]
    %v2623 = vld [vmem:[#allocation5 + $0x50] sm:$0xff]
    %v2624 = vld [vmem:[#allocation5 + $0x58] sm:$0xff]
    %v2625 = vld [vmem:[#allocation5 + $0x60] sm:$0xff]
    %v2626 = vld [vmem:[#allocation5 + $0x68] sm:$0xff]
    %v2627 = vld [vmem:[#allocation5 + $0x70] sm:$0xff]
    %v2628 = vld [vmem:[#allocation5 + $0x78] sm:$0xff]
    %v2629 = vld [vmem:[#allocation5 + $0x80] sm:$0xff]
    %v2630 = vld [vmem:[#allocation5 + $0x88] sm:$0xff]
    %v2631 = vld [vmem:[#allocation5 + $0x90] sm:$0xff]
    %v2632 = vld [vmem:[#allocation5 + $0x98] sm:$0xff]
    %v2633 = vld [vmem:[#allocation5 + $0xa0] sm:$0xff]
    %v2634 = vld [vmem:[#allocation5 + $0xa8] sm:$0xff]
    %v2635 = vld [vmem:[#allocation5 + $0xb0] sm:$0xff]
    %v2636 = vld [vmem:[#allocation5 + $0xb8] sm:$0xff]
    %v2637 = vld [vmem:[#allocation5 + $0xc0] sm:$0xff]
    %v2638 = vld [vmem:[#allocation5 + $0xc8] sm:$0xff]
    %v2639 = vld [vmem:[#allocation5 + $0xd0] sm:$0xff]
    %v2640 = vld [vmem:[#allocation5 + $0xd8] sm:$0xff]
    %v2641 = vld [vmem:[#allocation5 + $0xe0] sm:$0xff]
    %v2642 = vld [vmem:[#allocation5 + $0xe8] sm:$0xff]
    %v2643 = vld [vmem:[#allocation5 + $0xf0] sm:$0xff]
    %v2644 = vld [vmem:[#allocation5 + $0xf8] sm:$0xff]
    %v2645 = vld [vmem:[#allocation5 + $0x100] sm:$0xff]
    %v2646 = vld [vmem:[#allocation5 + $0x108] sm:$0xff]
    %v2647 = vld [vmem:[#allocation5 + $0x110] sm:$0xff]
    %v2648 = vld [vmem:[#allocation5 + $0x118] sm:$0xff]
    %v2649 = vlaneseq
    %v2650 = vshrl.u32 %v2649, 7
    %v2651 = vsub.s32 3, %v2650
    %v2652 = vrot.slane %v101, %v2651
    %v2653 = vlaneseq
    %v2654 = vshrl.u32 %v2653, 7
    %v2655 = vsub.s32 3, %v2654
    %v2656 = vrot.slane %v102, %v2655
    %v2657 = vlaneseq
    %v2658 = vshrl.u32 %v2657, 7
    %v2659 = vsub.s32 3, %v2658
    %v2660 = vrot.slane %v103, %v2659
    %v2661 = vlaneseq
    %v2662 = vshrl.u32 %v2661, 7
    %v2663 = vsub.s32 3, %v2662
    %v2664 = vrot.slane %v104, %v2663
    %v2665 = vlaneseq
    %v2666 = vshrl.u32 %v2665, 7
    %v2667 = vsub.s32 3, %v2666
    %v2668 = vrot.slane %v105, %v2667
    %v2669 = vlaneseq
    %v2670 = vshrl.u32 %v2669, 7
    %v2671 = vsub.s32 3, %v2670
    %v2672 = vrot.slane %v106, %v2671
    %v2679 = vcombine.low %v2652, %v2656
    %v2680 = vcombine.low %v2660, %v2664
    %v2682 = vunpack.c.l.s4 1983009808
    %v2683 = vunpack.c.0.s8 %v2682
    %v2684 = vlaneseq
    %v2685 = vshrl.u32 %v2684, 7
    %v2686 = vsub.s32 %v2683, %v2685
    %v2687 = vrot.slane %v2679, %v2686
    %v2689 = vunpack.c.l.s4 1983009808
    %v2690 = vunpack.c.0.s8 %v2689
    %v2691 = vlaneseq
    %v2692 = vshrl.u32 %v2691, 7
    %v2693 = vsub.s32 %v2690, %v2692
    %v2694 = vrot.slane %v2680, %v2693
    %v2695 = vcombine.low %v2687, %v2694
    %v2696 = vcombine.low %v2668, %v2672
    %v2698 = vunpack.c.l.s4 1983009808
    %v2699 = vunpack.c.0.s8 %v2698
    %v2700 = vlaneseq
    %v2701 = vshrl.u32 %v2700, 7
    %v2702 = vsub.s32 %v2699, %v2701
    %v2703 = vrot.slane %v2696, %v2702
    %v2707 = vcombine.low %v2610, %v2611
    %v2709 = vunpack.c.l.s4 1983009808
    %v2710 = vunpack.c.0.s8 %v2709
    %v2711 = vlaneseq
    %v2712 = vshrl.u32 %v2711, 7
    %v2713 = vsub.s32 %v2710, %v2712
    %v2714 = vrot.slane %v2707, %v2713
    %v2716 = vunpack.c.l.s4 1983009808
    %v2717 = vunpack.c.0.s8 %v2716
    %v2718 = vlaneseq
    %v2719 = vshrl.u32 %v2718, 7
    %v2720 = vsub.s32 %v2717, %v2719
    %v2721 = vrot.slane %v2612, %v2720
    %v2722 = vcombine.low %v2714, %v2721
    %v2723 = vcombine.low %v2695, %v2695
    %v2724 = vcombine.high %v2695, %v2695
    %v2726 = vunpack.c.l.s4 1983009808
    %v2727 = vunpack.c.0.s8 %v2726
    %v2728 = vlaneseq
    %v2729 = vshrl.u32 %v2728, 7
    %v2730 = vsub.s32 %v2727, %v2729
    %v2731 = vrot.slane %v2723, %v2730
    %v2733 = vunpack.c.l.s4 1983009808
    %v2734 = vunpack.c.0.s8 %v2733
    %v2735 = vlaneseq
    %v2736 = vshrl.u32 %v2735, 7
    %v2737 = vsub.s32 %v2734, %v2736
    %v2738 = vrot.slane %v2724, %v2737
    %v2740 = vunpack.c.l.s4 1983009808
    %v2741 = vunpack.c.0.s8 %v2740
    %v2742 = vlaneseq
    %v2743 = vshrl.u32 %v2742, 7
    %v2744 = vsub.s32 %v2741, %v2743
    %v2745 = vrot.slane %v2695, %v2744
    %v2746 = vcombine.low %v2731, %v2745
    %v2747 = vcombine.high %v2731, %v2745
    %v2748 = vcombine.low %v2738, %v2738
    %v2749 = vcombine.high %v2738, %v2738
    %v2750 = vcombine.low %v2703, %v2703
    %v2752 = vunpack.c.l.s4 1983009808
    %v2753 = vunpack.c.0.s8 %v2752
    %v2754 = vlaneseq
    %v2755 = vshrl.u32 %v2754, 7
    %v2756 = vsub.s32 %v2753, %v2755
    %v2757 = vrot.slane %v2750, %v2756
    %v2759 = vunpack.c.l.s4 1983009808
    %v2760 = vunpack.c.0.s8 %v2759
    %v2761 = vlaneseq
    %v2762 = vshrl.u32 %v2761, 7
    %v2763 = vsub.s32 %v2760, %v2762
    %v2764 = vrot.slane %v2703, %v2763
    %v2765 = vcombine.low %v2757, %v2764
    %v2766 = vcombine.high %v2757, %v2764
    %v2773 = vsel %vm1588, %v2722, 0
    %2775 = vmatprep.subr.mxu0 %v2614
    %2776 = vmatpush1.msra.mxu0 %v2613
    %2777 = vmatprep.subr.mxu0 %v2620
    %2778 = vmatpush1.msra.mxu0 %v2619
    %2779 = vmatprep.subr.mxu0 %v2626
    %2780 = vmatpush1.msra.mxu0 %v2625
    %2781 = vmatprep.subr.mxu0 %v2632
    %2782 = vmatpush1.msra.mxu0 %v2631
    %2783 = vmatprep.subr.mxu0 %v2638
    %2784 = vmatpush1.msra.mxu0 %v2637
    %2785 = vmatprep.subr.mxu0 %v2644
    %2786 = vmatpush1.msra.mxu0 %v2643
    %2787 = vmatprep.subr.mxu0 0.0
    %2788 = vmatpush1.msra.mxu0 0.0
    %2789 = vmatprep.subr.mxu0 0.0
    %2790 = vmatpush1.msra.mxu0 0.0
    %2791 = vmatprep.subr.mxu0 0.0
    %2792 = vmatpush1.msra.mxu0 0.0
    %2793 = vmatprep.subr.mxu0 0.0
    %2794 = vmatpush1.msra.mxu0 0.0
    %2795 = vmatprep.subr.mxu0 0.0
    %2796 = vmatpush1.msra.mxu0 0.0
    %2797 = vmatprep.subr.mxu0 0.0
    %2798 = vmatpush1.msra.mxu0 0.0
    %2799 = vmatprep.subr.mxu0 0.0
    %2800 = vmatpush1.msra.mxu0 0.0
    %2801 = vmatprep.subr.mxu0 0.0
    %2802 = vmatpush1.msra.mxu0 0.0
    %2803 = vmatprep.subr.mxu0 0.0
    %2804 = vmatpush1.msra.mxu0 0.0
    %2805 = vmatprep.subr.mxu0 0.0
    %2806 = vmatpush1.msra.mxu0 0.0
    %2807 = vmatprep.subr.mxu0 0.0
    %2808 = vmatpush1.msra.mxu0 0.0
    %2809 = vmatprep.subr.mxu0 0.0
    %2810 = vmatpush1.msra.mxu0 0.0
    %2811 = vmatprep.subr.mxu0 0.0
    %2812 = vmatpush1.msra.mxu0 0.0
    %2813 = vmatprep.subr.mxu0 0.0
    %2814 = vmatpush1.msra.mxu0 0.0
    %2815 = vmatprep.subr.mxu0 0.0
    %2816 = vmatpush1.msra.mxu0 0.0
    %2817 = vmatprep.subr.mxu0 0.0
    %2818 = vmatpush1.msra.mxu0 0.0
    %2819 = vmatprep.subr.mxu0 0.0
    %2820 = vmatpush1.msra.mxu0 0.0
    %2821 = vmatprep.subr.mxu0 0.0
    %2822 = vmatpush1.msra.mxu0 0.0
    %2823 = vmatprep.subr.mxu0 0.0
    %2824 = vmatpush1.msra.mxu0 0.0
    %2825 = vmatprep.subr.mxu0 0.0
    %2826 = vmatpush1.msra.mxu0 0.0
    %2827 = vmatprep.subr.mxu0 0.0
    %2828 = vmatpush1.msra.mxu0 0.0
    %2829 = vmatprep.subr.mxu0 0.0
    %2830 = vmatpush1.msra.mxu0 0.0
    %2831 = vmatprep.subr.mxu0 0.0
    %2832 = vmatpush1.msra.mxu0 0.0
    %2833 = vmatprep.subr.mxu0 0.0
    %2834 = vmatpush1.msra.mxu0 0.0
    %2835 = vmatprep.subr.mxu0 0.0
    %2836 = vmatpush1.msra.mxu0 0.0
    %2837 = vmatprep.subr.mxu0 0.0
    %2838 = vmatpush1.msra.mxu0 0.0
    %2839 = vmatprep.mubr.f32.mxu0 0.0
    %2840 = vmatmul.mubr.f32.gmra.mrb[0].mxu0 %v2773
    %v2841 = vpop.f32.mrb[0].mxu0
    %v2842 = vadd.f32 %v2746, %v2841
    %v2843 = vpop.f32.mrb[0].mxu0
    %v2844 = vadd.f32 %v2747, %v2843
    %2845 = vdwg.mxu0
    %2846 = vmatprep.subr.mxu0 %v2616
    %2847 = vmatpush1.msra.mxu0 %v2615
    %2848 = vmatprep.subr.mxu0 %v2622
    %2849 = vmatpush1.msra.mxu0 %v2621
    %2850 = vmatprep.subr.mxu0 %v2628
    %2851 = vmatpush1.msra.mxu0 %v2627
    %2852 = vmatprep.subr.mxu0 %v2634
    %2853 = vmatpush1.msra.mxu0 %v2633
    %2854 = vmatprep.subr.mxu0 %v2640
    %2855 = vmatpush1.msra.mxu0 %v2639
    %2856 = vmatprep.subr.mxu0 %v2646
    %2857 = vmatpush1.msra.mxu0 %v2645
    %2858 = vmatprep.subr.mxu0 0.0
    %2859 = vmatpush1.msra.mxu0 0.0
    %2860 = vmatprep.subr.mxu0 0.0
    %2861 = vmatpush1.msra.mxu0 0.0
    %2862 = vmatprep.subr.mxu0 0.0
    %2863 = vmatpush1.msra.mxu0 0.0
    %2864 = vmatprep.subr.mxu0 0.0
    %2865 = vmatpush1.msra.mxu0 0.0
    %2866 = vmatprep.subr.mxu0 0.0
    %2867 = vmatpush1.msra.mxu0 0.0
    %2868 = vmatprep.subr.mxu0 0.0
    %2869 = vmatpush1.msra.mxu0 0.0
    %2870 = vmatprep.subr.mxu0 0.0
    %2871 = vmatpush1.msra.mxu0 0.0
    %2872 = vmatprep.subr.mxu0 0.0
    %2873 = vmatpush1.msra.mxu0 0.0
    %2874 = vmatprep.subr.mxu0 0.0
    %2875 = vmatpush1.msra.mxu0 0.0
    %2876 = vmatprep.subr.mxu0 0.0
    %2877 = vmatpush1.msra.mxu0 0.0
    %2878 = vmatprep.subr.mxu0 0.0
    %2879 = vmatpush1.msra.mxu0 0.0
    %2880 = vmatprep.subr.mxu0 0.0
    %2881 = vmatpush1.msra.mxu0 0.0
    %2882 = vmatprep.subr.mxu0 0.0
    %2883 = vmatpush1.msra.mxu0 0.0
    %2884 = vmatprep.subr.mxu0 0.0
    %2885 = vmatpush1.msra.mxu0 0.0
    %2886 = vmatprep.subr.mxu0 0.0
    %2887 = vmatpush1.msra.mxu0 0.0
    %2888 = vmatprep.subr.mxu0 0.0
    %2889 = vmatpush1.msra.mxu0 0.0
    %2890 = vmatprep.subr.mxu0 0.0
    %2891 = vmatpush1.msra.mxu0 0.0
    %2892 = vmatprep.subr.mxu0 0.0
    %2893 = vmatpush1.msra.mxu0 0.0
    %2894 = vmatprep.subr.mxu0 0.0
    %2895 = vmatpush1.msra.mxu0 0.0
    %2896 = vmatprep.subr.mxu0 0.0
    %2897 = vmatpush1.msra.mxu0 0.0
    %2898 = vmatprep.subr.mxu0 0.0
    %2899 = vmatpush1.msra.mxu0 0.0
    %2900 = vmatprep.subr.mxu0 0.0
    %2901 = vmatpush1.msra.mxu0 0.0
    %2902 = vmatprep.subr.mxu0 0.0
    %2903 = vmatpush1.msra.mxu0 0.0
    %2904 = vmatprep.subr.mxu0 0.0
    %2905 = vmatpush1.msra.mxu0 0.0
    %2906 = vmatprep.subr.mxu0 0.0
    %2907 = vmatpush1.msra.mxu0 0.0
    %2908 = vmatprep.subr.mxu0 0.0
    %2909 = vmatpush1.msra.mxu0 0.0
    %2910 = vmatprep.mubr.f32.mxu0 0.0
    %2911 = vmatmul.mubr.f32.gmra.mrb[0].mxu0 %v2773
    %v2912 = vpop.f32.mrb[0].mxu0
    %v2913 = vadd.f32 %v2748, %v2912
    %v2914 = vpop.f32.mrb[0].mxu0
    %v2915 = vadd.f32 %v2749, %v2914
    %2916 = vdwg.mxu0
    %2917 = vmatprep.subr.mxu0 %v2618
    %2918 = vmatpush1.msra.mxu0 %v2617
    %2919 = vmatprep.subr.mxu0 %v2624
    %2920 = vmatpush1.msra.mxu0 %v2623
    %2921 = vmatprep.subr.mxu0 %v2630
    %2922 = vmatpush1.msra.mxu0 %v2629
    %2923 = vmatprep.subr.mxu0 %v2636
    %2924 = vmatpush1.msra.mxu0 %v2635
    %2925 = vmatprep.subr.mxu0 %v2642
    %2926 = vmatpush1.msra.mxu0 %v2641
    %2927 = vmatprep.subr.mxu0 %v2648
    %2928 = vmatpush1.msra.mxu0 %v2647
    %2929 = vmatprep.subr.mxu0 0.0
    %2930 = vmatpush1.msra.mxu0 0.0
    %2931 = vmatprep.subr.mxu0 0.0
    %2932 = vmatpush1.msra.mxu0 0.0
    %2933 = vmatprep.subr.mxu0 0.0
    %2934 = vmatpush1.msra.mxu0 0.0
    %2935 = vmatprep.subr.mxu0 0.0
    %2936 = vmatpush1.msra.mxu0 0.0
    %2937 = vmatprep.subr.mxu0 0.0
    %2938 = vmatpush1.msra.mxu0 0.0
    %2939 = vmatprep.subr.mxu0 0.0
    %2940 = vmatpush1.msra.mxu0 0.0
    %2941 = vmatprep.subr.mxu0 0.0
    %2942 = vmatpush1.msra.mxu0 0.0
    %2943 = vmatprep.subr.mxu0 0.0
    %2944 = vmatpush1.msra.mxu0 0.0
    %2945 = vmatprep.subr.mxu0 0.0
    %2946 = vmatpush1.msra.mxu0 0.0
    %2947 = vmatprep.subr.mxu0 0.0
    %2948 = vmatpush1.msra.mxu0 0.0
    %2949 = vmatprep.subr.mxu0 0.0
    %2950 = vmatpush1.msra.mxu0 0.0
    %2951 = vmatprep.subr.mxu0 0.0
    %2952 = vmatpush1.msra.mxu0 0.0
    %2953 = vmatprep.subr.mxu0 0.0
    %2954 = vmatpush1.msra.mxu0 0.0
    %2955 = vmatprep.subr.mxu0 0.0
    %2956 = vmatpush1.msra.mxu0 0.0
    %2957 = vmatprep.subr.mxu0 0.0
    %2958 = vmatpush1.msra.mxu0 0.0
    %2959 = vmatprep.subr.mxu0 0.0
    %2960 = vmatpush1.msra.mxu0 0.0
    %2961 = vmatprep.subr.mxu0 0.0
    %2962 = vmatpush1.msra.mxu0 0.0
    %2963 = vmatprep.subr.mxu0 0.0
    %2964 = vmatpush1.msra.mxu0 0.0
    %2965 = vmatprep.subr.mxu0 0.0
    %2966 = vmatpush1.msra.mxu0 0.0
    %2967 = vmatprep.subr.mxu0 0.0
    %2968 = vmatpush1.msra.mxu0 0.0
    %2969 = vmatprep.subr.mxu0 0.0
    %2970 = vmatpush1.msra.mxu0 0.0
    %2971 = vmatprep.subr.mxu0 0.0
    %2972 = vmatpush1.msra.mxu0 0.0
    %2973 = vmatprep.subr.mxu0 0.0
    %2974 = vmatpush1.msra.mxu0 0.0
    %2975 = vmatprep.subr.mxu0 0.0
    %2976 = vmatpush1.msra.mxu0 0.0
    %2977 = vmatprep.subr.mxu0 0.0
    %2978 = vmatpush1.msra.mxu0 0.0
    %2979 = vmatprep.subr.mxu0 0.0
    %2980 = vmatpush1.msra.mxu0 0.0
    %2981 = vmatprep.mubr.f32.mxu0 0.0
    %2982 = vmatmul.mubr.f32.gmra.mrb[0].mxu0 %v2773
    %v2983 = vpop.f32.mrb[0].mxu0
    %v2984 = vadd.f32 %v2765, %v2983
    %v2985 = vpop.f32.mrb[0].mxu0
    %v2986 = vadd.f32 %v2766, %v2985
    %2987 = vdwg.mxu0
    %v2994 = vcombine.low %v2842, %v2844
    %v2995 = vcombine.high %v2842, %v2844
    %v2996 = vcombine.low %v2913, %v2915
    %v2997 = vcombine.high %v2913, %v2915
    %v2999 = vunpack.c.l.s4 1983009808
    %v3000 = vunpack.c.0.s8 %v2999
    %v3001 = vlaneseq
    %v3002 = vshrl.u32 %v3001, 7
    %v3003 = vsub.s32 %v3000, %v3002
    %v3004 = vrot.slane %v2994, %v3003
    %v3006 = vunpack.c.l.s4 1983009808
    %v3007 = vunpack.c.0.s8 %v3006
    %v3008 = vlaneseq
    %v3009 = vshrl.u32 %v3008, 7
    %v3010 = vsub.s32 %v3007, %v3009
    %v3011 = vrot.slane %v2995, %v3010
    %v3013 = vunpack.c.l.s4 1983009808
    %v3014 = vunpack.c.0.s8 %v3013
    %v3015 = vlaneseq
    %v3016 = vshrl.u32 %v3015, 7
    %v3017 = vsub.s32 %v3014, %v3016
    %v3018 = vrot.slane %v2996, %v3017
    %v3020 = vunpack.c.l.s4 1983009808
    %v3021 = vunpack.c.0.s8 %v3020
    %v3022 = vlaneseq
    %v3023 = vshrl.u32 %v3022, 7
    %v3024 = vsub.s32 %v3021, %v3023
    %v3025 = vrot.slane %v2997, %v3024
    %v3026 = vcombine.low %v3004, %v3018
    %v3027 = vcombine.high %v3004, %v3018
    %v3028 = vcombine.low %v3011, %v3025
    %v3029 = vcombine.low %v2984, %v2986
    %v3030 = vcombine.high %v2984, %v2986
    %v3032 = vunpack.c.l.s4 1983009808
    %v3033 = vunpack.c.0.s8 %v3032
    %v3034 = vlaneseq
    %v3035 = vshrl.u32 %v3034, 7
    %v3036 = vsub.s32 %v3033, %v3035
    %v3037 = vrot.slane %v3029, %v3036
    %v3039 = vunpack.c.l.s4 1983009808
    %v3040 = vunpack.c.0.s8 %v3039
    %v3041 = vlaneseq
    %v3042 = vshrl.u32 %v3041, 7
    %v3043 = vsub.s32 %v3040, %v3042
    %v3044 = vrot.slane %v3030, %v3043
    %v3045 = vcombine.high %v3037, %v3037
    %v3052 = vld [vmem:[%s4] sm:$0xff]
    %v3053 = vld [vmem:[%s4 + $0x8] sm:$0xff]
    %v3054 = vld [vmem:[%s4 + $0x10] sm:$0xff]
    %v3055 = vld [vmem:[%s4 + $0x18] sm:$0xff]
    %v3056 = vld [vmem:[%s4 + $0x20] sm:$0xff]
    %v3057 = vld [vmem:[%s4 + $0x28] sm:$0xff]
    %v3058 = vld [vmem:[%s4 + $0x30] sm:$0xff]
    %v3059 = vld [vmem:[%s4 + $0x38] sm:$0xff]
    %v3060 = vld [vmem:[%s4 + $0x40] sm:$0xff]
    %v3061 = vld [vmem:[%s4 + $0x48] sm:$0xff]
    %v3062 = vld [vmem:[%s4 + $0x50] sm:$0xff]
    %v3063 = vld [vmem:[%s4 + $0x58] sm:$0xff]
    %v3064 = vld [vmem:[%s4 + $0x60] sm:$0xff]
    %v3065 = vld [vmem:[%s4 + $0x68] sm:$0xff]
    %v3066 = vld [vmem:[%s4 + $0x70] sm:$0xff]
    %v3067 = vld [vmem:[%s4 + $0x78] sm:$0xff]
    %v3068 = vld [vmem:[%s4 + $0x80] sm:$0xff]
    %v3069 = vld [vmem:[%s4 + $0x88] sm:$0xff]
    %v3070 = vld [vmem:[%s4 + $0x90] sm:$0xff]
    %v3071 = vld [vmem:[%s4 + $0x98] sm:$0xff]
    %v3072 = vld [vmem:[%s4 + $0xa0] sm:$0xff]
    %v3073 = vld [vmem:[%s4 + $0xa8] sm:$0xff]
    %v3074 = vld [vmem:[%s4 + $0xb0] sm:$0xff]
    %v3075 = vld [vmem:[%s4 + $0xb8] sm:$0xff]
    %v3076 = vld [vmem:[%s4 + $0xc0] sm:$0xff]
    %v3077 = vld [vmem:[%s4 + $0xc8] sm:$0xff]
    %v3078 = vld [vmem:[%s4 + $0xd0] sm:$0xff]
    %v3079 = vld [vmem:[%s4 + $0xd8] sm:$0xff]
    %v3080 = vld [vmem:[%s4 + $0xe0] sm:$0xff]
    %v3081 = vld [vmem:[%s4 + $0xe8] sm:$0xff]
    %v3082 = vld [vmem:[%s4 + $0xf0] sm:$0xff]
    %v3083 = vld [vmem:[%s4 + $0xf8] sm:$0xff]
    %v3084 = vld [vmem:[%s4 + $0x100] sm:$0xff]
    %v3085 = vld [vmem:[%s4 + $0x108] sm:$0xff]
    %v3086 = vld [vmem:[%s4 + $0x110] sm:$0xff]
    %v3087 = vld [vmem:[%s4 + $0x118] sm:$0xff]
    %v3088 = vld [vmem:[%s4 + $0x120] sm:$0xff]
    %v3089 = vld [vmem:[%s4 + $0x128] sm:$0xff]
    %v3090 = vld [vmem:[%s4 + $0x130] sm:$0xff]
    %v3091 = vld [vmem:[%s4 + $0x138] sm:$0xff]
    %v3092 = vld [vmem:[%s4 + $0x140] sm:$0xff]
    %v3093 = vld [vmem:[%s4 + $0x148] sm:$0xff]
    %v3094 = vld [vmem:[%s4 + $0x150] sm:$0xff]
    %v3095 = vld [vmem:[%s4 + $0x158] sm:$0xff]
    %v3096 = vld [vmem:[%s4 + $0x160] sm:$0xff]
    %v3097 = vld [vmem:[%s4 + $0x168] sm:$0xff]
    %v3098 = vld [vmem:[%s4 + $0x170] sm:$0xff]
    %v3099 = vld [vmem:[%s4 + $0x178] sm:$0xff]
    %v3100 = vld [vmem:[%s4 + $0x180] sm:$0xff]
    %v3101 = vld [vmem:[%s4 + $0x188] sm:$0xff]
    %v3102 = vld [vmem:[%s4 + $0x190] sm:$0xff]
    %v3103 = vld [vmem:[%s4 + $0x198] sm:$0xff]
    %v3104 = vld [vmem:[%s4 + $0x1a0] sm:$0xff]
    %v3105 = vld [vmem:[%s4 + $0x1a8] sm:$0xff]
    %v3106 = vld [vmem:[%s4 + $0x1b0] sm:$0xff]
    %v3107 = vld [vmem:[%s4 + $0x1b8] sm:$0xff]
    %v3108 = vld [vmem:[%s4 + $0x1c0] sm:$0xff]
    %v3109 = vld [vmem:[%s4 + $0x1c8] sm:$0xff]
    %v3110 = vld [vmem:[%s4 + $0x1d0] sm:$0xff]
    %v3111 = vld [vmem:[%s4 + $0x1d8] sm:$0xff]
    %v3112 = vld [vmem:[%s4 + $0x1e0] sm:$0xff]
    %v3113 = vld [vmem:[%s4 + $0x1e8] sm:$0xff]
    %v3114 = vld [vmem:[%s4 + $0x1f0] sm:$0xff]
    %v3115 = vld [vmem:[%s4 + $0x1f8] sm:$0xff]
    %v3116 = vld [vmem:[%s4 + $0x200] sm:$0xff]
    %v3117 = vld [vmem:[%s4 + $0x208] sm:$0xff]
    %v3118 = vld [vmem:[%s4 + $0x210] sm:$0xff]
    %v3119 = vld [vmem:[%s4 + $0x218] sm:$0xff]
    %v3120 = vld [vmem:[%s4 + $0x220] sm:$0xff]
    %v3121 = vld [vmem:[%s4 + $0x228] sm:$0xff]
    %v3122 = vld [vmem:[%s4 + $0x230] sm:$0xff]
    %v3123 = vld [vmem:[%s4 + $0x238] sm:$0xff]
    %v3124 = vld [vmem:[%s4 + $0x240] sm:$0xff]
    %v3125 = vld [vmem:[%s4 + $0x248] sm:$0xff]
    %v3126 = vld [vmem:[%s4 + $0x250] sm:$0xff]
    %v3127 = vld [vmem:[%s4 + $0x258] sm:$0xff]
    %v3128 = vld [vmem:[%s4 + $0x260] sm:$0xff]
    %v3129 = vld [vmem:[%s4 + $0x268] sm:$0xff]
    %v3130 = vld [vmem:[%s4 + $0x270] sm:$0xff]
    %v3131 = vld [vmem:[%s4 + $0x278] sm:$0xff]
    %v3132 = vld [vmem:[%s4 + $0x280] sm:$0xff]
    %v3133 = vld [vmem:[%s4 + $0x288] sm:$0xff]
    %v3134 = vld [vmem:[%s4 + $0x290] sm:$0xff]
    %v3135 = vld [vmem:[%s4 + $0x298] sm:$0xff]
    %v3136 = vld [vmem:[%s4 + $0x2a0] sm:$0xff]
    %v3137 = vld [vmem:[%s4 + $0x2a8] sm:$0xff]
    %v3138 = vld [vmem:[%s4 + $0x2b0] sm:$0xff]
    %v3139 = vld [vmem:[%s4 + $0x2b8] sm:$0xff]
    %v3140 = vld [vmem:[%s4 + $0x2c0] sm:$0xff]
    %v3141 = vld [vmem:[%s4 + $0x2c8] sm:$0xff]
    %v3142 = vld [vmem:[%s4 + $0x2d0] sm:$0xff]
    %v3143 = vld [vmem:[%s4 + $0x2d8] sm:$0xff]
    %v3144 = vld [vmem:[%s4 + $0x2e0] sm:$0xff]
    %v3145 = vld [vmem:[%s4 + $0x2e8] sm:$0xff]
    %v3146 = vld [vmem:[%s4 + $0x2f0] sm:$0xff]
    %v3147 = vld [vmem:[%s4 + $0x2f8] sm:$0xff]
    %v3148 = vld [vmem:[%s4 + $0x300] sm:$0xff]
    %v3149 = vld [vmem:[%s4 + $0x308] sm:$0xff]
    %v3150 = vld [vmem:[%s4 + $0x310] sm:$0xff]
    %v3151 = vld [vmem:[%s4 + $0x318] sm:$0xff]
    %v3152 = vld [vmem:[%s4 + $0x320] sm:$0xff]
    %v3153 = vld [vmem:[%s4 + $0x328] sm:$0xff]
    %v3154 = vld [vmem:[%s4 + $0x330] sm:$0xff]
    %v3155 = vld [vmem:[%s4 + $0x338] sm:$0xff]
    %v3156 = vld [vmem:[%s4 + $0x340] sm:$0xff]
    %v3157 = vld [vmem:[%s4 + $0x348] sm:$0xff]
    %v3158 = vld [vmem:[%s4 + $0x350] sm:$0xff]
    %v3159 = vld [vmem:[%s4 + $0x358] sm:$0xff]
    %v3160 = vld [vmem:[%s4 + $0x360] sm:$0xff]
    %v3161 = vld [vmem:[%s4 + $0x368] sm:$0xff]
    %v3162 = vld [vmem:[%s4 + $0x370] sm:$0xff]
    %v3163 = vld [vmem:[%s4 + $0x378] sm:$0xff]
    %v3164 = vld [vmem:[%s4 + $0x380] sm:$0xff]
    %v3165 = vld [vmem:[%s4 + $0x388] sm:$0xff]
    %v3166 = vld [vmem:[%s4 + $0x390] sm:$0xff]
    %v3167 = vld [vmem:[%s4 + $0x398] sm:$0xff]
    %v3168 = vld [vmem:[%s4 + $0x3a0] sm:$0xff]
    %v3169 = vld [vmem:[%s4 + $0x3a8] sm:$0xff]
    %v3170 = vld [vmem:[%s4 + $0x3b0] sm:$0xff]
    %v3171 = vld [vmem:[%s4 + $0x3b8] sm:$0xff]
    %v3172 = vld [vmem:[%s4 + $0x3c0] sm:$0xff]
    %v3173 = vld [vmem:[%s4 + $0x3c8] sm:$0xff]
    %v3174 = vld [vmem:[%s4 + $0x3d0] sm:$0xff]
    %v3175 = vld [vmem:[%s4 + $0x3d8] sm:$0xff]
    %v3176 = vld [vmem:[%s4 + $0x3e0] sm:$0xff]
    %v3177 = vld [vmem:[%s4 + $0x3e8] sm:$0xff]
    %v3178 = vld [vmem:[%s4 + $0x3f0] sm:$0xff]
    %v3179 = vld [vmem:[%s4 + $0x3f8] sm:$0xff]
    %v3180 = vld [vmem:[%s4 + $0x400] sm:$0xff]
    %v3181 = vld [vmem:[%s4 + $0x408] sm:$0xff]
    %v3182 = vld [vmem:[%s4 + $0x410] sm:$0xff]
    %v3183 = vld [vmem:[%s4 + $0x418] sm:$0xff]
    %v3184 = vld [vmem:[%s4 + $0x420] sm:$0xff]
    %v3185 = vld [vmem:[%s4 + $0x428] sm:$0xff]
    %v3186 = vld [vmem:[%s4 + $0x430] sm:$0xff]
    %v3187 = vld [vmem:[%s4 + $0x438] sm:$0xff]
    %v3188 = vld [vmem:[%s4 + $0x440] sm:$0xff]
    %v3189 = vld [vmem:[%s4 + $0x448] sm:$0xff]
    %v3190 = vld [vmem:[%s4 + $0x450] sm:$0xff]
    %v3191 = vld [vmem:[%s4 + $0x458] sm:$0xff]
    %v3192 = vld [vmem:[%s4 + $0x460] sm:$0xff]
    %v3193 = vld [vmem:[%s4 + $0x468] sm:$0xff]
    %v3194 = vld [vmem:[%s4 + $0x470] sm:$0xff]
    %v3195 = vld [vmem:[%s4 + $0x478] sm:$0xff]
    %v3196 = vlaneseq
    %v3197 = vshrl.u32 %v3196, 7
    %v3198 = vsub.s32 4, %v3197
    %v3199 = vrot.slane %v101, %v3198
    %v3200 = vlaneseq
    %v3201 = vshrl.u32 %v3200, 7
    %v3202 = vsub.s32 4, %v3201
    %v3203 = vrot.slane %v102, %v3202
    %v3204 = vlaneseq
    %v3205 = vshrl.u32 %v3204, 7
    %v3206 = vsub.s32 4, %v3205
    %v3207 = vrot.slane %v103, %v3206
    %v3208 = vlaneseq
    %v3209 = vshrl.u32 %v3208, 7
    %v3210 = vsub.s32 4, %v3209
    %v3211 = vrot.slane %v104, %v3210
    %v3212 = vlaneseq
    %v3213 = vshrl.u32 %v3212, 7
    %v3214 = vsub.s32 4, %v3213
    %v3215 = vrot.slane %v105, %v3214
    %v3216 = vlaneseq
    %v3217 = vshrl.u32 %v3216, 7
    %v3218 = vsub.s32 4, %v3217
    %v3219 = vrot.slane %v106, %v3218
    %vm3220 = vcmask 523264
    %v3222 = vsel %vm3220, 0.0, 0
    %3224 = vmatprep.subr.mxu0 %v3053
    %3225 = vmatpush1.msra.mxu0 %v3052
    %3226 = vmatprep.subr.mxu0 %v3059
    %3227 = vmatpush1.msra.mxu0 %v3058
    %3228 = vmatprep.subr.mxu0 %v3065
    %3229 = vmatpush1.msra.mxu0 %v3064
    %3230 = vmatprep.subr.mxu0 %v3071
    %3231 = vmatpush1.msra.mxu0 %v3070
    %3232 = vmatprep.subr.mxu0 %v3077
    %3233 = vmatpush1.msra.mxu0 %v3076
    %3234 = vmatprep.subr.mxu0 %v3083
    %3235 = vmatpush1.msra.mxu0 %v3082
    %3236 = vmatprep.subr.mxu0 %v3089
    %3237 = vmatpush1.msra.mxu0 %v3088
    %3238 = vmatprep.subr.mxu0 %v3095
    %3239 = vmatpush1.msra.mxu0 %v3094
    %3240 = vmatprep.subr.mxu0 %v3101
    %3241 = vmatpush1.msra.mxu0 %v3100
    %3242 = vmatprep.subr.mxu0 %v3107
    %3243 = vmatpush1.msra.mxu0 %v3106
    %3244 = vmatprep.subr.mxu0 %v3113
    %3245 = vmatpush1.msra.mxu0 %v3112
    %3246 = vmatprep.subr.mxu0 %v3119
    %3247 = vmatpush1.msra.mxu0 %v3118
    %3248 = vmatprep.subr.mxu0 %v3125
    %3249 = vmatpush1.msra.mxu0 %v3124
    %3250 = vmatprep.subr.mxu0 %v3131
    %3251 = vmatpush1.msra.mxu0 %v3130
    %3252 = vmatprep.subr.mxu0 %v3137
    %3253 = vmatpush1.msra.mxu0 %v3136
    %3254 = vmatprep.subr.mxu0 %v3143
    %3255 = vmatpush1.msra.mxu0 %v3142
    %3256 = vmatprep.subr.mxu0 %v3149
    %3257 = vmatpush1.msra.mxu0 %v3148
    %3258 = vmatprep.subr.mxu0 %v3155
    %3259 = vmatpush1.msra.mxu0 %v3154
    %3260 = vmatprep.subr.mxu0 %v3161
    %3261 = vmatpush1.msra.mxu0 %v3160
    %3262 = vmatprep.subr.mxu0 %v3167
    %3263 = vmatpush1.msra.mxu0 %v3166
    %3264 = vmatprep.subr.mxu0 %v3173
    %3265 = vmatpush1.msra.mxu0 %v3172
    %3266 = vmatprep.subr.mxu0 %v3179
    %3267 = vmatpush1.msra.mxu0 %v3178
    %3268 = vmatprep.subr.mxu0 %v3185
    %3269 = vmatpush1.msra.mxu0 %v3184
    %3270 = vmatprep.subr.mxu0 %v3191
    %3271 = vmatpush1.msra.mxu0 %v3190
    %3272 = vmatprep.subr.mxu0 0.0
    %3273 = vmatpush1.msra.mxu0 0.0
    %3274 = vmatprep.subr.mxu0 0.0
    %3275 = vmatpush1.msra.mxu0 0.0
    %3276 = vmatprep.subr.mxu0 0.0
    %3277 = vmatpush1.msra.mxu0 0.0
    %3278 = vmatprep.subr.mxu0 0.0
    %3279 = vmatpush1.msra.mxu0 0.0
    %3280 = vmatprep.subr.mxu0 0.0
    %3281 = vmatpush1.msra.mxu0 0.0
    %3282 = vmatprep.subr.mxu0 0.0
    %3283 = vmatpush1.msra.mxu0 0.0
    %3284 = vmatprep.subr.mxu0 0.0
    %3285 = vmatpush1.msra.mxu0 0.0
    %3286 = vmatprep.subr.mxu0 0.0
    %3287 = vmatpush1.msra.mxu0 0.0
    %3288 = vmatprep.mubr.f32.mxu0 %v3222
    %3289 = vmatmul.mubr.f32.gmra.mrb[0].mxu0 0.0
    %v3290 = vpop.f32.mrb[0].mxu0
    %v3291 = vadd.f32 %v3199, %v3290
    %v3292 = vpop.f32.mrb[0].mxu0
    %v3293 = vadd.f32 %v3203, %v3292
    %3294 = vdwg.mxu0
    %3295 = vmatprep.subr.mxu0 %v3055
    %3296 = vmatpush1.msra.mxu0 %v3054
    %3297 = vmatprep.subr.mxu0 %v3061
    %3298 = vmatpush1.msra.mxu0 %v3060
    %3299 = vmatprep.subr.mxu0 %v3067
    %3300 = vmatpush1.msra.mxu0 %v3066
    %3301 = vmatprep.subr.mxu0 %v3073
    %3302 = vmatpush1.msra.mxu0 %v3072
    %3303 = vmatprep.subr.mxu0 %v3079
    %3304 = vmatpush1.msra.mxu0 %v3078
    %3305 = vmatprep.subr.mxu0 %v3085
    %3306 = vmatpush1.msra.mxu0 %v3084
    %3307 = vmatprep.subr.mxu0 %v3091
    %3308 = vmatpush1.msra.mxu0 %v3090
    %3309 = vmatprep.subr.mxu0 %v3097
    %3310 = vmatpush1.msra.mxu0 %v3096
    %3311 = vmatprep.subr.mxu0 %v3103
    %3312 = vmatpush1.msra.mxu0 %v3102
    %3313 = vmatprep.subr.mxu0 %v3109
    %3314 = vmatpush1.msra.mxu0 %v3108
    %3315 = vmatprep.subr.mxu0 %v3115
    %3316 = vmatpush1.msra.mxu0 %v3114
    %3317 = vmatprep.subr.mxu0 %v3121
    %3318 = vmatpush1.msra.mxu0 %v3120
    %3319 = vmatprep.subr.mxu0 %v3127
    %3320 = vmatpush1.msra.mxu0 %v3126
    %3321 = vmatprep.subr.mxu0 %v3133
    %3322 = vmatpush1.msra.mxu0 %v3132
    %3323 = vmatprep.subr.mxu0 %v3139
    %3324 = vmatpush1.msra.mxu0 %v3138
    %3325 = vmatprep.subr.mxu0 %v3145
    %3326 = vmatpush1.msra.mxu0 %v3144
    %3327 = vmatprep.subr.mxu0 %v3151
    %3328 = vmatpush1.msra.mxu0 %v3150
    %3329 = vmatprep.subr.mxu0 %v3157
    %3330 = vmatpush1.msra.mxu0 %v3156
    %3331 = vmatprep.subr.mxu0 %v3163
    %3332 = vmatpush1.msra.mxu0 %v3162
    %3333 = vmatprep.subr.mxu0 %v3169
    %3334 = vmatpush1.msra.mxu0 %v3168
    %3335 = vmatprep.subr.mxu0 %v3175
    %3336 = vmatpush1.msra.mxu0 %v3174
    %3337 = vmatprep.subr.mxu0 %v3181
    %3338 = vmatpush1.msra.mxu0 %v3180
    %3339 = vmatprep.subr.mxu0 %v3187
    %3340 = vmatpush1.msra.mxu0 %v3186
    %3341 = vmatprep.subr.mxu0 %v3193
    %3342 = vmatpush1.msra.mxu0 %v3192
    %3343 = vmatprep.subr.mxu0 0.0
    %3344 = vmatpush1.msra.mxu0 0.0
    %3345 = vmatprep.subr.mxu0 0.0
    %3346 = vmatpush1.msra.mxu0 0.0
    %3347 = vmatprep.subr.mxu0 0.0
    %3348 = vmatpush1.msra.mxu0 0.0
    %3349 = vmatprep.subr.mxu0 0.0
    %3350 = vmatpush1.msra.mxu0 0.0
    %3351 = vmatprep.subr.mxu0 0.0
    %3352 = vmatpush1.msra.mxu0 0.0
    %3353 = vmatprep.subr.mxu0 0.0
    %3354 = vmatpush1.msra.mxu0 0.0
    %3355 = vmatprep.subr.mxu0 0.0
    %3356 = vmatpush1.msra.mxu0 0.0
    %3357 = vmatprep.subr.mxu0 0.0
    %3358 = vmatpush1.msra.mxu0 0.0
    %3359 = vmatprep.mubr.f32.mxu0 %v3222
    %3360 = vmatmul.mubr.f32.gmra.mrb[0].mxu0 0.0
    %v3361 = vpop.f32.mrb[0].mxu0
    %v3362 = vadd.f32 %v3207, %v3361
    %v3363 = vpop.f32.mrb[0].mxu0
    %v3364 = vadd.f32 %v3211, %v3363
    %3365 = vdwg.mxu0
    %3366 = vmatprep.subr.mxu0 %v3057
    %3367 = vmatpush1.msra.mxu0 %v3056
    %3368 = vmatprep.subr.mxu0 %v3063
    %3369 = vmatpush1.msra.mxu0 %v3062
    %3370 = vmatprep.subr.mxu0 %v3069
    %3371 = vmatpush1.msra.mxu0 %v3068
    %3372 = vmatprep.subr.mxu0 %v3075
    %3373 = vmatpush1.msra.mxu0 %v3074
    %3374 = vmatprep.subr.mxu0 %v3081
    %3375 = vmatpush1.msra.mxu0 %v3080
    %3376 = vmatprep.subr.mxu0 %v3087
    %3377 = vmatpush1.msra.mxu0 %v3086
    %3378 = vmatprep.subr.mxu0 %v3093
    %3379 = vmatpush1.msra.mxu0 %v3092
    %3380 = vmatprep.subr.mxu0 %v3099
    %3381 = vmatpush1.msra.mxu0 %v3098
    %3382 = vmatprep.subr.mxu0 %v3105
    %3383 = vmatpush1.msra.mxu0 %v3104
    %3384 = vmatprep.subr.mxu0 %v3111
    %3385 = vmatpush1.msra.mxu0 %v3110
    %3386 = vmatprep.subr.mxu0 %v3117
    %3387 = vmatpush1.msra.mxu0 %v3116
    %3388 = vmatprep.subr.mxu0 %v3123
    %3389 = vmatpush1.msra.mxu0 %v3122
    %3390 = vmatprep.subr.mxu0 %v3129
    %3391 = vmatpush1.msra.mxu0 %v3128
    %3392 = vmatprep.subr.mxu0 %v3135
    %3393 = vmatpush1.msra.mxu0 %v3134
    %3394 = vmatprep.subr.mxu0 %v3141
    %3395 = vmatpush1.msra.mxu0 %v3140
    %3396 = vmatprep.subr.mxu0 %v3147
    %3397 = vmatpush1.msra.mxu0 %v3146
    %3398 = vmatprep.subr.mxu0 %v3153
    %3399 = vmatpush1.msra.mxu0 %v3152
    %3400 = vmatprep.subr.mxu0 %v3159
    %3401 = vmatpush1.msra.mxu0 %v3158
    %3402 = vmatprep.subr.mxu0 %v3165
    %3403 = vmatpush1.msra.mxu0 %v3164
    %3404 = vmatprep.subr.mxu0 %v3171
    %3405 = vmatpush1.msra.mxu0 %v3170
    %3406 = vmatprep.subr.mxu0 %v3177
    %3407 = vmatpush1.msra.mxu0 %v3176
    %3408 = vmatprep.subr.mxu0 %v3183
    %3409 = vmatpush1.msra.mxu0 %v3182
    %3410 = vmatprep.subr.mxu0 %v3189
    %3411 = vmatpush1.msra.mxu0 %v3188
    %3412 = vmatprep.subr.mxu0 %v3195
    %3413 = vmatpush1.msra.mxu0 %v3194
    %3414 = vmatprep.subr.mxu0 0.0
    %3415 = vmatpush1.msra.mxu0 0.0
    %3416 = vmatprep.subr.mxu0 0.0
    %3417 = vmatpush1.msra.mxu0 0.0
    %3418 = vmatprep.subr.mxu0 0.0
    %3419 = vmatpush1.msra.mxu0 0.0
    %3420 = vmatprep.subr.mxu0 0.0
    %3421 = vmatpush1.msra.mxu0 0.0
    %3422 = vmatprep.subr.mxu0 0.0
    %3423 = vmatpush1.msra.mxu0 0.0
    %3424 = vmatprep.subr.mxu0 0.0
    %3425 = vmatpush1.msra.mxu0 0.0
    %3426 = vmatprep.subr.mxu0 0.0
    %3427 = vmatpush1.msra.mxu0 0.0
    %3428 = vmatprep.subr.mxu0 0.0
    %3429 = vmatpush1.msra.mxu0 0.0
    %3430 = vmatprep.mubr.f32.mxu0 %v3222
    %3431 = vmatmul.mubr.f32.gmra.mrb[0].mxu0 0.0
    %v3432 = vpop.f32.mrb[0].mxu0
    %v3433 = vadd.f32 %v3215, %v3432
    %v3434 = vpop.f32.mrb[0].mxu0
    %v3435 = vadd.f32 %v3219, %v3434
    %3436 = vdwg.mxu0
    %v3439 = vcombine.low %v3291, %v3293
    %v3441 = vunpack.c.l.s4 1983009808
    %v3442 = vunpack.c.0.s8 %v3441
    %v3443 = vlaneseq
    %v3444 = vshrl.u32 %v3443, 7
    %v3445 = vsub.s32 %v3442, %v3444
    %v3446 = vrot.slane %v3439, %v3445
    %v3448 = vadd.f32 %v3026, %v3446
    %v3449 = vxor.u32 %v3448, 2147483648
    %v3450 = vmul.f32 %v3449, 1.442695
    %v3451 = vpow.pop %v3450
    %v3452 = vadd.f32 %v3451, 1.0
    %v3453 = vrcp.pop %v3452
    %v3454 = vmul.f32 1.0, %v3453
    %v3455 = vrot.slane %v3026, 4
    %v3459 = vcombine.low %v3362, %v3364
    %v3461 = vunpack.c.l.s4 1983009808
    %v3462 = vunpack.c.0.s8 %v3461
    %v3463 = vlaneseq
    %v3464 = vshrl.u32 %v3463, 7
    %v3465 = vsub.s32 %v3462, %v3464
    %v3466 = vrot.slane %v3459, %v3465
    %v3468 = vadd.f32 %v3455, %v3466
    %v3469 = vxor.u32 %v3468, 2147483648
    %v3470 = vmul.f32 %v3469, 1.442695
    %v3471 = vpow.pop %v3470
    %v3472 = vadd.f32 %v3471, 1.0
    %v3473 = vrcp.pop %v3472
    %v3474 = vmul.f32 1.0, %v3473
    %v3477 = vcombine.low %v3433, %v3435
    %v3479 = vunpack.c.l.s4 1983009808
    %v3480 = vunpack.c.0.s8 %v3479
    %v3481 = vlaneseq
    %v3482 = vshrl.u32 %v3481, 7
    %v3483 = vsub.s32 %v3480, %v3482
    %v3484 = vrot.slane %v3477, %v3483
    %v3486 = vmul.f32 %v3454, %v3484
    %v3487 = vadd.f32 %v3037, %v3486
    %v3488 = vtanh.pop %v3487
    %v3489 = vsub.f32 1.0, %v3474
    %v3490 = vmul.f32 %v3489, %v3488
    %v3491 = vmul.f32 %v3474, 0.0
    %v3492 = vadd.f32 %v3490, %v3491
    %v3495 = vunpack.c.l.s4 1983009808
    %v3496 = vunpack.c.0.s8 %v3495
    %v3497 = vlaneseq
    %v3498 = vshrl.u32 %v3497, 7
    %v3499 = vsub.s32 %v3496, %v3498
    %v3500 = vrot.slane %v3492, %v3499
    %v3501 = vcombine.high %v3500, %v3500
    %v3503 = vsel %vm3220, %v3501, 0
    %3505 = vmatprep.subr.mxu0 %v3053
    %3506 = vmatpush1.msra.mxu0 %v3052
    %3507 = vmatprep.subr.mxu0 %v3059
    %3508 = vmatpush1.msra.mxu0 %v3058
    %3509 = vmatprep.subr.mxu0 %v3065
    %3510 = vmatpush1.msra.mxu0 %v3064
    %3511 = vmatprep.subr.mxu0 %v3071
    %3512 = vmatpush1.msra.mxu0 %v3070
    %3513 = vmatprep.subr.mxu0 %v3077
    %3514 = vmatpush1.msra.mxu0 %v3076
    %3515 = vmatprep.subr.mxu0 %v3083
    %3516 = vmatpush1.msra.mxu0 %v3082
    %3517 = vmatprep.subr.mxu0 %v3089
    %3518 = vmatpush1.msra.mxu0 %v3088
    %3519 = vmatprep.subr.mxu0 %v3095
    %3520 = vmatpush1.msra.mxu0 %v3094
    %3521 = vmatprep.subr.mxu0 %v3101
    %3522 = vmatpush1.msra.mxu0 %v3100
    %3523 = vmatprep.subr.mxu0 %v3107
    %3524 = vmatpush1.msra.mxu0 %v3106
    %3525 = vmatprep.subr.mxu0 %v3113
    %3526 = vmatpush1.msra.mxu0 %v3112
    %3527 = vmatprep.subr.mxu0 %v3119
    %3528 = vmatpush1.msra.mxu0 %v3118
    %3529 = vmatprep.subr.mxu0 %v3125
    %3530 = vmatpush1.msra.mxu0 %v3124
    %3531 = vmatprep.subr.mxu0 %v3131
    %3532 = vmatpush1.msra.mxu0 %v3130
    %3533 = vmatprep.subr.mxu0 %v3137
    %3534 = vmatpush1.msra.mxu0 %v3136
    %3535 = vmatprep.subr.mxu0 %v3143
    %3536 = vmatpush1.msra.mxu0 %v3142
    %3537 = vmatprep.subr.mxu0 %v3149
    %3538 = vmatpush1.msra.mxu0 %v3148
    %3539 = vmatprep.subr.mxu0 %v3155
    %3540 = vmatpush1.msra.mxu0 %v3154
    %3541 = vmatprep.subr.mxu0 %v3161
    %3542 = vmatpush1.msra.mxu0 %v3160
    %3543 = vmatprep.subr.mxu0 %v3167
    %3544 = vmatpush1.msra.mxu0 %v3166
    %3545 = vmatprep.subr.mxu0 %v3173
    %3546 = vmatpush1.msra.mxu0 %v3172
    %3547 = vmatprep.subr.mxu0 %v3179
    %3548 = vmatpush1.msra.mxu0 %v3178
    %3549 = vmatprep.subr.mxu0 %v3185
    %3550 = vmatpush1.msra.mxu0 %v3184
    %3551 = vmatprep.subr.mxu0 %v3191
    %3552 = vmatpush1.msra.mxu0 %v3190
    %3553 = vmatprep.subr.mxu0 0.0
    %3554 = vmatpush1.msra.mxu0 0.0
    %3555 = vmatprep.subr.mxu0 0.0
    %3556 = vmatpush1.msra.mxu0 0.0
    %3557 = vmatprep.subr.mxu0 0.0
    %3558 = vmatpush1.msra.mxu0 0.0
    %3559 = vmatprep.subr.mxu0 0.0
    %3560 = vmatpush1.msra.mxu0 0.0
    %3561 = vmatprep.subr.mxu0 0.0
    %3562 = vmatpush1.msra.mxu0 0.0
    %3563 = vmatprep.subr.mxu0 0.0
    %3564 = vmatpush1.msra.mxu0 0.0
    %3565 = vmatprep.subr.mxu0 0.0
    %3566 = vmatpush1.msra.mxu0 0.0
    %3567 = vmatprep.subr.mxu0 0.0
    %3568 = vmatpush1.msra.mxu0 0.0
    %3569 = vmatprep.mubr.f32.mxu0 %v3503
    %3570 = vmatmul.mubr.f32.gmra.mrb[0].mxu0 %v3500
    %v3571 = vpop.f32.mrb[0].mxu0
    %v3572 = vadd.f32 %v3199, %v3571
    %v3573 = vpop.f32.mrb[0].mxu0
    %v3574 = vadd.f32 %v3203, %v3573
    %3575 = vdwg.mxu0
    %3576 = vmatprep.subr.mxu0 %v3055
    %3577 = vmatpush1.msra.mxu0 %v3054
    %3578 = vmatprep.subr.mxu0 %v3061
    %3579 = vmatpush1.msra.mxu0 %v3060
    %3580 = vmatprep.subr.mxu0 %v3067
    %3581 = vmatpush1.msra.mxu0 %v3066
    %3582 = vmatprep.subr.mxu0 %v3073
    %3583 = vmatpush1.msra.mxu0 %v3072
    %3584 = vmatprep.subr.mxu0 %v3079
    %3585 = vmatpush1.msra.mxu0 %v3078
    %3586 = vmatprep.subr.mxu0 %v3085
    %3587 = vmatpush1.msra.mxu0 %v3084
    %3588 = vmatprep.subr.mxu0 %v3091
    %3589 = vmatpush1.msra.mxu0 %v3090
    %3590 = vmatprep.subr.mxu0 %v3097
    %3591 = vmatpush1.msra.mxu0 %v3096
    %3592 = vmatprep.subr.mxu0 %v3103
    %3593 = vmatpush1.msra.mxu0 %v3102
    %3594 = vmatprep.subr.mxu0 %v3109
    %3595 = vmatpush1.msra.mxu0 %v3108
    %3596 = vmatprep.subr.mxu0 %v3115
    %3597 = vmatpush1.msra.mxu0 %v3114
    %3598 = vmatprep.subr.mxu0 %v3121
    %3599 = vmatpush1.msra.mxu0 %v3120
    %3600 = vmatprep.subr.mxu0 %v3127
    %3601 = vmatpush1.msra.mxu0 %v3126
    %3602 = vmatprep.subr.mxu0 %v3133
    %3603 = vmatpush1.msra.mxu0 %v3132
    %3604 = vmatprep.subr.mxu0 %v3139
    %3605 = vmatpush1.msra.mxu0 %v3138
    %3606 = vmatprep.subr.mxu0 %v3145
    %3607 = vmatpush1.msra.mxu0 %v3144
    %3608 = vmatprep.subr.mxu0 %v3151
    %3609 = vmatpush1.msra.mxu0 %v3150
    %3610 = vmatprep.subr.mxu0 %v3157
    %3611 = vmatpush1.msra.mxu0 %v3156
    %3612 = vmatprep.subr.mxu0 %v3163
    %3613 = vmatpush1.msra.mxu0 %v3162
    %3614 = vmatprep.subr.mxu0 %v3169
    %3615 = vmatpush1.msra.mxu0 %v3168
    %3616 = vmatprep.subr.mxu0 %v3175
    %3617 = vmatpush1.msra.mxu0 %v3174
    %3618 = vmatprep.subr.mxu0 %v3181
    %3619 = vmatpush1.msra.mxu0 %v3180
    %3620 = vmatprep.subr.mxu0 %v3187
    %3621 = vmatpush1.msra.mxu0 %v3186
    %3622 = vmatprep.subr.mxu0 %v3193
    %3623 = vmatpush1.msra.mxu0 %v3192
    %3624 = vmatprep.subr.mxu0 0.0
    %3625 = vmatpush1.msra.mxu0 0.0
    %3626 = vmatprep.subr.mxu0 0.0
    %3627 = vmatpush1.msra.mxu0 0.0
    %3628 = vmatprep.subr.mxu0 0.0
    %3629 = vmatpush1.msra.mxu0 0.0
    %3630 = vmatprep.subr.mxu0 0.0
    %3631 = vmatpush1.msra.mxu0 0.0
    %3632 = vmatprep.subr.mxu0 0.0
    %3633 = vmatpush1.msra.mxu0 0.0
    %3634 = vmatprep.subr.mxu0 0.0
    %3635 = vmatpush1.msra.mxu0 0.0
    %3636 = vmatprep.subr.mxu0 0.0
    %3637 = vmatpush1.msra.mxu0 0.0
    %3638 = vmatprep.subr.mxu0 0.0
    %3639 = vmatpush1.msra.mxu0 0.0
    %3640 = vmatprep.mubr.f32.mxu0 %v3503
    %3641 = vmatmul.mubr.f32.gmra.mrb[0].mxu0 %v3500
    %v3642 = vpop.f32.mrb[0].mxu0
    %v3643 = vadd.f32 %v3207, %v3642
    %v3644 = vpop.f32.mrb[0].mxu0
    %v3645 = vadd.f32 %v3211, %v3644
    %3646 = vdwg.mxu0
    %3647 = vmatprep.subr.mxu0 %v3057
    %3648 = vmatpush1.msra.mxu0 %v3056
    %3649 = vmatprep.subr.mxu0 %v3063
    %3650 = vmatpush1.msra.mxu0 %v3062
    %3651 = vmatprep.subr.mxu0 %v3069
    %3652 = vmatpush1.msra.mxu0 %v3068
    %3653 = vmatprep.subr.mxu0 %v3075
    %3654 = vmatpush1.msra.mxu0 %v3074
    %3655 = vmatprep.subr.mxu0 %v3081
    %3656 = vmatpush1.msra.mxu0 %v3080
    %3657 = vmatprep.subr.mxu0 %v3087
    %3658 = vmatpush1.msra.mxu0 %v3086
    %3659 = vmatprep.subr.mxu0 %v3093
    %3660 = vmatpush1.msra.mxu0 %v3092
    %3661 = vmatprep.subr.mxu0 %v3099
    %3662 = vmatpush1.msra.mxu0 %v3098
    %3663 = vmatprep.subr.mxu0 %v3105
    %3664 = vmatpush1.msra.mxu0 %v3104
    %3665 = vmatprep.subr.mxu0 %v3111
    %3666 = vmatpush1.msra.mxu0 %v3110
    %3667 = vmatprep.subr.mxu0 %v3117
    %3668 = vmatpush1.msra.mxu0 %v3116
    %3669 = vmatprep.subr.mxu0 %v3123
    %3670 = vmatpush1.msra.mxu0 %v3122
    %3671 = vmatprep.subr.mxu0 %v3129
    %3672 = vmatpush1.msra.mxu0 %v3128
    %3673 = vmatprep.subr.mxu0 %v3135
    %3674 = vmatpush1.msra.mxu0 %v3134
    %3675 = vmatprep.subr.mxu0 %v3141
    %3676 = vmatpush1.msra.mxu0 %v3140
    %3677 = vmatprep.subr.mxu0 %v3147
    %3678 = vmatpush1.msra.mxu0 %v3146
    %3679 = vmatprep.subr.mxu0 %v3153
    %3680 = vmatpush1.msra.mxu0 %v3152
    %3681 = vmatprep.subr.mxu0 %v3159
    %3682 = vmatpush1.msra.mxu0 %v3158
    %3683 = vmatprep.subr.mxu0 %v3165
    %3684 = vmatpush1.msra.mxu0 %v3164
    %3685 = vmatprep.subr.mxu0 %v3171
    %3686 = vmatpush1.msra.mxu0 %v3170
    %3687 = vmatprep.subr.mxu0 %v3177
    %3688 = vmatpush1.msra.mxu0 %v3176
    %3689 = vmatprep.subr.mxu0 %v3183
    %3690 = vmatpush1.msra.mxu0 %v3182
    %3691 = vmatprep.subr.mxu0 %v3189
    %3692 = vmatpush1.msra.mxu0 %v3188
    %3693 = vmatprep.subr.mxu0 %v3195
    %3694 = vmatpush1.msra.mxu0 %v3194
    %3695 = vmatprep.subr.mxu0 0.0
    %3696 = vmatpush1.msra.mxu0 0.0
    %3697 = vmatprep.subr.mxu0 0.0
    %3698 = vmatpush1.msra.mxu0 0.0
    %3699 = vmatprep.subr.mxu0 0.0
    %3700 = vmatpush1.msra.mxu0 0.0
    %3701 = vmatprep.subr.mxu0 0.0
    %3702 = vmatpush1.msra.mxu0 0.0
    %3703 = vmatprep.subr.mxu0 0.0
    %3704 = vmatpush1.msra.mxu0 0.0
    %3705 = vmatprep.subr.mxu0 0.0
    %3706 = vmatpush1.msra.mxu0 0.0
    %3707 = vmatprep.subr.mxu0 0.0
    %3708 = vmatpush1.msra.mxu0 0.0
    %3709 = vmatprep.subr.mxu0 0.0
    %3710 = vmatpush1.msra.mxu0 0.0
    %3711 = vmatprep.mubr.f32.mxu0 %v3503
    %3712 = vmatmul.mubr.f32.gmra.mrb[0].mxu0 %v3500
    %v3713 = vpop.f32.mrb[0].mxu0
    %v3714 = vadd.f32 %v3215, %v3713
    %v3715 = vpop.f32.mrb[0].mxu0
    %v3716 = vadd.f32 %v3219, %v3715
    %3717 = vdwg.mxu0
    %v3720 = vcombine.low %v3572, %v3574
    %v3722 = vunpack.c.l.s4 1983009808
    %v3723 = vunpack.c.0.s8 %v3722
    %v3724 = vlaneseq
    %v3725 = vshrl.u32 %v3724, 7
    %v3726 = vsub.s32 %v3723, %v3725
    %v3727 = vrot.slane %v3720, %v3726
    %v3729 = vadd.f32 %v3027, %v3727
    %v3730 = vxor.u32 %v3729, 2147483648
    %v3731 = vmul.f32 %v3730, 1.442695
    %v3732 = vpow.pop %v3731
    %v3733 = vadd.f32 %v3732, 1.0
    %v3734 = vrcp.pop %v3733
    %v3735 = vmul.f32 1.0, %v3734
    %v3736 = vrot.slane %v3027, 4
    %v3740 = vcombine.low %v3643, %v3645
    %v3742 = vunpack.c.l.s4 1983009808
    %v3743 = vunpack.c.0.s8 %v3742
    %v3744 = vlaneseq
    %v3745 = vshrl.u32 %v3744, 7
    %v3746 = vsub.s32 %v3743, %v3745
    %v3747 = vrot.slane %v3740, %v3746
    %v3749 = vadd.f32 %v3736, %v3747
    %v3750 = vxor.u32 %v3749, 2147483648
    %v3751 = vmul.f32 %v3750, 1.442695
    %v3752 = vpow.pop %v3751
    %v3753 = vadd.f32 %v3752, 1.0
    %v3754 = vrcp.pop %v3753
    %v3755 = vmul.f32 1.0, %v3754
    %v3758 = vcombine.low %v3714, %v3716
    %v3760 = vunpack.c.l.s4 1983009808
    %v3761 = vunpack.c.0.s8 %v3760
    %v3762 = vlaneseq
    %v3763 = vshrl.u32 %v3762, 7
    %v3764 = vsub.s32 %v3761, %v3763
    %v3765 = vrot.slane %v3758, %v3764
    %v3767 = vmul.f32 %v3735, %v3765
    %v3768 = vadd.f32 %v3045, %v3767
    %v3769 = vtanh.pop %v3768
    %v3770 = vsub.f32 1.0, %v3755
    %v3771 = vmul.f32 %v3770, %v3769
    %v3772 = vmul.f32 %v3755, %v3492
    %v3773 = vadd.f32 %v3771, %v3772
    %v3776 = vunpack.c.l.s4 1983009808
    %v3777 = vunpack.c.0.s8 %v3776
    %v3778 = vlaneseq
    %v3779 = vshrl.u32 %v3778, 7
    %v3780 = vsub.s32 %v3777, %v3779
    %v3781 = vrot.slane %v3773, %v3780
    %v3782 = vcombine.high %v3781, %v3781
    %v3784 = vsel %vm3220, %v3782, 0
    %3786 = vmatprep.subr.mxu0 %v3053
    %3787 = vmatpush1.msra.mxu0 %v3052
    %3788 = vmatprep.subr.mxu0 %v3059
    %3789 = vmatpush1.msra.mxu0 %v3058
    %3790 = vmatprep.subr.mxu0 %v3065
    %3791 = vmatpush1.msra.mxu0 %v3064
    %3792 = vmatprep.subr.mxu0 %v3071
    %3793 = vmatpush1.msra.mxu0 %v3070
    %3794 = vmatprep.subr.mxu0 %v3077
    %3795 = vmatpush1.msra.mxu0 %v3076
    %3796 = vmatprep.subr.mxu0 %v3083
    %3797 = vmatpush1.msra.mxu0 %v3082
    %3798 = vmatprep.subr.mxu0 %v3089
    %3799 = vmatpush1.msra.mxu0 %v3088
    %3800 = vmatprep.subr.mxu0 %v3095
    %3801 = vmatpush1.msra.mxu0 %v3094
    %3802 = vmatprep.subr.mxu0 %v3101
    %3803 = vmatpush1.msra.mxu0 %v3100
    %3804 = vmatprep.subr.mxu0 %v3107
    %3805 = vmatpush1.msra.mxu0 %v3106
    %3806 = vmatprep.subr.mxu0 %v3113
    %3807 = vmatpush1.msra.mxu0 %v3112
    %3808 = vmatprep.subr.mxu0 %v3119
    %3809 = vmatpush1.msra.mxu0 %v3118
    %3810 = vmatprep.subr.mxu0 %v3125
    %3811 = vmatpush1.msra.mxu0 %v3124
    %3812 = vmatprep.subr.mxu0 %v3131
    %3813 = vmatpush1.msra.mxu0 %v3130
    %3814 = vmatprep.subr.mxu0 %v3137
    %3815 = vmatpush1.msra.mxu0 %v3136
    %3816 = vmatprep.subr.mxu0 %v3143
    %3817 = vmatpush1.msra.mxu0 %v3142
    %3818 = vmatprep.subr.mxu0 %v3149
    %3819 = vmatpush1.msra.mxu0 %v3148
    %3820 = vmatprep.subr.mxu0 %v3155
    %3821 = vmatpush1.msra.mxu0 %v3154
    %3822 = vmatprep.subr.mxu0 %v3161
    %3823 = vmatpush1.msra.mxu0 %v3160
    %3824 = vmatprep.subr.mxu0 %v3167
    %3825 = vmatpush1.msra.mxu0 %v3166
    %3826 = vmatprep.subr.mxu0 %v3173
    %3827 = vmatpush1.msra.mxu0 %v3172
    %3828 = vmatprep.subr.mxu0 %v3179
    %3829 = vmatpush1.msra.mxu0 %v3178
    %3830 = vmatprep.subr.mxu0 %v3185
    %3831 = vmatpush1.msra.mxu0 %v3184
    %3832 = vmatprep.subr.mxu0 %v3191
    %3833 = vmatpush1.msra.mxu0 %v3190
    %3834 = vmatprep.subr.mxu0 0.0
    %3835 = vmatpush1.msra.mxu0 0.0
    %3836 = vmatprep.subr.mxu0 0.0
    %3837 = vmatpush1.msra.mxu0 0.0
    %3838 = vmatprep.subr.mxu0 0.0
    %3839 = vmatpush1.msra.mxu0 0.0
    %3840 = vmatprep.subr.mxu0 0.0
    %3841 = vmatpush1.msra.mxu0 0.0
    %3842 = vmatprep.subr.mxu0 0.0
    %3843 = vmatpush1.msra.mxu0 0.0
    %3844 = vmatprep.subr.mxu0 0.0
    %3845 = vmatpush1.msra.mxu0 0.0
    %3846 = vmatprep.subr.mxu0 0.0
    %3847 = vmatpush1.msra.mxu0 0.0
    %3848 = vmatprep.subr.mxu0 0.0
    %3849 = vmatpush1.msra.mxu0 0.0
    %3850 = vmatprep.mubr.f32.mxu0 %v3784
    %3851 = vmatmul.mubr.f32.gmra.mrb[0].mxu0 %v3781
    %v3852 = vpop.f32.mrb[0].mxu0
    %v3853 = vadd.f32 %v3199, %v3852
    %v3854 = vpop.f32.mrb[0].mxu0
    %v3855 = vadd.f32 %v3203, %v3854
    %3856 = vdwg.mxu0
    %3857 = vmatprep.subr.mxu0 %v3055
    %3858 = vmatpush1.msra.mxu0 %v3054
    %3859 = vmatprep.subr.mxu0 %v3061
    %3860 = vmatpush1.msra.mxu0 %v3060
    %3861 = vmatprep.subr.mxu0 %v3067
    %3862 = vmatpush1.msra.mxu0 %v3066
    %3863 = vmatprep.subr.mxu0 %v3073
    %3864 = vmatpush1.msra.mxu0 %v3072
    %3865 = vmatprep.subr.mxu0 %v3079
    %3866 = vmatpush1.msra.mxu0 %v3078
    %3867 = vmatprep.subr.mxu0 %v3085
    %3868 = vmatpush1.msra.mxu0 %v3084
    %3869 = vmatprep.subr.mxu0 %v3091
    %3870 = vmatpush1.msra.mxu0 %v3090
    %3871 = vmatprep.subr.mxu0 %v3097
    %3872 = vmatpush1.msra.mxu0 %v3096
    %3873 = vmatprep.subr.mxu0 %v3103
    %3874 = vmatpush1.msra.mxu0 %v3102
    %3875 = vmatprep.subr.mxu0 %v3109
    %3876 = vmatpush1.msra.mxu0 %v3108
    %3877 = vmatprep.subr.mxu0 %v3115
    %3878 = vmatpush1.msra.mxu0 %v3114
    %3879 = vmatprep.subr.mxu0 %v3121
    %3880 = vmatpush1.msra.mxu0 %v3120
    %3881 = vmatprep.subr.mxu0 %v3127
    %3882 = vmatpush1.msra.mxu0 %v3126
    %3883 = vmatprep.subr.mxu0 %v3133
    %3884 = vmatpush1.msra.mxu0 %v3132
    %3885 = vmatprep.subr.mxu0 %v3139
    %3886 = vmatpush1.msra.mxu0 %v3138
    %3887 = vmatprep.subr.mxu0 %v3145
    %3888 = vmatpush1.msra.mxu0 %v3144
    %3889 = vmatprep.subr.mxu0 %v3151
    %3890 = vmatpush1.msra.mxu0 %v3150
    %3891 = vmatprep.subr.mxu0 %v3157
    %3892 = vmatpush1.msra.mxu0 %v3156
    %3893 = vmatprep.subr.mxu0 %v3163
    %3894 = vmatpush1.msra.mxu0 %v3162
    %3895 = vmatprep.subr.mxu0 %v3169
    %3896 = vmatpush1.msra.mxu0 %v3168
    %3897 = vmatprep.subr.mxu0 %v3175
    %3898 = vmatpush1.msra.mxu0 %v3174
    %3899 = vmatprep.subr.mxu0 %v3181
    %3900 = vmatpush1.msra.mxu0 %v3180
    %3901 = vmatprep.subr.mxu0 %v3187
    %3902 = vmatpush1.msra.mxu0 %v3186
    %3903 = vmatprep.subr.mxu0 %v3193
    %3904 = vmatpush1.msra.mxu0 %v3192
    %3905 = vmatprep.subr.mxu0 0.0
    %3906 = vmatpush1.msra.mxu0 0.0
    %3907 = vmatprep.subr.mxu0 0.0
    %3908 = vmatpush1.msra.mxu0 0.0
    %3909 = vmatprep.subr.mxu0 0.0
    %3910 = vmatpush1.msra.mxu0 0.0
    %3911 = vmatprep.subr.mxu0 0.0
    %3912 = vmatpush1.msra.mxu0 0.0
    %3913 = vmatprep.subr.mxu0 0.0
    %3914 = vmatpush1.msra.mxu0 0.0
    %3915 = vmatprep.subr.mxu0 0.0
    %3916 = vmatpush1.msra.mxu0 0.0
    %3917 = vmatprep.subr.mxu0 0.0
    %3918 = vmatpush1.msra.mxu0 0.0
    %3919 = vmatprep.subr.mxu0 0.0
    %3920 = vmatpush1.msra.mxu0 0.0
    %3921 = vmatprep.mubr.f32.mxu0 %v3784
    %3922 = vmatmul.mubr.f32.gmra.mrb[0].mxu0 %v3781
    %v3923 = vpop.f32.mrb[0].mxu0
    %v3924 = vadd.f32 %v3207, %v3923
    %v3925 = vpop.f32.mrb[0].mxu0
    %v3926 = vadd.f32 %v3211, %v3925
    %3927 = vdwg.mxu0
    %3928 = vmatprep.subr.mxu0 %v3057
    %3929 = vmatpush1.msra.mxu0 %v3056
    %3930 = vmatprep.subr.mxu0 %v3063
    %3931 = vmatpush1.msra.mxu0 %v3062
    %3932 = vmatprep.subr.mxu0 %v3069
    %3933 = vmatpush1.msra.mxu0 %v3068
    %3934 = vmatprep.subr.mxu0 %v3075
    %3935 = vmatpush1.msra.mxu0 %v3074
    %3936 = vmatprep.subr.mxu0 %v3081
    %3937 = vmatpush1.msra.mxu0 %v3080
    %3938 = vmatprep.subr.mxu0 %v3087
    %3939 = vmatpush1.msra.mxu0 %v3086
    %3940 = vmatprep.subr.mxu0 %v3093
    %3941 = vmatpush1.msra.mxu0 %v3092
    %3942 = vmatprep.subr.mxu0 %v3099
    %3943 = vmatpush1.msra.mxu0 %v3098
    %3944 = vmatprep.subr.mxu0 %v3105
    %3945 = vmatpush1.msra.mxu0 %v3104
    %3946 = vmatprep.subr.mxu0 %v3111
    %3947 = vmatpush1.msra.mxu0 %v3110
    %3948 = vmatprep.subr.mxu0 %v3117
    %3949 = vmatpush1.msra.mxu0 %v3116
    %3950 = vmatprep.subr.mxu0 %v3123
    %3951 = vmatpush1.msra.mxu0 %v3122
    %3952 = vmatprep.subr.mxu0 %v3129
    %3953 = vmatpush1.msra.mxu0 %v3128
    %3954 = vmatprep.subr.mxu0 %v3135
    %3955 = vmatpush1.msra.mxu0 %v3134
    %3956 = vmatprep.subr.mxu0 %v3141
    %3957 = vmatpush1.msra.mxu0 %v3140
    %3958 = vmatprep.subr.mxu0 %v3147
    %3959 = vmatpush1.msra.mxu0 %v3146
    %3960 = vmatprep.subr.mxu0 %v3153
    %3961 = vmatpush1.msra.mxu0 %v3152
    %3962 = vmatprep.subr.mxu0 %v3159
    %3963 = vmatpush1.msra.mxu0 %v3158
    %3964 = vmatprep.subr.mxu0 %v3165
    %3965 = vmatpush1.msra.mxu0 %v3164
    %3966 = vmatprep.subr.mxu0 %v3171
    %3967 = vmatpush1.msra.mxu0 %v3170
    %3968 = vmatprep.subr.mxu0 %v3177
    %3969 = vmatpush1.msra.mxu0 %v3176
    %3970 = vmatprep.subr.mxu0 %v3183
    %3971 = vmatpush1.msra.mxu0 %v3182
    %3972 = vmatprep.subr.mxu0 %v3189
    %3973 = vmatpush1.msra.mxu0 %v3188
    %3974 = vmatprep.subr.mxu0 %v3195
    %3975 = vmatpush1.msra.mxu0 %v3194
    %3976 = vmatprep.subr.mxu0 0.0
    %3977 = vmatpush1.msra.mxu0 0.0
    %3978 = vmatprep.subr.mxu0 0.0
    %3979 = vmatpush1.msra.mxu0 0.0
    %3980 = vmatprep.subr.mxu0 0.0
    %3981 = vmatpush1.msra.mxu0 0.0
    %3982 = vmatprep.subr.mxu0 0.0
    %3983 = vmatpush1.msra.mxu0 0.0
    %3984 = vmatprep.subr.mxu0 0.0
    %3985 = vmatpush1.msra.mxu0 0.0
    %3986 = vmatprep.subr.mxu0 0.0
    %3987 = vmatpush1.msra.mxu0 0.0
    %3988 = vmatprep.subr.mxu0 0.0
    %3989 = vmatpush1.msra.mxu0 0.0
    %3990 = vmatprep.subr.mxu0 0.0
    %3991 = vmatpush1.msra.mxu0 0.0
    %3992 = vmatprep.mubr.f32.mxu0 %v3784
    %3993 = vmatmul.mubr.f32.gmra.mrb[0].mxu0 %v3781
    %v3994 = vpop.f32.mrb[0].mxu0
    %v3995 = vadd.f32 %v3215, %v3994
    %v3996 = vpop.f32.mrb[0].mxu0
    %v3997 = vadd.f32 %v3219, %v3996
    %3998 = vdwg.mxu0
    %v4001 = vcombine.low %v3853, %v3855
    %v4003 = vunpack.c.l.s4 1983009808
    %v4004 = vunpack.c.0.s8 %v4003
    %v4005 = vlaneseq
    %v4006 = vshrl.u32 %v4005, 7
    %v4007 = vsub.s32 %v4004, %v4006
    %v4008 = vrot.slane %v4001, %v4007
    %v4010 = vadd.f32 %v3028, %v4008
    %v4011 = vxor.u32 %v4010, 2147483648
    %v4012 = vmul.f32 %v4011, 1.442695
    %v4013 = vpow.pop %v4012
    %v4014 = vadd.f32 %v4013, 1.0
    %v4015 = vrcp.pop %v4014
    %v4016 = vmul.f32 1.0, %v4015
    %v4017 = vrot.slane %v3028, 4
    %v4021 = vcombine.low %v3924, %v3926
    %v4023 = vunpack.c.l.s4 1983009808
    %v4024 = vunpack.c.0.s8 %v4023
    %v4025 = vlaneseq
    %v4026 = vshrl.u32 %v4025, 7
    %v4027 = vsub.s32 %v4024, %v4026
    %v4028 = vrot.slane %v4021, %v4027
    %v4030 = vadd.f32 %v4017, %v4028
    %v4031 = vxor.u32 %v4030, 2147483648
    %v4032 = vmul.f32 %v4031, 1.442695
    %v4033 = vpow.pop %v4032
    %v4034 = vadd.f32 %v4033, 1.0
    %v4035 = vrcp.pop %v4034
    %v4036 = vmul.f32 1.0, %v4035
    %v4039 = vcombine.low %v3995, %v3997
    %v4041 = vunpack.c.l.s4 1983009808
    %v4042 = vunpack.c.0.s8 %v4041
    %v4043 = vlaneseq
    %v4044 = vshrl.u32 %v4043, 7
    %v4045 = vsub.s32 %v4042, %v4044
    %v4046 = vrot.slane %v4039, %v4045
    %v4048 = vmul.f32 %v4016, %v4046
    %v4049 = vadd.f32 %v3044, %v4048
    %v4050 = vtanh.pop %v4049
    %v4051 = vsub.f32 1.0, %v4036
    %v4052 = vmul.f32 %v4051, %v4050
    %v4053 = vmul.f32 %v4036, %v3773
    %v4054 = vadd.f32 %v4052, %v4053
    %v4055 = vld [vmem:[%s5] sm:$0xff]
    %v4056 = vld [vmem:[%s5 + $0x8] sm:$0xff]
    %v4057 = vld [vmem:[%s5 + $0x10] sm:$0xff]
    %v4058 = vld [vmem:[%s5 + $0x18] sm:$0xff]
    %v4059 = vld [vmem:[%s5 + $0x20] sm:$0xff]
    %v4060 = vld [vmem:[%s5 + $0x28] sm:$0xff]
    %v4061 = vld [vmem:[%s5 + $0x30] sm:$0xff]
    %v4062 = vld [vmem:[%s5 + $0x38] sm:$0xff]
    %v4063 = vld [vmem:[%s5 + $0x40] sm:$0xff]
    %v4064 = vld [vmem:[%s5 + $0x48] sm:$0xff]
    %v4065 = vld [vmem:[%s5 + $0x50] sm:$0xff]
    %v4066 = vld [vmem:[%s5 + $0x58] sm:$0xff]
    %v4067 = vld [vmem:[%s5 + $0x60] sm:$0xff]
    %v4068 = vld [vmem:[%s5 + $0x68] sm:$0xff]
    %v4069 = vld [vmem:[%s5 + $0x70] sm:$0xff]
    %v4070 = vld [vmem:[%s5 + $0x78] sm:$0xff]
    %v4071 = vld [vmem:[%s5 + $0x80] sm:$0xff]
    %v4072 = vld [vmem:[%s5 + $0x88] sm:$0xff]
    %v4073 = vld [vmem:[%s5 + $0x90] sm:$0xff]
    %v4074 = vld [vmem:[%s5 + $0x98] sm:$0xff]
    %v4075 = vld [vmem:[%s5 + $0xa0] sm:$0xff]
    %v4076 = vld [vmem:[%s5 + $0xa8] sm:$0xff]
    %v4077 = vld [vmem:[%s5 + $0xb0] sm:$0xff]
    %v4078 = vld [vmem:[%s5 + $0xb8] sm:$0xff]
    %v4079 = vlaneseq
    %v4080 = vshrl.u32 %v4079, 7
    %v4081 = vsub.s32 5, %v4080
    %v4082 = vrot.slane %v101, %v4081
    %v4085 = vunpack.c.l.s4 1983009808
    %v4086 = vunpack.c.0.s8 %v4085
    %v4087 = vlaneseq
    %v4088 = vshrl.u32 %v4087, 7
    %v4089 = vsub.s32 %v4086, %v4088
    %v4090 = vrot.slane %v4054, %v4089
    %v4091 = vcombine.high %v4090, %v4090
    %v4093 = vsel %vm3220, %v4091, 0
    %4095 = vmatprep.subr.mxu0 0.0
    %4096 = vmatpush1.msra.mxu0 %v4055
    %4097 = vmatprep.subr.mxu0 0.0
    %4098 = vmatpush1.msra.mxu0 %v4056
    %4099 = vmatprep.subr.mxu0 0.0
    %4100 = vmatpush1.msra.mxu0 %v4057
    %4101 = vmatprep.subr.mxu0 0.0
    %4102 = vmatpush1.msra.mxu0 %v4058
    %4103 = vmatprep.subr.mxu0 0.0
    %4104 = vmatpush1.msra.mxu0 %v4059
    %4105 = vmatprep.subr.mxu0 0.0
    %4106 = vmatpush1.msra.mxu0 %v4060
    %4107 = vmatprep.subr.mxu0 0.0
    %4108 = vmatpush1.msra.mxu0 %v4061
    %4109 = vmatprep.subr.mxu0 0.0
    %4110 = vmatpush1.msra.mxu0 %v4062
    %4111 = vmatprep.subr.mxu0 0.0
    %4112 = vmatpush1.msra.mxu0 %v4063
    %4113 = vmatprep.subr.mxu0 0.0
    %4114 = vmatpush1.msra.mxu0 %v4064
    %4115 = vmatprep.subr.mxu0 0.0
    %4116 = vmatpush1.msra.mxu0 %v4065
    %4117 = vmatprep.subr.mxu0 0.0
    %4118 = vmatpush1.msra.mxu0 %v4066
    %4119 = vmatprep.subr.mxu0 0.0
    %4120 = vmatpush1.msra.mxu0 %v4067
    %4121 = vmatprep.subr.mxu0 0.0
    %4122 = vmatpush1.msra.mxu0 %v4068
    %4123 = vmatprep.subr.mxu0 0.0
    %4124 = vmatpush1.msra.mxu0 %v4069
    %4125 = vmatprep.subr.mxu0 0.0
    %4126 = vmatpush1.msra.mxu0 %v4070
    %4127 = vmatprep.subr.mxu0 0.0
    %4128 = vmatpush1.msra.mxu0 %v4071
    %4129 = vmatprep.subr.mxu0 0.0
    %4130 = vmatpush1.msra.mxu0 %v4072
    %4131 = vmatprep.subr.mxu0 0.0
    %4132 = vmatpush1.msra.mxu0 %v4073
    %4133 = vmatprep.subr.mxu0 0.0
    %4134 = vmatpush1.msra.mxu0 %v4074
    %4135 = vmatprep.subr.mxu0 0.0
    %4136 = vmatpush1.msra.mxu0 %v4075
    %4137 = vmatprep.subr.mxu0 0.0
    %4138 = vmatpush1.msra.mxu0 %v4076
    %4139 = vmatprep.subr.mxu0 0.0
    %4140 = vmatpush1.msra.mxu0 %v4077
    %4141 = vmatprep.subr.mxu0 0.0
    %4142 = vmatpush1.msra.mxu0 %v4078
    %4143 = vmatprep.subr.mxu0 0.0
    %4144 = vmatpush1.msra.mxu0 0.0
    %4145 = vmatprep.subr.mxu0 0.0
    %4146 = vmatpush1.msra.mxu0 0.0
    %4147 = vmatprep.subr.mxu0 0.0
    %4148 = vmatpush1.msra.mxu0 0.0
    %4149 = vmatprep.subr.mxu0 0.0
    %4150 = vmatpush1.msra.mxu0 0.0
    %4151 = vmatprep.subr.mxu0 0.0
    %4152 = vmatpush1.msra.mxu0 0.0
    %4153 = vmatprep.subr.mxu0 0.0
    %4154 = vmatpush1.msra.mxu0 0.0
    %4155 = vmatprep.subr.mxu0 0.0
    %4156 = vmatpush1.msra.mxu0 0.0
    %4157 = vmatprep.subr.mxu0 0.0
    %4158 = vmatpush1.msra.mxu0 0.0
    %4159 = vmatprep.mubr.f32.mxu0 %v4093
    %4160 = vmatmul.mubr.f32.gmra.mrb[0].mxu0 %v4090
    %v4161 = vpop.f32.mrb[0].mxu0
    %v4162 = vadd.f32 %v4082, %v4161
    %v4163 = vpop.f32.mrb[0].mxu0
    %4164 = vdwg.mxu0
    %v4165 = vmax.f32 %v4162, 0.0
    %v4166 = vld [vmem:[%s6] sm:$0xff]
    %v4167 = vld [vmem:[%s6 + $0x8] sm:$0xff]
    %v4168 = vld [vmem:[%s6 + $0x10] sm:$0xff]
    %v4169 = vld [vmem:[%s6 + $0x18] sm:$0xff]
    %v4170 = vld [vmem:[%s6 + $0x20] sm:$0xff]
    %v4171 = vld [vmem:[%s6 + $0x28] sm:$0xff]
    %v4172 = vld [vmem:[%s6 + $0x30] sm:$0xff]
    %v4173 = vld [vmem:[%s6 + $0x38] sm:$0xff]
    %v4174 = vlaneseq
    %v4175 = vshrl.u32 %v4174, 7
    %v4176 = vsub.s32 6, %v4175
    %v4177 = vrot.slane %v101, %v4176
    %v4179 = vsel %vm3220, %v4165, 0
    %4181 = vmatprep.subr.mxu0 0.0
    %4182 = vmatpush1.msra.mxu0 %v4166
    %4183 = vmatprep.subr.mxu0 0.0
    %4184 = vmatpush1.msra.mxu0 %v4167
    %4185 = vmatprep.subr.mxu0 0.0
    %4186 = vmatpush1.msra.mxu0 %v4168
    %4187 = vmatprep.subr.mxu0 0.0
    %4188 = vmatpush1.msra.mxu0 %v4169
    %4189 = vmatprep.subr.mxu0 0.0
    %4190 = vmatpush1.msra.mxu0 %v4170
    %4191 = vmatprep.subr.mxu0 0.0
    %4192 = vmatpush1.msra.mxu0 %v4171
    %4193 = vmatprep.subr.mxu0 0.0
    %4194 = vmatpush1.msra.mxu0 %v4172
    %4195 = vmatprep.subr.mxu0 0.0
    %4196 = vmatpush1.msra.mxu0 %v4173
    %4197 = vmatprep.subr.mxu0 0.0
    %4198 = vmatpush1.msra.mxu0 0.0
    %4199 = vmatprep.subr.mxu0 0.0
    %4200 = vmatpush1.msra.mxu0 0.0
    %4201 = vmatprep.subr.mxu0 0.0
    %4202 = vmatpush1.msra.mxu0 0.0
    %4203 = vmatprep.subr.mxu0 0.0
    %4204 = vmatpush1.msra.mxu0 0.0
    %4205 = vmatprep.subr.mxu0 0.0
    %4206 = vmatpush1.msra.mxu0 0.0
    %4207 = vmatprep.subr.mxu0 0.0
    %4208 = vmatpush1.msra.mxu0 0.0
    %4209 = vmatprep.subr.mxu0 0.0
    %4210 = vmatpush1.msra.mxu0 0.0
    %4211 = vmatprep.subr.mxu0 0.0
    %4212 = vmatpush1.msra.mxu0 0.0
    %4213 = vmatprep.subr.mxu0 0.0
    %4214 = vmatpush1.msra.mxu0 0.0
    %4215 = vmatprep.subr.mxu0 0.0
    %4216 = vmatpush1.msra.mxu0 0.0
    %4217 = vmatprep.subr.mxu0 0.0
    %4218 = vmatpush1.msra.mxu0 0.0
    %4219 = vmatprep.subr.mxu0 0.0
    %4220 = vmatpush1.msra.mxu0 0.0
    %4221 = vmatprep.subr.mxu0 0.0
    %4222 = vmatpush1.msra.mxu0 0.0
    %4223 = vmatprep.subr.mxu0 0.0
    %4224 = vmatpush1.msra.mxu0 0.0
    %4225 = vmatprep.subr.mxu0 0.0
    %4226 = vmatpush1.msra.mxu0 0.0
    %4227 = vmatprep.subr.mxu0 0.0
    %4228 = vmatpush1.msra.mxu0 0.0
    %4229 = vmatprep.subr.mxu0 0.0
    %4230 = vmatpush1.msra.mxu0 0.0
    %4231 = vmatprep.subr.mxu0 0.0
    %4232 = vmatpush1.msra.mxu0 0.0
    %4233 = vmatprep.subr.mxu0 0.0
    %4234 = vmatpush1.msra.mxu0 0.0
    %4235 = vmatprep.subr.mxu0 0.0
    %4236 = vmatpush1.msra.mxu0 0.0
    %4237 = vmatprep.subr.mxu0 0.0
    %4238 = vmatpush1.msra.mxu0 0.0
    %4239 = vmatprep.subr.mxu0 0.0
    %4240 = vmatpush1.msra.mxu0 0.0
    %4241 = vmatprep.subr.mxu0 0.0
    %4242 = vmatpush1.msra.mxu0 0.0
    %4243 = vmatprep.subr.mxu0 0.0
    %4244 = vmatpush1.msra.mxu0 0.0
    %4245 = vmatprep.mubr.f32.mxu0 0.0
    %4246 = vmatmul.mubr.f32.gmra.mrb[0].mxu0 %v4179
    %v4247 = vpop.f32.mrb[0].mxu0
    %v4248 = vadd.f32 %v4177, %v4247
    %v4249 = vpop.f32.mrb[0].mxu0
    %4250 = vdwg.mxu0
    %v4251 = vmax.f32 %v4248, 0.0
    %v4252 = vld [vmem:[%s7] sm:$0xff]
    %v4253 = vld [vmem:[%s7 + $0x8] sm:$0xff]
    %v4254 = vld [vmem:[%s7 + $0x10] sm:$0xff]
    %v4255 = vld [vmem:[%s7 + $0x18] sm:$0xff]
    %v4256 = vld [vmem:[%s7 + $0x20] sm:$0xff]
    %v4257 = vld [vmem:[%s7 + $0x28] sm:$0xff]
    %v4258 = vld [vmem:[%s7 + $0x30] sm:$0xff]
    %v4259 = vld [vmem:[%s7 + $0x38] sm:$0xff]
    %v4260 = vlaneseq
    %v4261 = vshrl.u32 %v4260, 7
    %v4262 = vsub.s32 7, %v4261
    %v4263 = vrot.slane %v101, %v4262
    %v4265 = vsel %vm3220, %v4251, 0
    %4267 = vmatprep.subr.mxu0 0.0
    %4268 = vmatpush1.msra.mxu0 %v4252
    %4269 = vmatprep.subr.mxu0 0.0
    %4270 = vmatpush1.msra.mxu0 %v4253
    %4271 = vmatprep.subr.mxu0 0.0
    %4272 = vmatpush1.msra.mxu0 %v4254
    %4273 = vmatprep.subr.mxu0 0.0
    %4274 = vmatpush1.msra.mxu0 %v4255
    %4275 = vmatprep.subr.mxu0 0.0
    %4276 = vmatpush1.msra.mxu0 %v4256
    %4277 = vmatprep.subr.mxu0 0.0
    %4278 = vmatpush1.msra.mxu0 %v4257
    %4279 = vmatprep.subr.mxu0 0.0
    %4280 = vmatpush1.msra.mxu0 %v4258
    %4281 = vmatprep.subr.mxu0 0.0
    %4282 = vmatpush1.msra.mxu0 %v4259
    %4283 = vmatprep.subr.mxu0 0.0
    %4284 = vmatpush1.msra.mxu0 0.0
    %4285 = vmatprep.subr.mxu0 0.0
    %4286 = vmatpush1.msra.mxu0 0.0
    %4287 = vmatprep.subr.mxu0 0.0
    %4288 = vmatpush1.msra.mxu0 0.0
    %4289 = vmatprep.subr.mxu0 0.0
    %4290 = vmatpush1.msra.mxu0 0.0
    %4291 = vmatprep.subr.mxu0 0.0
    %4292 = vmatpush1.msra.mxu0 0.0
    %4293 = vmatprep.subr.mxu0 0.0
    %4294 = vmatpush1.msra.mxu0 0.0
    %4295 = vmatprep.subr.mxu0 0.0
    %4296 = vmatpush1.msra.mxu0 0.0
    %4297 = vmatprep.subr.mxu0 0.0
    %4298 = vmatpush1.msra.mxu0 0.0
    %4299 = vmatprep.subr.mxu0 0.0
    %4300 = vmatpush1.msra.mxu0 0.0
    %4301 = vmatprep.subr.mxu0 0.0
    %4302 = vmatpush1.msra.mxu0 0.0
    %4303 = vmatprep.subr.mxu0 0.0
    %4304 = vmatpush1.msra.mxu0 0.0
    %4305 = vmatprep.subr.mxu0 0.0
    %4306 = vmatpush1.msra.mxu0 0.0
    %4307 = vmatprep.subr.mxu0 0.0
    %4308 = vmatpush1.msra.mxu0 0.0
    %4309 = vmatprep.subr.mxu0 0.0
    %4310 = vmatpush1.msra.mxu0 0.0
    %4311 = vmatprep.subr.mxu0 0.0
    %4312 = vmatpush1.msra.mxu0 0.0
    %4313 = vmatprep.subr.mxu0 0.0
    %4314 = vmatpush1.msra.mxu0 0.0
    %4315 = vmatprep.subr.mxu0 0.0
    %4316 = vmatpush1.msra.mxu0 0.0
    %4317 = vmatprep.subr.mxu0 0.0
    %4318 = vmatpush1.msra.mxu0 0.0
    %4319 = vmatprep.subr.mxu0 0.0
    %4320 = vmatpush1.msra.mxu0 0.0
    %4321 = vmatprep.subr.mxu0 0.0
    %4322 = vmatpush1.msra.mxu0 0.0
    %4323 = vmatprep.subr.mxu0 0.0
    %4324 = vmatpush1.msra.mxu0 0.0
    %4325 = vmatprep.subr.mxu0 0.0
    %4326 = vmatpush1.msra.mxu0 0.0
    %4327 = vmatprep.subr.mxu0 0.0
    %4328 = vmatpush1.msra.mxu0 0.0
    %4329 = vmatprep.subr.mxu0 0.0
    %4330 = vmatpush1.msra.mxu0 0.0
    %4331 = vmatprep.mubr.f32.mxu0 0.0
    %4332 = vmatmul.mubr.f32.gmra.mrb[0].mxu0 %v4265
    %v4333 = vpop.f32.mrb[0].mxu0
    %v4334 = vadd.f32 %v4263, %v4333
    %v4335 = vpop.f32.mrb[0].mxu0
    %4336 = vdwg.mxu0
    %4337 = vst [vmem:[#allocation7] sm:$0x3] %v4334
    // Predicated region
    $region46: #{ehtask_forward.1} parent=1 // pred_check
      _
    $region47: #{ehtask_forward.1} parent=1 // pred_check_branch
      %4339 = sbr.rel (0) target = $region49
    $region48: #{ehtask_forward.1} parent=1 // pred_region
      %s4341 = ssub.s32 32, 32
      %4342 = vsyncadd [#allocation4], %s4341
      %s4344 = sshll.u32 [#allocation7], 4
      %s4345 = int_to_ptr.vmem [resolvable:$true] %s4344
      %4347 = dma.vmem_to_hbm [thread:$0]  %s4345, 32, %s9, [#allocation4]
    $region49: #{ehtask_forward.1} parent=1 // pred_fallthru
      _
    // Predicated region
    $region50: #{ehtask_forward.1} parent=1 // pred_check
      _
    $region51: #{ehtask_forward.1} parent=1 // pred_check_branch
      %4349 = sbr.rel (0) target = $region53
    $region52: #{ehtask_forward.1} parent=1 // pred_region
      %4350 = dma.done [#allocation4], 32
    $region53: #{ehtask_forward.1} parent=1 // pred_fallthru
      _
    %4351 = vsyncpa [#allocation3], 1
    %4352 = vsyncpa [#allocation6], 1
    %4353 = vsyncpa [#allocation4], 1

</llo_original>
